<compile_context>
chip_gen: v7x
topology: tpu7x:2x2x1
jax: 0.10.0
libtpu: 0.0.40
codegen_flags: <defaults>
</compile_context>

<pallas_src>
import math
from functools import partial

import jax
import jax.numpy as jnp
from jax import lax
from jax.experimental import pallas as pl
from jax.experimental.pallas import tpu as pltpu

LN_EPS = 1e-5                    # PyTorch nn.LayerNorm default
COMPUTE_DTYPE = jnp.bfloat16     # MXU input dtype (accumulation is always f32)


def _layernorm(x, gamma, beta):
    mean = jnp.mean(x, axis=-1, keepdims=True)
    var = jnp.mean(jnp.square(x - mean), axis=-1, keepdims=True)
    return (x - mean) * lax.rsqrt(var + LN_EPS) * gamma + beta


# ---------------------------------------------------------------------------
# Phase 1: K/V projection, written head-major (H, S, d_head) in bf16.
# ---------------------------------------------------------------------------
def kv_proj_kernel(x_ref, wk_ref, wv_ref, k_ref, v_ref, *, num_heads, d_head):
    x = x_ref[...].astype(COMPUTE_DTYPE)
    k = jnp.dot(x, wk_ref[...], preferred_element_type=jnp.float32)   # (T, D)
    v = jnp.dot(x, wv_ref[...], preferred_element_type=jnp.float32)   # (T, D)
    # Head split via static lane slices + leading-index stores (no risky
    # lane<->sublane reshape inside the kernel).
    for h in range(num_heads):
        sl = slice(h * d_head, (h + 1) * d_head)
        k_ref[h] = k[:, sl].astype(k_ref.dtype)
        v_ref[h] = v[:, sl].astype(v_ref.dtype)


# ---------------------------------------------------------------------------
# Phase 2: flash attention + output projection + residuals + LN1 + FFN + LN2.
# Grid = (query tiles [parallel], kv tiles [arbitrary, reduction axis last]).
# ---------------------------------------------------------------------------
def attn_ffn_kernel(x_ref, k_ref, v_ref,
                    wq_ref, wo_ref, bo_ref, g1_ref, b1_ref,
                    w1_ref, bf1_ref, w2_ref, bf2_ref, g2_ref, b2_ref,
                    o_ref,
                    q_sc, cat_sc, m_sc, l_sc, acc_sc,
                    *, num_heads, d_head):
    f32 = jnp.float32
    cdt = COMPUTE_DTYPE
    ki = pl.program_id(1)

    @pl.when(ki == 0)
    def _init():
        # Q projection once per query tile (wq already bf16 and pre-scaled by
        # 1/sqrt(d_model) in the wrapper); cache head-major Q in VMEM scratch.
        x = x_ref[...].astype(cdt)
        q = jnp.dot(x, wq_ref[...], preferred_element_type=f32)       # (Tq, D)
        for h in range(num_heads):
            q_sc[h] = q[:, h * d_head:(h + 1) * d_head].astype(q_sc.dtype)
        m_sc[...] = jnp.full(m_sc.shape, -jnp.inf, m_sc.dtype)
        l_sc[...] = jnp.zeros(l_sc.shape, l_sc.dtype)
        acc_sc[...] = jnp.zeros(acc_sc.shape, acc_sc.dtype)

    # ---- online-softmax update for this K/V tile -------------------------
    q = q_sc[...]                         # (H, Tq, dh) bf16, already scaled
    k = k_ref[...]                        # (H, Tk, dh) bf16
    v = v_ref[...]                        # (H, Tk, dh) bf16
    s = jnp.einsum('htd,hsd->hts', q, k, preferred_element_type=f32)  # (H,Tq,Tk)
    m_prev = m_sc[...]
    m_new = jnp.maximum(m_prev, jnp.max(s, axis=-1, keepdims=True))
    alpha = jnp.exp(m_prev - m_new)
    p = jnp.exp(s - m_new)
    # dropout(p) == identity in eval mode
    l_sc[...] = alpha * l_sc[...] + jnp.sum(p, axis=-1, keepdims=True)
    acc_sc[...] = alpha * acc_sc[...] + jnp.einsum(
        'hts,hsd->htd', p.astype(cdt), v, preferred_element_type=f32)
    m_sc[...] = m_new

    # ---- epilogue on the last K/V step ------------------------------------
    @pl.when(ki == pl.num_programs(1) - 1)
    def _epilogue():
        ctx = acc_sc[...] * pl.reciprocal(l_sc[...], approx=True)     # (H,Tq,dh)
        # Concat heads along lanes into a lane-dense (Tq, D) scratch, then a
        # single full-depth (D-deep) output projection (no 32-deep per-head
        # matmuls, no (H, Tq, D) intermediate).
        for h in range(num_heads):
            cat_sc[:, h * d_head:(h + 1) * d_head] = ctx[h].astype(cat_sc.dtype)
        mha = jnp.dot(cat_sc[...], wo_ref[...], preferred_element_type=f32)
        mha = mha + bo_ref[...].astype(f32)
        # dropout(mha) == identity in eval mode
        x = x_ref[...].astype(f32)
        h1 = _layernorm(mha + x, g1_ref[...].astype(f32), b1_ref[...].astype(f32))
        ff = jnp.dot(h1.astype(cdt), w1_ref[...], preferred_element_type=f32)
        ff = jnp.maximum(ff + bf1_ref[...].astype(f32), 0.0)
        ff = jnp.dot(ff.astype(cdt), w2_ref[...], preferred_element_type=f32)
        ff = ff + bf2_ref[...].astype(f32)
        # dropout(ff) == identity in eval mode; second residual uses ORIGINAL x.
        out = _layernorm(ff + x, g2_ref[...].astype(f32), b2_ref[...].astype(f32))
        o_ref[...] = out.astype(o_ref.dtype)


# ---------------------------------------------------------------------------
# Wrapper.
# ---------------------------------------------------------------------------
def transformer_block(x, params, *, num_heads, tile_q=256, tile_k=256,
                      out_dtype=None, single_buffer_consts=True):
    S, D = x.shape
    assert D % num_heads == 0
    d_head = D // num_heads
    tile_q = min(tile_q, S)
    tile_k = min(tile_k, S)
    assert S % tile_q == 0 and S % tile_k == 0
    n_q, n_kv = S // tile_q, S // tile_k
    d_ff = params["w1"].shape[1]
    out_dtype = x.dtype if out_dtype is None else out_dtype
    cdt = COMPUTE_DTYPE
    scale = 1.0 / math.sqrt(float(D))   # reference divides scores by sqrt(d_model)

    # Pre-cast all matmul weights to bf16 once in the wrapper (halves their
    # HBM->VMEM DMA and resident VMEM; in production do this at load time).
    # The score scale is folded into Wq in the same fused op.
    wq = (params["wq"] * scale).astype(cdt)
    wk = params["wk"].astype(cdt)
    wv = params["wv"].astype(cdt)
    wo = params["wo"].astype(cdt)
    w1 = params["w1"].astype(cdt)
    w2 = params["w2"].astype(cdt)

    def const_spec(shape):
        # Constant-index blocks (weights / biases): single-buffer them so they
        # don't pay 2x VMEM for pipelining they never use.
        if single_buffer_consts:
            return pl.BlockSpec(shape, lambda *_: (0,) * len(shape),
                                pipeline_mode=pl.Buffered(1))
        return pl.BlockSpec(shape, lambda *_: (0,) * len(shape))

    # ---- Phase 1: K/V projection, head-major output ----------------------
    kv_shape = jax.ShapeDtypeStruct((num_heads, S, d_head), cdt)
    kv_out_spec = pl.BlockSpec((num_heads, tile_q, d_head), lambda i: (0, i, 0))
    k3, v3 = pl.pallas_call(
        partial(kv_proj_kernel, num_heads=num_heads, d_head=d_head),
        out_shape=(kv_shape, kv_shape),
        grid_spec=pltpu.PrefetchScalarGridSpec(
            num_scalar_prefetch=0,
            grid=(S // tile_q,),
            in_specs=[pl.BlockSpec((tile_q, D), lambda i: (i, 0)),
                      const_spec((D, D)), const_spec((D, D))],
            out_specs=(kv_out_spec, kv_out_spec),
        ),
        compiler_params=pltpu.CompilerParams(
            dimension_semantics=("parallel",),
            vmem_limit_bytes=32 * 1024 * 1024),
    )(x, wk, wv)

    # ---- Phase 2: flash attention + Wo + LN1 + FFN + LN2 -----------------
    x_tile = pl.BlockSpec((tile_q, D), lambda qi, ki: (qi, 0))
    kv_tile = pl.BlockSpec((num_heads, tile_k, d_head), lambda qi, ki: (0, ki, 0))

    out = pl.pallas_call(
        partial(attn_ffn_kernel, num_heads=num_heads, d_head=d_head),
        out_shape=jax.ShapeDtypeStruct((S, D), out_dtype),
        grid_spec=pltpu.PrefetchScalarGridSpec(
            num_scalar_prefetch=0,
            grid=(n_q, n_kv),                      # reduction (kv) axis last
            in_specs=[
                x_tile,                            # x (residual + Q source)
                kv_tile, kv_tile,                  # K, V (head-major, bf16)
                const_spec((D, D)),                # wq (scale folded in)
                const_spec((D, D)),                # wo
                const_spec((1, D)),                # bo
                const_spec((1, D)), const_spec((1, D)),   # gamma1, beta1
                const_spec((D, d_ff)),             # w1
                const_spec((1, d_ff)),             # bf1
                const_spec((d_ff, D)),             # w2
                const_spec((1, D)),                # bf2
                const_spec((1, D)), const_spec((1, D)),   # gamma2, beta2
            ],
            out_specs=pl.BlockSpec((tile_q, D), lambda qi, ki: (qi, 0)),
            scratch_shapes=[
                pltpu.VMEM((num_heads, tile_q, d_head), cdt),          # Q cache
                pltpu.VMEM((tile_q, D), cdt),                          # head concat
                pltpu.VMEM((num_heads, tile_q, 1), jnp.float32),       # m
                pltpu.VMEM((num_heads, tile_q, 1), jnp.float32),       # l
                pltpu.VMEM((num_heads, tile_q, d_head), jnp.float32),  # acc
            ],
        ),
        compiler_params=pltpu.CompilerParams(
            dimension_semantics=("parallel", "arbitrary"),
            vmem_limit_bytes=32 * 1024 * 1024),
    )(x, k3, v3, wq, wo, params["bo"],
      params["gamma1"], params["beta1"],
      w1, params["bf1"], w2, params["bf2"],
      params["gamma2"], params["beta2"])
    return out


# ---------------------------------------------------------------------------
# Pure-JAX f32 reference (mirrors the PyTorch forward) for a sanity check.
# ---------------------------------------------------------------------------
def transformer_block_ref(x, params, *, num_heads):
    S, D = x.shape
    dh = D // num_heads
    scale = 1.0 / math.sqrt(float(D))

    def ln(t, g, b):
        mu = t.mean(-1, keepdims=True)
        var = jnp.square(t - mu).mean(-1, keepdims=True)
        return (t - mu) / jnp.sqrt(var + LN_EPS) * g + b

    q = x @ params["wq"]; k = x @ params["wk"]; v = x @ params["wv"]
    heads = []
    for h in range(num_heads):
        sl = slice(h * dh, (h + 1) * dh)
        s = (q[:, sl] @ k[:, sl].T) * scale
        heads.append(jax.nn.softmax(s, axis=-1) @ v[:, sl])
    mha = jnp.concatenate(heads, axis=-1) @ params["wo"] + params["bo"]
    h1 = ln(mha + x, params["gamma1"], params["beta1"])
    ff = jnp.maximum(h1 @ params["w1"] + params["bf1"], 0.0)
    ff = ff @ params["w2"] + params["bf2"]
    return ln(ff + x, params["gamma2"], params["beta2"])


def init_params(key, num_heads, d_model, d_ff):
    d_head = d_model // num_heads
    keys = jax.random.split(key, 10)

    def lin(k, fan_in, shape):
        bound = 1.0 / math.sqrt(fan_in)
        return jax.random.uniform(k, shape, jnp.float32, -bound, bound)

    wq = lin(keys[0], d_model, (d_model, num_heads * d_head))
    wk = lin(keys[1], d_model, (d_model, num_heads * d_head))
    wv = lin(keys[2], d_model, (d_model, num_heads * d_head))
    wo = lin(keys[3], d_model, (d_model, d_model))
    bo = lin(keys[4], d_model, (1, d_model))
    w1 = lin(keys[5], d_model, (d_model, d_ff))
    bf1 = lin(keys[6], d_model, (1, d_ff))
    w2 = lin(keys[7], d_ff, (d_ff, d_model))
    bf2 = lin(keys[8], d_ff, (1, d_model))
    return dict(
        wq=wq, wk=wk, wv=wv, wo=wo, bo=bo,
        gamma1=jnp.ones((1, d_model), jnp.float32),
        beta1=jnp.zeros((1, d_model), jnp.float32),
        w1=w1, bf1=bf1, w2=w2, bf2=bf2,
        gamma2=jnp.ones((1, d_model), jnp.float32),
        beta2=jnp.zeros((1, d_model), jnp.float32),
    )


if __name__ == "__main__":
    # Lane-dense demo shapes: d_model / d_ff multiples of 128.  tile_q=128 so
    # the "parallel" query axis has 2 tiles (feeds both v7x TensorCores) and
    # the flash kv loop takes 2 steps; production should tune tile_q/tile_k up
    # to 256-512 against the per-generation VMEM budget (64 MiB physical v7x).
    num_heads, d_model, d_ff, seq = 4, 128, 256, 256

    key = jax.random.PRNGKey(0)
    k_x, k_p = jax.random.split(key)
    x = jax.random.normal(k_x, (seq, d_model), jnp.float32)
    params = init_params(k_p, num_heads, d_model, d_ff)

    try:
        out = jax.block_until_ready(
            transformer_block(x, params, num_heads=num_heads,
                              tile_q=128, tile_k=128))
    except Exception:
        # Fallback for JAX versions that reject pipeline_mode=pl.Buffered(1):
        # rerun with default (double-buffered) constant blocks.
        out = jax.block_until_ready(
            transformer_block(x, params, num_heads=num_heads,
                              tile_q=128, tile_k=128,
                              single_buffer_consts=False))

    ref = transformer_block_ref(x, params, num_heads=num_heads)
    err = float(jnp.max(jnp.abs(out.astype(jnp.float32) - ref)))

    assert out.shape == (seq, d_model)
    assert bool(jnp.all(jnp.isfinite(out)))
    assert err < 0.1, f"mismatch vs f32 reference: max abs err = {err}"
    print("KERNEL_OK")
</pallas_src>

<mosaic_0001>
module attributes {stable_mosaic.version = 11 : i64} {
  func.func @kv_proj_kernel(%arg0: i32, %arg1: memref<128x128xf32, #tpu.memory_space<vmem>>, %arg2: memref<128x128xbf16, #tpu.memory_space<vmem>>, %arg3: memref<128x128xbf16, #tpu.memory_space<vmem>>, %arg4: memref<4x128x32xbf16, #tpu.memory_space<vmem>>, %arg5: memref<4x128x32xbf16, #tpu.memory_space<vmem>>) attributes {dimension_semantics = [#tpu.dimension_semantics<parallel>], iteration_bounds = array<i64: 2>, scalar_prefetch = 0 : i64, scratch_operands = 0 : i64, tpu.core_type = #tpu.core_type<tc>, window_params = [{transform_indices = @transform_0, window_bounds = array<i64: 128, 128>}, {pipeline_mode = #tpu.pipeline_mode<synchronous>, transform_indices = @transform_1, window_bounds = array<i64: 128, 128>}, {pipeline_mode = #tpu.pipeline_mode<synchronous>, transform_indices = @transform_2, window_bounds = array<i64: 128, 128>}, {transform_indices = @transform_3, window_bounds = array<i64: 4, 128, 32>}, {transform_indices = @transform_4, window_bounds = array<i64: 4, 128, 32>}]} {
    %c0 = arith.constant 0 : index
    %c0_0 = arith.constant 0 : index
    %0 = vector.load %arg1[%c0, %c0_0] : memref<128x128xf32, #tpu.memory_space<vmem>>, vector<128x128xf32>
    %1 = arith.truncf %0 : vector<128x128xf32> to vector<128x128xbf16>
    %c0_1 = arith.constant 0 : index
    %c0_2 = arith.constant 0 : index
    %2 = vector.load %arg2[%c0_1, %c0_2] : memref<128x128xbf16, #tpu.memory_space<vmem>>, vector<128x128xbf16>
    %cst = arith.constant dense<0.000000e+00> : vector<128x128xf32>
    %3 = tpu.matmul %1, %2, %cst {dimension_numbers = #tpu.dot_dimension_numbers<[1], [0], [0], [1], [0, 0, 1, 1], [], []>} : vector<128x128xbf16>, vector<128x128xbf16>, vector<128x128xf32> -> vector<128x128xf32>
    %c0_3 = arith.constant 0 : index
    %c0_4 = arith.constant 0 : index
    %4 = vector.load %arg3[%c0_3, %c0_4] : memref<128x128xbf16, #tpu.memory_space<vmem>>, vector<128x128xbf16>
    %cst_5 = arith.constant dense<0.000000e+00> : vector<128x128xf32>
    %5 = tpu.matmul %1, %4, %cst_5 {dimension_numbers = #tpu.dot_dimension_numbers<[1], [0], [0], [1], [0, 0, 1, 1], [], []>} : vector<128x128xbf16>, vector<128x128xbf16>, vector<128x128xf32> -> vector<128x128xf32>
    %6 = vector.extract_strided_slice %3 {offsets = [0, 0], sizes = [128, 32], strides = [1, 1]} : vector<128x128xf32> to vector<128x32xf32>
    %7 = arith.truncf %6 : vector<128x32xf32> to vector<128x32xbf16>
    %c0_6 = arith.constant 0 : index
    %c0_7 = arith.constant 0 : index
    %c0_8 = arith.constant 0 : index
    %8 = vector.load %arg4[%c0_6, %c0_7, %c0_8] : memref<4x128x32xbf16, #tpu.memory_space<vmem>>, vector<1x128x32xbf16>
    %9 = vector.shape_cast %8 : vector<1x128x32xbf16> to vector<128x32xbf16>
    %10 = vector.shape_cast %7 : vector<128x32xbf16> to vector<1x128x32xbf16>
    tpu.vector_store %arg4[%c0_6, %c0_7, %c0_8], %10 {strides = array<i32>} : memref<4x128x32xbf16, #tpu.memory_space<vmem>>, vector<1x128x32xbf16>,
    %11 = vector.extract_strided_slice %5 {offsets = [0, 0], sizes = [128, 32], strides = [1, 1]} : vector<128x128xf32> to vector<128x32xf32>
    %12 = arith.truncf %11 : vector<128x32xf32> to vector<128x32xbf16>
    %c0_9 = arith.constant 0 : index
    %c0_10 = arith.constant 0 : index
    %c0_11 = arith.constant 0 : index
    %13 = vector.load %arg5[%c0_9, %c0_10, %c0_11] : memref<4x128x32xbf16, #tpu.memory_space<vmem>>, vector<1x128x32xbf16>
    %14 = vector.shape_cast %13 : vector<1x128x32xbf16> to vector<128x32xbf16>
    %15 = vector.shape_cast %12 : vector<128x32xbf16> to vector<1x128x32xbf16>
    tpu.vector_store %arg5[%c0_9, %c0_10, %c0_11], %15 {strides = array<i32>} : memref<4x128x32xbf16, #tpu.memory_space<vmem>>, vector<1x128x32xbf16>,
    %16 = vector.extract_strided_slice %3 {offsets = [0, 32], sizes = [128, 32], strides = [1, 1]} : vector<128x128xf32> to vector<128x32xf32>
    %17 = arith.truncf %16 : vector<128x32xf32> to vector<128x32xbf16>
    %c1 = arith.constant 1 : index
    %c0_12 = arith.constant 0 : index
    %c0_13 = arith.constant 0 : index
    %18 = vector.load %arg4[%c1, %c0_12, %c0_13] : memref<4x128x32xbf16, #tpu.memory_space<vmem>>, vector<1x128x32xbf16>
    %19 = vector.shape_cast %18 : vector<1x128x32xbf16> to vector<128x32xbf16>
    %20 = vector.shape_cast %17 : vector<128x32xbf16> to vector<1x128x32xbf16>
    tpu.vector_store %arg4[%c1, %c0_12, %c0_13], %20 {strides = array<i32>} : memref<4x128x32xbf16, #tpu.memory_space<vmem>>, vector<1x128x32xbf16>,
    %21 = vector.extract_strided_slice %5 {offsets = [0, 32], sizes = [128, 32], strides = [1, 1]} : vector<128x128xf32> to vector<128x32xf32>
    %22 = arith.truncf %21 : vector<128x32xf32> to vector<128x32xbf16>
    %c1_14 = arith.constant 1 : index
    %c0_15 = arith.constant 0 : index
    %c0_16 = arith.constant 0 : index
    %23 = vector.load %arg5[%c1_14, %c0_15, %c0_16] : memref<4x128x32xbf16, #tpu.memory_space<vmem>>, vector<1x128x32xbf16>
    %24 = vector.shape_cast %23 : vector<1x128x32xbf16> to vector<128x32xbf16>
    %25 = vector.shape_cast %22 : vector<128x32xbf16> to vector<1x128x32xbf16>
    tpu.vector_store %arg5[%c1_14, %c0_15, %c0_16], %25 {strides = array<i32>} : memref<4x128x32xbf16, #tpu.memory_space<vmem>>, vector<1x128x32xbf16>,
    %26 = vector.extract_strided_slice %3 {offsets = [0, 64], sizes = [128, 32], strides = [1, 1]} : vector<128x128xf32> to vector<128x32xf32>
    %27 = arith.truncf %26 : vector<128x32xf32> to vector<128x32xbf16>
    %c2 = arith.constant 2 : index
    %c0_17 = arith.constant 0 : index
    %c0_18 = arith.constant 0 : index
    %28 = vector.load %arg4[%c2, %c0_17, %c0_18] : memref<4x128x32xbf16, #tpu.memory_space<vmem>>, vector<1x128x32xbf16>
    %29 = vector.shape_cast %28 : vector<1x128x32xbf16> to vector<128x32xbf16>
    %30 = vector.shape_cast %27 : vector<128x32xbf16> to vector<1x128x32xbf16>
    tpu.vector_store %arg4[%c2, %c0_17, %c0_18], %30 {strides = array<i32>} : memref<4x128x32xbf16, #tpu.memory_space<vmem>>, vector<1x128x32xbf16>,
    %31 = vector.extract_strided_slice %5 {offsets = [0, 64], sizes = [128, 32], strides = [1, 1]} : vector<128x128xf32> to vector<128x32xf32>
    %32 = arith.truncf %31 : vector<128x32xf32> to vector<128x32xbf16>
    %c2_19 = arith.constant 2 : index
    %c0_20 = arith.constant 0 : index
    %c0_21 = arith.constant 0 : index
    %33 = vector.load %arg5[%c2_19, %c0_20, %c0_21] : memref<4x128x32xbf16, #tpu.memory_space<vmem>>, vector<1x128x32xbf16>
    %34 = vector.shape_cast %33 : vector<1x128x32xbf16> to vector<128x32xbf16>
    %35 = vector.shape_cast %32 : vector<128x32xbf16> to vector<1x128x32xbf16>
    tpu.vector_store %arg5[%c2_19, %c0_20, %c0_21], %35 {strides = array<i32>} : memref<4x128x32xbf16, #tpu.memory_space<vmem>>, vector<1x128x32xbf16>,
    %36 = vector.extract_strided_slice %3 {offsets = [0, 96], sizes = [128, 32], strides = [1, 1]} : vector<128x128xf32> to vector<128x32xf32>
    %37 = arith.truncf %36 : vector<128x32xf32> to vector<128x32xbf16>
    %c3 = arith.constant 3 : index
    %c0_22 = arith.constant 0 : index
    %c0_23 = arith.constant 0 : index
    %38 = vector.load %arg4[%c3, %c0_22, %c0_23] : memref<4x128x32xbf16, #tpu.memory_space<vmem>>, vector<1x128x32xbf16>
    %39 = vector.shape_cast %38 : vector<1x128x32xbf16> to vector<128x32xbf16>
    %40 = vector.shape_cast %37 : vector<128x32xbf16> to vector<1x128x32xbf16>
    tpu.vector_store %arg4[%c3, %c0_22, %c0_23], %40 {strides = array<i32>} : memref<4x128x32xbf16, #tpu.memory_space<vmem>>, vector<1x128x32xbf16>,
    %41 = vector.extract_strided_slice %5 {offsets = [0, 96], sizes = [128, 32], strides = [1, 1]} : vector<128x128xf32> to vector<128x32xf32>
    %42 = arith.truncf %41 : vector<128x32xf32> to vector<128x32xbf16>
    %c3_24 = arith.constant 3 : index
    %c0_25 = arith.constant 0 : index
    %c0_26 = arith.constant 0 : index
    %43 = vector.load %arg5[%c3_24, %c0_25, %c0_26] : memref<4x128x32xbf16, #tpu.memory_space<vmem>>, vector<1x128x32xbf16>
    %44 = vector.shape_cast %43 : vector<1x128x32xbf16> to vector<128x32xbf16>
    %45 = vector.shape_cast %42 : vector<128x32xbf16> to vector<1x128x32xbf16>
    tpu.vector_store %arg5[%c3_24, %c0_25, %c0_26], %45 {strides = array<i32>} : memref<4x128x32xbf16, #tpu.memory_space<vmem>>, vector<1x128x32xbf16>,
    return
  }
  func.func @transform_0(%arg0: i32) -> (i32, i32) {
    %c0_i32 = arith.constant 0 : i32
    %c0_i32_0 = arith.constant 0 : i32
    return %arg0, %c0_i32 : i32, i32
  }
  func.func @transform_1(%arg0: i32) -> (i32, i32) {
    %c0_i32 = arith.constant 0 : i32
    %c0_i32_0 = arith.constant 0 : i32
    %c0_i32_1 = arith.constant 0 : i32
    return %c0_i32, %c0_i32_0 : i32, i32
  }
  func.func @transform_2(%arg0: i32) -> (i32, i32) {
    %c0_i32 = arith.constant 0 : i32
    %c0_i32_0 = arith.constant 0 : i32
    %c0_i32_1 = arith.constant 0 : i32
    return %c0_i32, %c0_i32_0 : i32, i32
  }
  func.func @transform_3(%arg0: i32) -> (i32, i32, i32) {
    %c0_i32 = arith.constant 0 : i32
    %c0_i32_0 = arith.constant 0 : i32
    %c0_i32_1 = arith.constant 0 : i32
    return %c0_i32, %arg0, %c0_i32_0 : i32, i32, i32
  }
  func.func @transform_4(%arg0: i32) -> (i32, i32, i32) {
    %c0_i32 = arith.constant 0 : i32
    %c0_i32_0 = arith.constant 0 : i32
    %c0_i32_1 = arith.constant 0 : i32
    return %c0_i32, %arg0, %c0_i32_0 : i32, i32, i32
  }
}

module attributes {stable_mosaic.version = 11 : i64} {
  func.func @kv_proj_kernel(%arg0: i32, %arg1: memref<128x128xf32, #tpu.memory_space<vmem>>, %arg2: memref<128x128xbf16, #tpu.memory_space<vmem>>, %arg3: memref<128x128xbf16, #tpu.memory_space<vmem>>, %arg4: memref<4x128x32xbf16, #tpu.memory_space<vmem>>, %arg5: memref<4x128x32xbf16, #tpu.memory_space<vmem>>) attributes {dimension_semantics = [#tpu.dimension_semantics<parallel>], iteration_bounds = array<i64: 2>, scalar_prefetch = 0 : i64, scratch_operands = 0 : i64, tpu.core_type = #tpu.core_type<tc>, window_params = [{transform_indices = @transform_0, window_bounds = array<i64: 128, 128>}, {pipeline_mode = #tpu.pipeline_mode<synchronous>, transform_indices = @transform_1, window_bounds = array<i64: 128, 128>}, {pipeline_mode = #tpu.pipeline_mode<synchronous>, transform_indices = @transform_2, window_bounds = array<i64: 128, 128>}, {transform_indices = @transform_3, window_bounds = array<i64: 4, 128, 32>}, {transform_indices = @transform_4, window_bounds = array<i64: 4, 128, 32>}]} {
    %c0 = arith.constant 0 : index
    %c0_0 = arith.constant 0 : index
    %0 = vector.load %arg1[%c0, %c0_0] : memref<128x128xf32, #tpu.memory_space<vmem>>, vector<128x128xf32>
    %1 = arith.truncf %0 : vector<128x128xf32> to vector<128x128xbf16>
    %c0_1 = arith.constant 0 : index
    %c0_2 = arith.constant 0 : index
    %2 = vector.load %arg2[%c0_1, %c0_2] : memref<128x128xbf16, #tpu.memory_space<vmem>>, vector<128x128xbf16>
    %cst = arith.constant dense<0.000000e+00> : vector<128x128xf32>
    %3 = tpu.matmul %1, %2, %cst {dimension_numbers = #tpu.dot_dimension_numbers<[1], [0], [0], [1], [0, 0, 1, 1], [], []>} : vector<128x128xbf16>, vector<128x128xbf16>, vector<128x128xf32> -> vector<128x128xf32>
    %c0_3 = arith.constant 0 : index
    %c0_4 = arith.constant 0 : index
    %4 = vector.load %arg3[%c0_3, %c0_4] : memref<128x128xbf16, #tpu.memory_space<vmem>>, vector<128x128xbf16>
    %cst_5 = arith.constant dense<0.000000e+00> : vector<128x128xf32>
    %5 = tpu.matmul %1, %4, %cst_5 {dimension_numbers = #tpu.dot_dimension_numbers<[1], [0], [0], [1], [0, 0, 1, 1], [], []>} : vector<128x128xbf16>, vector<128x128xbf16>, vector<128x128xf32> -> vector<128x128xf32>
    %6 = vector.extract_strided_slice %3 {offsets = [0, 0], sizes = [128, 32], strides = [1, 1]} : vector<128x128xf32> to vector<128x32xf32>
    %7 = arith.truncf %6 : vector<128x32xf32> to vector<128x32xbf16>
    %c0_6 = arith.constant 0 : index
    %c0_7 = arith.constant 0 : index
    %c0_8 = arith.constant 0 : index
    %8 = vector.load %arg4[%c0_6, %c0_7, %c0_8] : memref<4x128x32xbf16, #tpu.memory_space<vmem>>, vector<1x128x32xbf16>
    %9 = vector.shape_cast %8 : vector<1x128x32xbf16> to vector<128x32xbf16>
    %10 = vector.shape_cast %7 : vector<128x32xbf16> to vector<1x128x32xbf16>
    tpu.vector_store %arg4[%c0_6, %c0_7, %c0_8], %10 {strides = array<i32>} : memref<4x128x32xbf16, #tpu.memory_space<vmem>>, vector<1x128x32xbf16>,
    %11 = vector.extract_strided_slice %5 {offsets = [0, 0], sizes = [128, 32], strides = [1, 1]} : vector<128x128xf32> to vector<128x32xf32>
    %12 = arith.truncf %11 : vector<128x32xf32> to vector<128x32xbf16>
    %c0_9 = arith.constant 0 : index
    %c0_10 = arith.constant 0 : index
    %c0_11 = arith.constant 0 : index
    %13 = vector.load %arg5[%c0_9, %c0_10, %c0_11] : memref<4x128x32xbf16, #tpu.memory_space<vmem>>, vector<1x128x32xbf16>
    %14 = vector.shape_cast %13 : vector<1x128x32xbf16> to vector<128x32xbf16>
    %15 = vector.shape_cast %12 : vector<128x32xbf16> to vector<1x128x32xbf16>
    tpu.vector_store %arg5[%c0_9, %c0_10, %c0_11], %15 {strides = array<i32>} : memref<4x128x32xbf16, #tpu.memory_space<vmem>>, vector<1x128x32xbf16>,
    %16 = vector.extract_strided_slice %3 {offsets = [0, 32], sizes = [128, 32], strides = [1, 1]} : vector<128x128xf32> to vector<128x32xf32>
    %17 = arith.truncf %16 : vector<128x32xf32> to vector<128x32xbf16>
    %c1 = arith.constant 1 : index
    %c0_12 = arith.constant 0 : index
    %c0_13 = arith.constant 0 : index
    %18 = vector.load %arg4[%c1, %c0_12, %c0_13] : memref<4x128x32xbf16, #tpu.memory_space<vmem>>, vector<1x128x32xbf16>
    %19 = vector.shape_cast %18 : vector<1x128x32xbf16> to vector<128x32xbf16>
    %20 = vector.shape_cast %17 : vector<128x32xbf16> to vector<1x128x32xbf16>
    tpu.vector_store %arg4[%c1, %c0_12, %c0_13], %20 {strides = array<i32>} : memref<4x128x32xbf16, #tpu.memory_space<vmem>>, vector<1x128x32xbf16>,
    %21 = vector.extract_strided_slice %5 {offsets = [0, 32], sizes = [128, 32], strides = [1, 1]} : vector<128x128xf32> to vector<128x32xf32>
    %22 = arith.truncf %21 : vector<128x32xf32> to vector<128x32xbf16>
    %c1_14 = arith.constant 1 : index
    %c0_15 = arith.constant 0 : index
    %c0_16 = arith.constant 0 : index
    %23 = vector.load %arg5[%c1_14, %c0_15, %c0_16] : memref<4x128x32xbf16, #tpu.memory_space<vmem>>, vector<1x128x32xbf16>
    %24 = vector.shape_cast %23 : vector<1x128x32xbf16> to vector<128x32xbf16>
    %25 = vector.shape_cast %22 : vector<128x32xbf16> to vector<1x128x32xbf16>
    tpu.vector_store %arg5[%c1_14, %c0_15, %c0_16], %25 {strides = array<i32>} : memref<4x128x32xbf16, #tpu.memory_space<vmem>>, vector<1x128x32xbf16>,
    %26 = vector.extract_strided_slice %3 {offsets = [0, 64], sizes = [128, 32], strides = [1, 1]} : vector<128x128xf32> to vector<128x32xf32>
    %27 = arith.truncf %26 : vector<128x32xf32> to vector<128x32xbf16>
    %c2 = arith.constant 2 : index
    %c0_17 = arith.constant 0 : index
    %c0_18 = arith.constant 0 : index
    %28 = vector.load %arg4[%c2, %c0_17, %c0_18] : memref<4x128x32xbf16, #tpu.memory_space<vmem>>, vector<1x128x32xbf16>
    %29 = vector.shape_cast %28 : vector<1x128x32xbf16> to vector<128x32xbf16>
    %30 = vector.shape_cast %27 : vector<128x32xbf16> to vector<1x128x32xbf16>
    tpu.vector_store %arg4[%c2, %c0_17, %c0_18], %30 {strides = array<i32>} : memref<4x128x32xbf16, #tpu.memory_space<vmem>>, vector<1x128x32xbf16>,
    %31 = vector.extract_strided_slice %5 {offsets = [0, 64], sizes = [128, 32], strides = [1, 1]} : vector<128x128xf32> to vector<128x32xf32>
    %32 = arith.truncf %31 : vector<128x32xf32> to vector<128x32xbf16>
    %c2_19 = arith.constant 2 : index
    %c0_20 = arith.constant 0 : index
    %c0_21 = arith.constant 0 : index
    %33 = vector.load %arg5[%c2_19, %c0_20, %c0_21] : memref<4x128x32xbf16, #tpu.memory_space<vmem>>, vector<1x128x32xbf16>
    %34 = vector.shape_cast %33 : vector<1x128x32xbf16> to vector<128x32xbf16>
    %35 = vector.shape_cast %32 : vector<128x32xbf16> to vector<1x128x32xbf16>
    tpu.vector_store %arg5[%c2_19, %c0_20, %c0_21], %35 {strides = array<i32>} : memref<4x128x32xbf16, #tpu.memory_space<vmem>>, vector<1x128x32xbf16>,
    %36 = vector.extract_strided_slice %3 {offsets = [0, 96], sizes = [128, 32], strides = [1, 1]} : vector<128x128xf32> to vector<128x32xf32>
    %37 = arith.truncf %36 : vector<128x32xf32> to vector<128x32xbf16>
    %c3 = arith.constant 3 : index
    %c0_22 = arith.constant 0 : index
    %c0_23 = arith.constant 0 : index
    %38 = vector.load %arg4[%c3, %c0_22, %c0_23] : memref<4x128x32xbf16, #tpu.memory_space<vmem>>, vector<1x128x32xbf16>
    %39 = vector.shape_cast %38 : vector<1x128x32xbf16> to vector<128x32xbf16>
    %40 = vector.shape_cast %37 : vector<128x32xbf16> to vector<1x128x32xbf16>
    tpu.vector_store %arg4[%c3, %c0_22, %c0_23], %40 {strides = array<i32>} : memref<4x128x32xbf16, #tpu.memory_space<vmem>>, vector<1x128x32xbf16>,
    %41 = vector.extract_strided_slice %5 {offsets = [0, 96], sizes = [128, 32], strides = [1, 1]} : vector<128x128xf32> to vector<128x32xf32>
    %42 = arith.truncf %41 : vector<128x32xf32> to vector<128x32xbf16>
    %c3_24 = arith.constant 3 : index
    %c0_25 = arith.constant 0 : index
    %c0_26 = arith.constant 0 : index
    %43 = vector.load %arg5[%c3_24, %c0_25, %c0_26] : memref<4x128x32xbf16, #tpu.memory_space<vmem>>, vector<1x128x32xbf16>
    %44 = vector.shape_cast %43 : vector<1x128x32xbf16> to vector<128x32xbf16>
    %45 = vector.shape_cast %42 : vector<128x32xbf16> to vector<1x128x32xbf16>
    tpu.vector_store %arg5[%c3_24, %c0_25, %c0_26], %45 {strides = array<i32>} : memref<4x128x32xbf16, #tpu.memory_space<vmem>>, vector<1x128x32xbf16>,
    return
  }
  func.func @transform_0(%arg0: i32) -> (i32, i32) {
    %c0_i32 = arith.constant 0 : i32
    %c0_i32_0 = arith.constant 0 : i32
    return %arg0, %c0_i32 : i32, i32
  }
  func.func @transform_1(%arg0: i32) -> (i32, i32) {
    %c0_i32 = arith.constant 0 : i32
    %c0_i32_0 = arith.constant 0 : i32
    %c0_i32_1 = arith.constant 0 : i32
    return %c0_i32, %c0_i32_0 : i32, i32
  }
  func.func @transform_2(%arg0: i32) -> (i32, i32) {
    %c0_i32 = arith.constant 0 : i32
    %c0_i32_0 = arith.constant 0 : i32
    %c0_i32_1 = arith.constant 0 : i32
    return %c0_i32, %c0_i32_0 : i32, i32
  }
  func.func @transform_3(%arg0: i32) -> (i32, i32, i32) {
    %c0_i32 = arith.constant 0 : i32
    %c0_i32_0 = arith.constant 0 : i32
    %c0_i32_1 = arith.constant 0 : i32
    return %c0_i32, %arg0, %c0_i32_0 : i32, i32, i32
  }
  func.func @transform_4(%arg0: i32) -> (i32, i32, i32) {
    %c0_i32 = arith.constant 0 : i32
    %c0_i32_0 = arith.constant 0 : i32
    %c0_i32_1 = arith.constant 0 : i32
    return %c0_i32, %arg0, %c0_i32_0 : i32, i32, i32
  }
}

</mosaic_0001>

<llo_original>
// kernel: tpu_custom_call.1
$region0: #{tpu_custom_call.1}
  #allocation0 [shape = 'u32[]', space=smem, size = 0x4, offset = 0x4, fixed_abs, tag = 'smem constant byte address 0x4 - core index']
  #allocation1 [shape = 'u32[144,128]{1,0:T(1,128)}', space=vmem, size = 0x12000, scoped, tag = 'internal scratch']
  %s0 = inlined_call_operand.hbm [shape: f32[256,128], index: 0, kind: input, shape index: {}]
  %s1 = inlined_call_operand.hbm [shape: bf16[128,128], index: 1, kind: input, shape index: {}]
  %s2 = inlined_call_operand.hbm [shape: bf16[128,128], index: 2, kind: input, shape index: {}]
  %s3 = inlined_call_operand.vmem [shape: bf16[4,256,32], index: 3, kind: output, shape index: {0}]
  %s4 = inlined_call_operand.vmem [shape: bf16[4,256,32], index: 4, kind: output, shape index: {1}]
  %5 = xla_tuple %s3, %s4
  %s6 = sld [smem:[#allocation0]]
  $region139: #{tpu_custom_call.1} parent=0
    _
  %s8 = ssub.s32 1, %s6
  %s9 = scalar_select 0, %s8, %s6
  $region1: #{tpu_custom_call.1} parent=0
    #allocation2 [shape = 'u8[131072]{0}', space=vmem, size = 0x20000, scoped, tag = 'input window, operand 0']
    #allocation3 [shape = 's32[2]{0}', space=sflag, size = 0x8, scoped, tag = 'scoped memory for tpu_custom_call.1']
    #allocation4 [shape = 'u8[32768]{0}', space=vmem, size = 0x8000, scoped, tag = 'input window, operand 1, single buffered']
    #allocation5 [shape = 's32[1]{0}', space=sflag, size = 0x4, scoped, tag = 'scoped memory for tpu_custom_call.1']
    #allocation6 [shape = 'u8[32768]{0}', space=vmem, size = 0x8000, scoped, tag = 'input window, operand 2, single buffered']
    #allocation7 [shape = 'u8[262144]{0}', space=vmem, size = 0x40000, scoped, tag = 'output window, operand 0']
    #allocation8 [shape = 'u8[262144]{0}', space=vmem, size = 0x40000, scoped, tag = 'output window, operand 1']
    %10 = vsyncpa [#allocation3], 0
    %s11 = scalar_lea.sflag [#allocation3], 1
    %12 = vsyncpa %s11, 0
    %13 = vsyncpa [#allocation5], 0
    loop: start=0, step=1, limit=4
    $region2: #{tpu_custom_call.1} parent=1 // loop_pre_header
      _
    $region3: #{tpu_custom_call.1} parent=1 // loop_header
      %s15 = sphi 0, %s19
      %p16 = scmp.ge.s32.totalorder %s15, 4
      %s25 = sphi 0, %s27
      %s28 = sphi 0, %s25
      %s29 = sphi 0, %s28
      %s45 = sphi 0, %s29
      %s49 = sphi 0, %s49
      %s51 = sphi 0, %s49
      %s52 = sphi 0, %s51
      %s66 = sphi 0, %s52
      %s70 = sphi 0, %s70
      %s72 = sphi 0, %s70
      %s73 = sphi 0, %s72
      %s87 = sphi 0, %s73
      %s93 = sphi 0, %s95
      %s96 = sphi 0, %s93
      %s97 = sphi 0, %s96
      %s113 = sphi 0, %s97
      %s119 = sphi 0, %s121
      %s122 = sphi 0, %s119
      %s123 = sphi 0, %s122
      %s139 = sphi 0, %s123
    $region4: #{tpu_custom_call.1} parent=1 // loop_header_branch
      %18 = sbr.rel (%p16) target = $region8
    $region5: #{tpu_custom_call.1} parent=1 // loop_body
      %s20 = ssub.s32 %s15, 1
      %s21 = ssub.s32 %s15, 2
      %s22 = sadd.s32 %s15, 1
      %s23 = ssub.s32 %s15, %s22
      %p24 = scmp.eq.s32.totalorder %s23, 0
      %s26 = sadd.s32 %s25, 1
      %s27 = scalar_select %p24, %s25, %s26
      %p30 = pneg %p24
      %p31 = scmp.eq.s32.totalorder %s15, 1
      %p32 = por %p30, %p31
      %p33 = scmp.ne.s32.totalorder %s25, %s28
      %p34 = scmp.eq.s32.totalorder %s15, 0
      %p35 = por %p33, %p34
      %p36 = scmp.ne.s32.totalorder %s25, %s28
      %p37 = scmp.eq.s32.totalorder %s20, 1
      %p38 = por %p36, %p37
      %p39 = scmp.ne.s32.totalorder %s28, %s29
      %p40 = scmp.eq.s32.totalorder %s20, 0
      %p41 = por %p39, %p40
      %p42 = scmp.ne.s32.totalorder %s28, %s29
      %p43 = scmp.eq.s32.totalorder %s21, 1
      %p44 = por %p42, %p43
      %p46 = scmp.ne.s32.totalorder %s29, %s45
      %p47 = scmp.eq.s32.totalorder %s21, 0
      %p48 = por %p46, %p47
      %s50 = sadd.s32 %s49, 1
      %p53 = scmp.eq.s32.totalorder %s15, 1
      %p54 = scmp.ne.s32.totalorder %s49, %s51
      %p55 = scmp.eq.s32.totalorder %s15, 0
      %p56 = por %p54, %p55
      %p57 = scmp.ne.s32.totalorder %s49, %s51
      %p58 = scmp.eq.s32.totalorder %s20, 1
      %p59 = por %p57, %p58
      %p60 = scmp.ne.s32.totalorder %s51, %s52
      %p61 = scmp.eq.s32.totalorder %s20, 0
      %p62 = por %p60, %p61
      %p63 = scmp.ne.s32.totalorder %s51, %s52
      %p64 = scmp.eq.s32.totalorder %s21, 1
      %p65 = por %p63, %p64
      %p67 = scmp.ne.s32.totalorder %s52, %s66
      %p68 = scmp.eq.s32.totalorder %s21, 0
      %p69 = por %p67, %p68
      %s71 = sadd.s32 %s70, 1
      %p74 = scmp.eq.s32.totalorder %s15, 1
      %p75 = scmp.ne.s32.totalorder %s70, %s72
      %p76 = scmp.eq.s32.totalorder %s15, 0
      %p77 = por %p75, %p76
      %p78 = scmp.ne.s32.totalorder %s70, %s72
      %p79 = scmp.eq.s32.totalorder %s20, 1
      %p80 = por %p78, %p79
      %p81 = scmp.ne.s32.totalorder %s72, %s73
      %p82 = scmp.eq.s32.totalorder %s20, 0
      %p83 = por %p81, %p82
      %p84 = scmp.ne.s32.totalorder %s72, %s73
      %p85 = scmp.eq.s32.totalorder %s21, 1
      %p86 = por %p84, %p85
      %p88 = scmp.ne.s32.totalorder %s73, %s87
      %p89 = scmp.eq.s32.totalorder %s21, 0
      %p90 = por %p88, %p89
      %s91 = ssub.s32 %s15, %s22
      %p92 = scmp.eq.s32.totalorder %s91, 0
      %s94 = sadd.s32 %s93, 1
      %s95 = scalar_select %p92, %s93, %s94
      %p98 = pneg %p92
      %p99 = scmp.eq.s32.totalorder %s15, 1
      %p100 = por %p98, %p99
      %p101 = scmp.ne.s32.totalorder %s93, %s96
      %p102 = scmp.eq.s32.totalorder %s15, 0
      %p103 = por %p101, %p102
      %p104 = scmp.ne.s32.totalorder %s93, %s96
      %p105 = scmp.eq.s32.totalorder %s20, 1
      %p106 = por %p104, %p105
      %p107 = scmp.ne.s32.totalorder %s96, %s97
      %p108 = scmp.eq.s32.totalorder %s20, 0
      %p109 = por %p107, %p108
      %p110 = scmp.ne.s32.totalorder %s96, %s97
      %p111 = scmp.eq.s32.totalorder %s21, 1
      %p112 = por %p110, %p111
      %p114 = scmp.ne.s32.totalorder %s97, %s113
      %p115 = scmp.eq.s32.totalorder %s21, 0
      %p116 = por %p114, %p115
      %s117 = ssub.s32 %s15, %s22
      %p118 = scmp.eq.s32.totalorder %s117, 0
      %s120 = sadd.s32 %s119, 1
      %s121 = scalar_select %p118, %s119, %s120
      %p124 = pneg %p118
      %p125 = scmp.eq.s32.totalorder %s15, 1
      %p126 = por %p124, %p125
      %p127 = scmp.ne.s32.totalorder %s119, %s122
      %p128 = scmp.eq.s32.totalorder %s15, 0
      %p129 = por %p127, %p128
      %p130 = scmp.ne.s32.totalorder %s119, %s122
      %p131 = scmp.eq.s32.totalorder %s20, 1
      %p132 = por %p130, %p131
      %p133 = scmp.ne.s32.totalorder %s122, %s123
      %p134 = scmp.eq.s32.totalorder %s20, 0
      %p135 = por %p133, %p134
      %p136 = scmp.ne.s32.totalorder %s122, %s123
      %p137 = scmp.eq.s32.totalorder %s21, 1
      %p138 = por %p136, %p137
      %p140 = scmp.ne.s32.totalorder %s123, %s139
      %p141 = scmp.eq.s32.totalorder %s21, 0
      %p142 = por %p140, %p141
      %p143 = scmp.le.s32.totalorder 1, %s15
      %p144 = scmp.lt.s32.totalorder %s15, 3
      %p145 = pnand %p143, %p144
      %p146 = pneg %p145
      // Predicated region
      $region9: #{tpu_custom_call.1} parent=5 // pred_check
        _
      $region10: #{tpu_custom_call.1} parent=5 // pred_check_branch
        %148 = sbr.rel (%p145) target = $region12
      $region11: #{tpu_custom_call.1} parent=5 // pred_region
        %s149 = ssub.s32 %s15, 1
        // Predicated region
        $region13: #{tpu_custom_call.1} parent=11 // pred_check
          %p150 = pneg %p62
        $region14: #{tpu_custom_call.1} parent=11 // pred_check_branch
          %152 = sbr.rel (%p150) target = $region16
        $region15: #{tpu_custom_call.1} parent=11 // pred_region
          %s154 = ssub.s32 1024, 1024
          %155 = vsyncadd [#allocation5], %s154
          %s156 = sshll.u32 [#allocation4], 4
          %s157 = int_to_ptr.vmem [resolvable:$true] %s156
          %162 = dma.hbm_to_vmem [thread:$0]  %s1, 1024, %s157, [#allocation5], 64, 64, 4
        $region16: #{tpu_custom_call.1} parent=11 // pred_fallthru
          _
        // Predicated region
        $region17: #{tpu_custom_call.1} parent=11 // pred_check
          %p163 = pneg %p83
        $region18: #{tpu_custom_call.1} parent=11 // pred_check_branch
          %165 = sbr.rel (%p163) target = $region20
        $region19: #{tpu_custom_call.1} parent=11 // pred_region
          %s167 = ssub.s32 1024, 1024
          %168 = vsyncadd [#allocation5], %s167
          %s169 = sshll.u32 [#allocation6], 4
          %s170 = int_to_ptr.vmem [resolvable:$true] %s169
          %175 = dma.hbm_to_vmem [thread:$0]  %s2, 1024, %s170, [#allocation5], 64, 64, 4
        $region20: #{tpu_custom_call.1} parent=11 // pred_fallthru
          _
      $region12: #{tpu_custom_call.1} parent=5 // pred_fallthru
        _
      %p176 = scmp.lt.s32.totalorder %s15, 2
      // Predicated region
      $region21: #{tpu_custom_call.1} parent=5 // pred_check
        %p177 = pneg %p176
      $region22: #{tpu_custom_call.1} parent=5 // pred_check_branch
        %179 = sbr.rel (%p177) target = $region24
      $region23: #{tpu_custom_call.1} parent=5 // pred_region
        // Predicated region
        $region25: #{tpu_custom_call.1} parent=23 // pred_check
          %p180 = pneg %p35
        $region26: #{tpu_custom_call.1} parent=23 // pred_check_branch
          %182 = sbr.rel (%p180) target = $region28
        $region27: #{tpu_custom_call.1} parent=23 // pred_region
          %s183 = sand.u32 %s25, 1
          %s184 = scalar_lea.sflag [#allocation3], %s183
          %s185 = sand.u32 %s25, 1
          %s186 = smul.addr %s185, 128
          %s187 = scalar_lea.vmem [#allocation2], %s186
          %s188 = smul.u32 16, %s15
          %s190 = ssub.s32 2048, 2048
          %191 = vsyncadd %s184, %s190
          %s192 = smul.addr %s188, 128
          %s193 = scalar_lea.hbm %s0, %s192
          %s194 = sshll.u32 %s187, 4
          %s195 = int_to_ptr.vmem [resolvable:$true] %s194
          %200 = dma.hbm_to_vmem [thread:$0]  %s193, 2048, %s195, %s184, 128, 128, 8
        $region28: #{tpu_custom_call.1} parent=23 // pred_fallthru
          _
      $region24: #{tpu_custom_call.1} parent=5 // pred_fallthru
        _
      %p201 = scmp.le.s32.totalorder 1, %s15
      %p202 = scmp.lt.s32.totalorder %s15, 3
      %p203 = pnand %p201, %p202
      %p204 = pneg %p203
      // Predicated region
      $region29: #{tpu_custom_call.1} parent=5 // pred_check
        _
      $region30: #{tpu_custom_call.1} parent=5 // pred_check_branch
        %206 = sbr.rel (%p203) target = $region32
      $region31: #{tpu_custom_call.1} parent=5 // pred_region
        %s207 = ssub.s32 %s15, 1
        %s208 = sand.u32 %s28, 1
        %s209 = scalar_lea.sflag [#allocation3], %s208
        %s210 = sand.u32 %s28, 1
        %s211 = smul.addr %s210, 128
        %s212 = scalar_lea.vmem [#allocation2], %s211
        // Predicated region
        $region33: #{tpu_custom_call.1} parent=31 // pred_check
          %p213 = pneg %p41
        $region34: #{tpu_custom_call.1} parent=31 // pred_check_branch
          %215 = sbr.rel (%p213) target = $region36
        $region35: #{tpu_custom_call.1} parent=31 // pred_region
          %216 = dma.done %s209, 2048
        $region36: #{tpu_custom_call.1} parent=31 // pred_fallthru
          _
        // Predicated region
        $region37: #{tpu_custom_call.1} parent=31 // pred_check
          %p217 = pneg %p62
        $region38: #{tpu_custom_call.1} parent=31 // pred_check_branch
          %219 = sbr.rel (%p217) target = $region40
        $region39: #{tpu_custom_call.1} parent=31 // pred_region
          %220 = dma.done [#allocation5], 1024
        $region40: #{tpu_custom_call.1} parent=31 // pred_fallthru
          _
        // Predicated region
        $region41: #{tpu_custom_call.1} parent=31 // pred_check
          %p221 = pneg %p83
        $region42: #{tpu_custom_call.1} parent=31 // pred_check_branch
          %223 = sbr.rel (%p221) target = $region44
        $region43: #{tpu_custom_call.1} parent=31 // pred_region
          %224 = dma.done [#allocation5], 1024
        $region44: #{tpu_custom_call.1} parent=31 // pred_fallthru
          _
        %s225 = sand.u32 %s28, 1
        %s226 = scalar_lea.sflag [#allocation3], %s225
        %s227 = sand.u32 %s28, 1
        %s228 = smul.addr %s227, 128
        %s229 = scalar_lea.vmem [#allocation2], %s228
        %p230 = pneg %p41
        %p231 = pneg %p38
        %p232 = pneg %p62
        %p233 = pneg %p59
        %p234 = pneg %p83
        %p235 = pneg %p80
        %p236 = pneg %p109
        %p237 = pneg %p106
        %s238 = sand.u32 %s96, 1
        %s239 = sand.u32 %s96, 1
        %s240 = smul.addr %s239, 256
        %s241 = scalar_lea.vmem [#allocation7], %s240
        %p242 = pneg %p135
        %p243 = pneg %p132
        %s244 = sand.u32 %s122, 1
        %s245 = sand.u32 %s122, 1
        %s246 = smul.addr %s245, 256
        %s247 = scalar_lea.vmem [#allocation8], %s246
        %s248 = smul.u32 16, %s20
        %s249 = smul.u32 16, %s20
        %s250 = smul.u32 16, %s20
        %v252 = vld [vmem:[%s212] sm:$0xff]
        %v253 = vld [vmem:[%s212 + $0x8] sm:$0xff]
        %v254 = vld [vmem:[%s212 + $0x10] sm:$0xff]
        %v255 = vld [vmem:[%s212 + $0x18] sm:$0xff]
        %v256 = vld [vmem:[%s212 + $0x20] sm:$0xff]
        %v257 = vld [vmem:[%s212 + $0x28] sm:$0xff]
        %v258 = vld [vmem:[%s212 + $0x30] sm:$0xff]
        %v259 = vld [vmem:[%s212 + $0x38] sm:$0xff]
        %v260 = vld [vmem:[%s212 + $0x40] sm:$0xff]
        %v261 = vld [vmem:[%s212 + $0x48] sm:$0xff]
        %v262 = vld [vmem:[%s212 + $0x50] sm:$0xff]
        %v263 = vld [vmem:[%s212 + $0x58] sm:$0xff]
        %v264 = vld [vmem:[%s212 + $0x60] sm:$0xff]
        %v265 = vld [vmem:[%s212 + $0x68] sm:$0xff]
        %v266 = vld [vmem:[%s212 + $0x70] sm:$0xff]
        %v267 = vld [vmem:[%s212 + $0x78] sm:$0xff]
        %v268 = vpack.c.bf16 %v253, %v252
        %v269 = vpack.c.bf16 %v255, %v254
        %v270 = vpack.c.bf16 %v257, %v256
        %v271 = vpack.c.bf16 %v259, %v258
        %v272 = vpack.c.bf16 %v261, %v260
        %v273 = vpack.c.bf16 %v263, %v262
        %v274 = vpack.c.bf16 %v265, %v264
        %v275 = vpack.c.bf16 %v267, %v266
        %v276 = vld [vmem:[#allocation4] sm:$0xf]
        %v277 = vld [vmem:[#allocation4 + $0x4] sm:$0xf]
        %v278 = vld [vmem:[#allocation4 + $0x8] sm:$0xf]
        %v279 = vld [vmem:[#allocation4 + $0xc] sm:$0xf]
        %v280 = vld [vmem:[#allocation4 + $0x10] sm:$0xf]
        %v281 = vld [vmem:[#allocation4 + $0x14] sm:$0xf]
        %v282 = vld [vmem:[#allocation4 + $0x18] sm:$0xf]
        %v283 = vld [vmem:[#allocation4 + $0x1c] sm:$0xf]
        %v284 = vld [vmem:[#allocation4 + $0x20] sm:$0xf]
        %v285 = vld [vmem:[#allocation4 + $0x24] sm:$0xf]
        %v286 = vld [vmem:[#allocation4 + $0x28] sm:$0xf]
        %v287 = vld [vmem:[#allocation4 + $0x2c] sm:$0xf]
        %v288 = vld [vmem:[#allocation4 + $0x30] sm:$0xf]
        %v289 = vld [vmem:[#allocation4 + $0x34] sm:$0xf]
        %v290 = vld [vmem:[#allocation4 + $0x38] sm:$0xf]
        %v291 = vld [vmem:[#allocation4 + $0x3c] sm:$0xf]
        %v308 = vunpack.c.l.b16 %v276
        %v309 = vunpack.c.l.b16 %v277
        %v310 = vunpack.c.l.b16 %v278
        %v311 = vunpack.c.l.b16 %v279
        %v312 = vunpack.c.l.b16 %v280
        %v313 = vunpack.c.l.b16 %v281
        %v314 = vunpack.c.l.b16 %v282
        %v315 = vunpack.c.l.b16 %v283
        %v316 = vunpack.c.l.b16 %v284
        %v317 = vunpack.c.l.b16 %v285
        %v318 = vunpack.c.l.b16 %v286
        %v319 = vunpack.c.l.b16 %v287
        %v320 = vunpack.c.l.b16 %v288
        %v321 = vunpack.c.l.b16 %v289
        %v322 = vunpack.c.l.b16 %v290
        %v323 = vunpack.c.l.b16 %v291
        %v324 = vpack.c.b16 %v309, %v308
        %v325 = vpack.c.b16 %v311, %v310
        %v326 = vpack.c.b16 %v313, %v312
        %v327 = vpack.c.b16 %v315, %v314
        %v328 = vpack.c.b16 %v317, %v316
        %v329 = vpack.c.b16 %v319, %v318
        %v330 = vpack.c.b16 %v321, %v320
        %v331 = vpack.c.b16 %v323, %v322
        %340 = vmatprep.subr.bf16.mxu0 0
        %341 = vmatpush1.bf16.msra.mxu0 %v324
        %342 = vmatprep.subr.bf16.mxu0 0
        %343 = vmatpush1.bf16.msra.mxu0 %v325
        %344 = vmatprep.subr.bf16.mxu0 0
        %345 = vmatpush1.bf16.msra.mxu0 %v326
        %346 = vmatprep.subr.bf16.mxu0 0
        %347 = vmatpush1.bf16.msra.mxu0 %v327
        %348 = vmatprep.subr.bf16.mxu0 0
        %349 = vmatpush1.bf16.msra.mxu0 %v328
        %350 = vmatprep.subr.bf16.mxu0 0
        %351 = vmatpush1.bf16.msra.mxu0 %v329
        %352 = vmatprep.subr.bf16.mxu0 0
        %353 = vmatpush1.bf16.msra.mxu0 %v330
        %354 = vmatprep.subr.bf16.mxu0 0
        %355 = vmatpush1.bf16.msra.mxu0 %v331
        %356 = vmatprep.subr.bf16.mxu0 0
        %357 = vmatpush1.bf16.msra.mxu0 0
        %358 = vmatprep.subr.bf16.mxu0 0
        %359 = vmatpush1.bf16.msra.mxu0 0
        %360 = vmatprep.subr.bf16.mxu0 0
        %361 = vmatpush1.bf16.msra.mxu0 0
        %362 = vmatprep.subr.bf16.mxu0 0
        %363 = vmatpush1.bf16.msra.mxu0 0
        %364 = vmatprep.subr.bf16.mxu0 0
        %365 = vmatpush1.bf16.msra.mxu0 0
        %366 = vmatprep.subr.bf16.mxu0 0
        %367 = vmatpush1.bf16.msra.mxu0 0
        %368 = vmatprep.subr.bf16.mxu0 0
        %369 = vmatpush1.bf16.msra.mxu0 0
        %370 = vmatprep.subr.bf16.mxu0 0
        %371 = vmatpush1.bf16.msra.mxu0 0
        %372 = vmatprep.mubr.bf16.mxu0 0
        %373 = vmatmul.mubr.bf16.gmra.mrb[0].mxu0 %v268
        %v374 = vpop.f32.mrb[0].mxu0
        %v375 = vadd.f32 0.0, %v374
        %v376 = vpop.f32.mrb[0].mxu0
        %v377 = vpop.f32.mrb[0].mxu0
        %v378 = vadd.f32 0.0, %v377
        %v379 = vpop.f32.mrb[0].mxu0
        %380 = vmatprep.mubr.bf16.mxu0 0
        %381 = vmatmul.mubr.bf16.gmra.mrb[0].mxu0 %v269
        %v382 = vpop.f32.mrb[0].mxu0
        %v383 = vadd.f32 0.0, %v382
        %v384 = vpop.f32.mrb[0].mxu0
        %v385 = vpop.f32.mrb[0].mxu0
        %v386 = vadd.f32 0.0, %v385
        %v387 = vpop.f32.mrb[0].mxu0
        %388 = vmatprep.mubr.bf16.mxu0 0
        %389 = vmatmul.mubr.bf16.gmra.mrb[0].mxu0 %v270
        %v390 = vpop.f32.mrb[0].mxu0
        %v391 = vadd.f32 0.0, %v390
        %v392 = vpop.f32.mrb[0].mxu0
        %v393 = vpop.f32.mrb[0].mxu0
        %v394 = vadd.f32 0.0, %v393
        %v395 = vpop.f32.mrb[0].mxu0
        %396 = vmatprep.mubr.bf16.mxu0 0
        %397 = vmatmul.mubr.bf16.gmra.mrb[0].mxu0 %v271
        %v398 = vpop.f32.mrb[0].mxu0
        %v399 = vadd.f32 0.0, %v398
        %v400 = vpop.f32.mrb[0].mxu0
        %v401 = vpop.f32.mrb[0].mxu0
        %v402 = vadd.f32 0.0, %v401
        %v403 = vpop.f32.mrb[0].mxu0
        %404 = vmatprep.mubr.bf16.mxu0 0
        %405 = vmatmul.mubr.bf16.gmra.mrb[0].mxu0 %v272
        %v406 = vpop.f32.mrb[0].mxu0
        %v407 = vadd.f32 0.0, %v406
        %v408 = vpop.f32.mrb[0].mxu0
        %v409 = vpop.f32.mrb[0].mxu0
        %v410 = vadd.f32 0.0, %v409
        %v411 = vpop.f32.mrb[0].mxu0
        %412 = vmatprep.mubr.bf16.mxu0 0
        %413 = vmatmul.mubr.bf16.gmra.mrb[0].mxu0 %v273
        %v414 = vpop.f32.mrb[0].mxu0
        %v415 = vadd.f32 0.0, %v414
        %v416 = vpop.f32.mrb[0].mxu0
        %v417 = vpop.f32.mrb[0].mxu0
        %v418 = vadd.f32 0.0, %v417
        %v419 = vpop.f32.mrb[0].mxu0
        %420 = vmatprep.mubr.bf16.mxu0 0
        %421 = vmatmul.mubr.bf16.gmra.mrb[0].mxu0 %v274
        %v422 = vpop.f32.mrb[0].mxu0
        %v423 = vadd.f32 0.0, %v422
        %v424 = vpop.f32.mrb[0].mxu0
        %v425 = vpop.f32.mrb[0].mxu0
        %v426 = vadd.f32 0.0, %v425
        %v427 = vpop.f32.mrb[0].mxu0
        %428 = vmatprep.mubr.bf16.mxu0 0
        %429 = vmatmul.mubr.bf16.gmra.mrb[0].mxu0 %v275
        %v430 = vpop.f32.mrb[0].mxu0
        %v431 = vadd.f32 0.0, %v430
        %v432 = vpop.f32.mrb[0].mxu0
        %v433 = vpop.f32.mrb[0].mxu0
        %v434 = vadd.f32 0.0, %v433
        %v435 = vpop.f32.mrb[0].mxu0
        %436 = vdwg.mxu0
        %v437 = vld [vmem:[#allocation6] sm:$0xf]
        %v438 = vld [vmem:[#allocation6 + $0x4] sm:$0xf]
        %v439 = vld [vmem:[#allocation6 + $0x8] sm:$0xf]
        %v440 = vld [vmem:[#allocation6 + $0xc] sm:$0xf]
        %v441 = vld [vmem:[#allocation6 + $0x10] sm:$0xf]
        %v442 = vld [vmem:[#allocation6 + $0x14] sm:$0xf]
        %v443 = vld [vmem:[#allocation6 + $0x18] sm:$0xf]
        %v444 = vld [vmem:[#allocation6 + $0x1c] sm:$0xf]
        %v445 = vld [vmem:[#allocation6 + $0x20] sm:$0xf]
        %v446 = vld [vmem:[#allocation6 + $0x24] sm:$0xf]
        %v447 = vld [vmem:[#allocation6 + $0x28] sm:$0xf]
        %v448 = vld [vmem:[#allocation6 + $0x2c] sm:$0xf]
        %v449 = vld [vmem:[#allocation6 + $0x30] sm:$0xf]
        %v450 = vld [vmem:[#allocation6 + $0x34] sm:$0xf]
        %v451 = vld [vmem:[#allocation6 + $0x38] sm:$0xf]
        %v452 = vld [vmem:[#allocation6 + $0x3c] sm:$0xf]
        %v469 = vunpack.c.l.b16 %v437
        %v470 = vunpack.c.l.b16 %v438
        %v471 = vunpack.c.l.b16 %v439
        %v472 = vunpack.c.l.b16 %v440
        %v473 = vunpack.c.l.b16 %v441
        %v474 = vunpack.c.l.b16 %v442
        %v475 = vunpack.c.l.b16 %v443
        %v476 = vunpack.c.l.b16 %v444
        %v477 = vunpack.c.l.b16 %v445
        %v478 = vunpack.c.l.b16 %v446
        %v479 = vunpack.c.l.b16 %v447
        %v480 = vunpack.c.l.b16 %v448
        %v481 = vunpack.c.l.b16 %v449
        %v482 = vunpack.c.l.b16 %v450
        %v483 = vunpack.c.l.b16 %v451
        %v484 = vunpack.c.l.b16 %v452
        %v485 = vpack.c.b16 %v470, %v469
        %v486 = vpack.c.b16 %v472, %v471
        %v487 = vpack.c.b16 %v474, %v473
        %v488 = vpack.c.b16 %v476, %v475
        %v489 = vpack.c.b16 %v478, %v477
        %v490 = vpack.c.b16 %v480, %v479
        %v491 = vpack.c.b16 %v482, %v481
        %v492 = vpack.c.b16 %v484, %v483
        %501 = vmatprep.subr.bf16.mxu0 0
        %502 = vmatpush1.bf16.msra.mxu0 %v485
        %503 = vmatprep.subr.bf16.mxu0 0
        %504 = vmatpush1.bf16.msra.mxu0 %v486
        %505 = vmatprep.subr.bf16.mxu0 0
        %506 = vmatpush1.bf16.msra.mxu0 %v487
        %507 = vmatprep.subr.bf16.mxu0 0
        %508 = vmatpush1.bf16.msra.mxu0 %v488
        %509 = vmatprep.subr.bf16.mxu0 0
        %510 = vmatpush1.bf16.msra.mxu0 %v489
        %511 = vmatprep.subr.bf16.mxu0 0
        %512 = vmatpush1.bf16.msra.mxu0 %v490
        %513 = vmatprep.subr.bf16.mxu0 0
        %514 = vmatpush1.bf16.msra.mxu0 %v491
        %515 = vmatprep.subr.bf16.mxu0 0
        %516 = vmatpush1.bf16.msra.mxu0 %v492
        %517 = vmatprep.subr.bf16.mxu0 0
        %518 = vmatpush1.bf16.msra.mxu0 0
        %519 = vmatprep.subr.bf16.mxu0 0
        %520 = vmatpush1.bf16.msra.mxu0 0
        %521 = vmatprep.subr.bf16.mxu0 0
        %522 = vmatpush1.bf16.msra.mxu0 0
        %523 = vmatprep.subr.bf16.mxu0 0
        %524 = vmatpush1.bf16.msra.mxu0 0
        %525 = vmatprep.subr.bf16.mxu0 0
        %526 = vmatpush1.bf16.msra.mxu0 0
        %527 = vmatprep.subr.bf16.mxu0 0
        %528 = vmatpush1.bf16.msra.mxu0 0
        %529 = vmatprep.subr.bf16.mxu0 0
        %530 = vmatpush1.bf16.msra.mxu0 0
        %531 = vmatprep.subr.bf16.mxu0 0
        %532 = vmatpush1.bf16.msra.mxu0 0
        %533 = vmatprep.mubr.bf16.mxu0 0
        %534 = vmatmul.mubr.bf16.gmra.mrb[0].mxu0 %v268
        %v535 = vpop.f32.mrb[0].mxu0
        %v536 = vadd.f32 0.0, %v535
        %v537 = vpop.f32.mrb[0].mxu0
        %v538 = vpop.f32.mrb[0].mxu0
        %v539 = vadd.f32 0.0, %v538
        %v540 = vpop.f32.mrb[0].mxu0
        %541 = vmatprep.mubr.bf16.mxu0 0
        %542 = vmatmul.mubr.bf16.gmra.mrb[0].mxu0 %v269
        %v543 = vpop.f32.mrb[0].mxu0
        %v544 = vadd.f32 0.0, %v543
        %v545 = vpop.f32.mrb[0].mxu0
        %v546 = vpop.f32.mrb[0].mxu0
        %v547 = vadd.f32 0.0, %v546
        %v548 = vpop.f32.mrb[0].mxu0
        %549 = vmatprep.mubr.bf16.mxu0 0
        %550 = vmatmul.mubr.bf16.gmra.mrb[0].mxu0 %v270
        %v551 = vpop.f32.mrb[0].mxu0
        %v552 = vadd.f32 0.0, %v551
        %v553 = vpop.f32.mrb[0].mxu0
        %v554 = vpop.f32.mrb[0].mxu0
        %v555 = vadd.f32 0.0, %v554
        %v556 = vpop.f32.mrb[0].mxu0
        %557 = vmatprep.mubr.bf16.mxu0 0
        %558 = vmatmul.mubr.bf16.gmra.mrb[0].mxu0 %v271
        %v559 = vpop.f32.mrb[0].mxu0
        %v560 = vadd.f32 0.0, %v559
        %v561 = vpop.f32.mrb[0].mxu0
        %v562 = vpop.f32.mrb[0].mxu0
        %v563 = vadd.f32 0.0, %v562
        %v564 = vpop.f32.mrb[0].mxu0
        %565 = vmatprep.mubr.bf16.mxu0 0
        %566 = vmatmul.mubr.bf16.gmra.mrb[0].mxu0 %v272
        %v567 = vpop.f32.mrb[0].mxu0
        %v568 = vadd.f32 0.0, %v567
        %v569 = vpop.f32.mrb[0].mxu0
        %v570 = vpop.f32.mrb[0].mxu0
        %v571 = vadd.f32 0.0, %v570
        %v572 = vpop.f32.mrb[0].mxu0
        %573 = vmatprep.mubr.bf16.mxu0 0
        %574 = vmatmul.mubr.bf16.gmra.mrb[0].mxu0 %v273
        %v575 = vpop.f32.mrb[0].mxu0
        %v576 = vadd.f32 0.0, %v575
        %v577 = vpop.f32.mrb[0].mxu0
        %v578 = vpop.f32.mrb[0].mxu0
        %v579 = vadd.f32 0.0, %v578
        %v580 = vpop.f32.mrb[0].mxu0
        %581 = vmatprep.mubr.bf16.mxu0 0
        %582 = vmatmul.mubr.bf16.gmra.mrb[0].mxu0 %v274
        %v583 = vpop.f32.mrb[0].mxu0
        %v584 = vadd.f32 0.0, %v583
        %v585 = vpop.f32.mrb[0].mxu0
        %v586 = vpop.f32.mrb[0].mxu0
        %v587 = vadd.f32 0.0, %v586
        %v588 = vpop.f32.mrb[0].mxu0
        %589 = vmatprep.mubr.bf16.mxu0 0
        %590 = vmatmul.mubr.bf16.gmra.mrb[0].mxu0 %v275
        %v591 = vpop.f32.mrb[0].mxu0
        %v592 = vadd.f32 0.0, %v591
        %v593 = vpop.f32.mrb[0].mxu0
        %v594 = vpop.f32.mrb[0].mxu0
        %v595 = vadd.f32 0.0, %v594
        %v596 = vpop.f32.mrb[0].mxu0
        %597 = vdwg.mxu0
        %v598 = vpack.c.bf16 %v378, %v375
        %v599 = vpack.c.bf16 %v386, %v383
        %v600 = vpack.c.bf16 %v394, %v391
        %v601 = vpack.c.bf16 %v402, %v399
        %v602 = vpack.c.bf16 %v410, %v407
        %v603 = vpack.c.bf16 %v418, %v415
        %v604 = vpack.c.bf16 %v426, %v423
        %v605 = vpack.c.bf16 %v434, %v431
        %v614 = vunpack.c.l.b16 %v598
        %v615 = vunpack.c.h.b16 %v598
        %v616 = vunpack.c.l.b16 %v599
        %v617 = vunpack.c.h.b16 %v599
        %v618 = vunpack.c.l.b16 %v600
        %v619 = vunpack.c.h.b16 %v600
        %v620 = vunpack.c.l.b16 %v601
        %v621 = vunpack.c.h.b16 %v601
        %v622 = vunpack.c.l.b16 %v602
        %v623 = vunpack.c.h.b16 %v602
        %v624 = vunpack.c.l.b16 %v603
        %v625 = vunpack.c.h.b16 %v603
        %v626 = vunpack.c.l.b16 %v604
        %v627 = vunpack.c.h.b16 %v604
        %v628 = vunpack.c.l.b16 %v605
        %v629 = vunpack.c.h.b16 %v605
        %v630 = vpack.c.b16 %v614, %v614
        %v631 = vpack.c.b16 %v615, %v615
        %v632 = vpack.c.b16 %v616, %v616
        %v633 = vpack.c.b16 %v617, %v617
        %v634 = vpack.c.b16 %v618, %v618
        %v635 = vpack.c.b16 %v619, %v619
        %v636 = vpack.c.b16 %v620, %v620
        %v637 = vpack.c.b16 %v621, %v621
        %v638 = vpack.c.b16 %v622, %v622
        %v639 = vpack.c.b16 %v623, %v623
        %v640 = vpack.c.b16 %v624, %v624
        %v641 = vpack.c.b16 %v625, %v625
        %v642 = vpack.c.b16 %v626, %v626
        %v643 = vpack.c.b16 %v627, %v627
        %v644 = vpack.c.b16 %v628, %v628
        %v645 = vpack.c.b16 %v629, %v629
        %vm662 = vcmask 257024
        %663 = vst.msk [vmem:[%s241] sm:$0xf] %vm662, %v630
        %664 = vst.msk [vmem:[%s241 + $0x4] sm:$0xf] %vm662, %v631
        %665 = vst.msk [vmem:[%s241 + $0x8] sm:$0xf] %vm662, %v632
        %666 = vst.msk [vmem:[%s241 + $0xc] sm:$0xf] %vm662, %v633
        %667 = vst.msk [vmem:[%s241 + $0x10] sm:$0xf] %vm662, %v634
        %668 = vst.msk [vmem:[%s241 + $0x14] sm:$0xf] %vm662, %v635
        %669 = vst.msk [vmem:[%s241 + $0x18] sm:$0xf] %vm662, %v636
        %670 = vst.msk [vmem:[%s241 + $0x1c] sm:$0xf] %vm662, %v637
        %671 = vst.msk [vmem:[%s241 + $0x20] sm:$0xf] %vm662, %v638
        %672 = vst.msk [vmem:[%s241 + $0x24] sm:$0xf] %vm662, %v639
        %673 = vst.msk [vmem:[%s241 + $0x28] sm:$0xf] %vm662, %v640
        %674 = vst.msk [vmem:[%s241 + $0x2c] sm:$0xf] %vm662, %v641
        %675 = vst.msk [vmem:[%s241 + $0x30] sm:$0xf] %vm662, %v642
        %676 = vst.msk [vmem:[%s241 + $0x34] sm:$0xf] %vm662, %v643
        %677 = vst.msk [vmem:[%s241 + $0x38] sm:$0xf] %vm662, %v644
        %678 = vst.msk [vmem:[%s241 + $0x3c] sm:$0xf] %vm662, %v645
        %v679 = vpack.c.bf16 %v539, %v536
        %v680 = vpack.c.bf16 %v547, %v544
        %v681 = vpack.c.bf16 %v555, %v552
        %v682 = vpack.c.bf16 %v563, %v560
        %v683 = vpack.c.bf16 %v571, %v568
        %v684 = vpack.c.bf16 %v579, %v576
        %v685 = vpack.c.bf16 %v587, %v584
        %v686 = vpack.c.bf16 %v595, %v592
        %v695 = vunpack.c.l.b16 %v679
        %v696 = vunpack.c.h.b16 %v679
        %v697 = vunpack.c.l.b16 %v680
        %v698 = vunpack.c.h.b16 %v680
        %v699 = vunpack.c.l.b16 %v681
        %v700 = vunpack.c.h.b16 %v681
        %v701 = vunpack.c.l.b16 %v682
        %v702 = vunpack.c.h.b16 %v682
        %v703 = vunpack.c.l.b16 %v683
        %v704 = vunpack.c.h.b16 %v683
        %v705 = vunpack.c.l.b16 %v684
        %v706 = vunpack.c.h.b16 %v684
        %v707 = vunpack.c.l.b16 %v685
        %v708 = vunpack.c.h.b16 %v685
        %v709 = vunpack.c.l.b16 %v686
        %v710 = vunpack.c.h.b16 %v686
        %v711 = vpack.c.b16 %v695, %v695
        %v712 = vpack.c.b16 %v696, %v696
        %v713 = vpack.c.b16 %v697, %v697
        %v714 = vpack.c.b16 %v698, %v698
        %v715 = vpack.c.b16 %v699, %v699
        %v716 = vpack.c.b16 %v700, %v700
        %v717 = vpack.c.b16 %v701, %v701
        %v718 = vpack.c.b16 %v702, %v702
        %v719 = vpack.c.b16 %v703, %v703
        %v720 = vpack.c.b16 %v704, %v704
        %v721 = vpack.c.b16 %v705, %v705
        %v722 = vpack.c.b16 %v706, %v706
        %v723 = vpack.c.b16 %v707, %v707
        %v724 = vpack.c.b16 %v708, %v708
        %v725 = vpack.c.b16 %v709, %v709
        %v726 = vpack.c.b16 %v710, %v710
        %743 = vst.msk [vmem:[%s247] sm:$0xf] %vm662, %v711
        %744 = vst.msk [vmem:[%s247 + $0x4] sm:$0xf] %vm662, %v712
        %745 = vst.msk [vmem:[%s247 + $0x8] sm:$0xf] %vm662, %v713
        %746 = vst.msk [vmem:[%s247 + $0xc] sm:$0xf] %vm662, %v714
        %747 = vst.msk [vmem:[%s247 + $0x10] sm:$0xf] %vm662, %v715
        %748 = vst.msk [vmem:[%s247 + $0x14] sm:$0xf] %vm662, %v716
        %749 = vst.msk [vmem:[%s247 + $0x18] sm:$0xf] %vm662, %v717
        %750 = vst.msk [vmem:[%s247 + $0x1c] sm:$0xf] %vm662, %v718
        %751 = vst.msk [vmem:[%s247 + $0x20] sm:$0xf] %vm662, %v719
        %752 = vst.msk [vmem:[%s247 + $0x24] sm:$0xf] %vm662, %v720
        %753 = vst.msk [vmem:[%s247 + $0x28] sm:$0xf] %vm662, %v721
        %754 = vst.msk [vmem:[%s247 + $0x2c] sm:$0xf] %vm662, %v722
        %755 = vst.msk [vmem:[%s247 + $0x30] sm:$0xf] %vm662, %v723
        %756 = vst.msk [vmem:[%s247 + $0x34] sm:$0xf] %vm662, %v724
        %757 = vst.msk [vmem:[%s247 + $0x38] sm:$0xf] %vm662, %v725
        %758 = vst.msk [vmem:[%s247 + $0x3c] sm:$0xf] %vm662, %v726
        %759 = vrot.lane.b32.xlu0 %v630, 96
        %v760 = vpop.permute.xlu0 %759
        %761 = vrot.lane.b32.xlu0 %v631, 96
        %v762 = vpop.permute.xlu0 %761
        %763 = vrot.lane.b32.xlu0 %v632, 96
        %v764 = vpop.permute.xlu0 %763
        %765 = vrot.lane.b32.xlu0 %v633, 96
        %v766 = vpop.permute.xlu0 %765
        %767 = vrot.lane.b32.xlu0 %v634, 96
        %v768 = vpop.permute.xlu0 %767
        %769 = vrot.lane.b32.xlu0 %v635, 96
        %v770 = vpop.permute.xlu0 %769
        %771 = vrot.lane.b32.xlu0 %v636, 96
        %v772 = vpop.permute.xlu0 %771
        %773 = vrot.lane.b32.xlu0 %v637, 96
        %v774 = vpop.permute.xlu0 %773
        %775 = vrot.lane.b32.xlu0 %v638, 96
        %v776 = vpop.permute.xlu0 %775
        %777 = vrot.lane.b32.xlu0 %v639, 96
        %v778 = vpop.permute.xlu0 %777
        %779 = vrot.lane.b32.xlu0 %v640, 96
        %v780 = vpop.permute.xlu0 %779
        %781 = vrot.lane.b32.xlu0 %v641, 96
        %v782 = vpop.permute.xlu0 %781
        %783 = vrot.lane.b32.xlu0 %v642, 96
        %v784 = vpop.permute.xlu0 %783
        %785 = vrot.lane.b32.xlu0 %v643, 96
        %v786 = vpop.permute.xlu0 %785
        %787 = vrot.lane.b32.xlu0 %v644, 96
        %v788 = vpop.permute.xlu0 %787
        %789 = vrot.lane.b32.xlu0 %v645, 96
        %v790 = vpop.permute.xlu0 %789
        %s807 = scalar_lea.vmem %s241, 64 [#allocation7]
        %808 = vst.msk [vmem:[%s807] sm:$0xf] %vm662, %v760
        %809 = vst.msk [vmem:[%s807 + $0x4] sm:$0xf] %vm662, %v762
        %810 = vst.msk [vmem:[%s807 + $0x8] sm:$0xf] %vm662, %v764
        %811 = vst.msk [vmem:[%s807 + $0xc] sm:$0xf] %vm662, %v766
        %812 = vst.msk [vmem:[%s807 + $0x10] sm:$0xf] %vm662, %v768
        %813 = vst.msk [vmem:[%s807 + $0x14] sm:$0xf] %vm662, %v770
        %814 = vst.msk [vmem:[%s807 + $0x18] sm:$0xf] %vm662, %v772
        %815 = vst.msk [vmem:[%s807 + $0x1c] sm:$0xf] %vm662, %v774
        %816 = vst.msk [vmem:[%s807 + $0x20] sm:$0xf] %vm662, %v776
        %817 = vst.msk [vmem:[%s807 + $0x24] sm:$0xf] %vm662, %v778
        %818 = vst.msk [vmem:[%s807 + $0x28] sm:$0xf] %vm662, %v780
        %819 = vst.msk [vmem:[%s807 + $0x2c] sm:$0xf] %vm662, %v782
        %820 = vst.msk [vmem:[%s807 + $0x30] sm:$0xf] %vm662, %v784
        %821 = vst.msk [vmem:[%s807 + $0x34] sm:$0xf] %vm662, %v786
        %822 = vst.msk [vmem:[%s807 + $0x38] sm:$0xf] %vm662, %v788
        %823 = vst.msk [vmem:[%s807 + $0x3c] sm:$0xf] %vm662, %v790
        %824 = vrot.lane.b32.xlu0 %v711, 96
        %v825 = vpop.permute.xlu0 %824
        %826 = vrot.lane.b32.xlu0 %v712, 96
        %v827 = vpop.permute.xlu0 %826
        %828 = vrot.lane.b32.xlu0 %v713, 96
        %v829 = vpop.permute.xlu0 %828
        %830 = vrot.lane.b32.xlu0 %v714, 96
        %v831 = vpop.permute.xlu0 %830
        %832 = vrot.lane.b32.xlu0 %v715, 96
        %v833 = vpop.permute.xlu0 %832
        %834 = vrot.lane.b32.xlu0 %v716, 96
        %v835 = vpop.permute.xlu0 %834
        %836 = vrot.lane.b32.xlu0 %v717, 96
        %v837 = vpop.permute.xlu0 %836
        %838 = vrot.lane.b32.xlu0 %v718, 96
        %v839 = vpop.permute.xlu0 %838
        %840 = vrot.lane.b32.xlu0 %v719, 96
        %v841 = vpop.permute.xlu0 %840
        %842 = vrot.lane.b32.xlu0 %v720, 96
        %v843 = vpop.permute.xlu0 %842
        %844 = vrot.lane.b32.xlu0 %v721, 96
        %v845 = vpop.permute.xlu0 %844
        %846 = vrot.lane.b32.xlu0 %v722, 96
        %v847 = vpop.permute.xlu0 %846
        %848 = vrot.lane.b32.xlu0 %v723, 96
        %v849 = vpop.permute.xlu0 %848
        %850 = vrot.lane.b32.xlu0 %v724, 96
        %v851 = vpop.permute.xlu0 %850
        %852 = vrot.lane.b32.xlu0 %v725, 96
        %v853 = vpop.permute.xlu0 %852
        %854 = vrot.lane.b32.xlu0 %v726, 96
        %v855 = vpop.permute.xlu0 %854
        %s872 = scalar_lea.vmem %s247, 64 [#allocation8]
        %873 = vst.msk [vmem:[%s872] sm:$0xf] %vm662, %v825
        %874 = vst.msk [vmem:[%s872 + $0x4] sm:$0xf] %vm662, %v827
        %875 = vst.msk [vmem:[%s872 + $0x8] sm:$0xf] %vm662, %v829
        %876 = vst.msk [vmem:[%s872 + $0xc] sm:$0xf] %vm662, %v831
        %877 = vst.msk [vmem:[%s872 + $0x10] sm:$0xf] %vm662, %v833
        %878 = vst.msk [vmem:[%s872 + $0x14] sm:$0xf] %vm662, %v835
        %879 = vst.msk [vmem:[%s872 + $0x18] sm:$0xf] %vm662, %v837
        %880 = vst.msk [vmem:[%s872 + $0x1c] sm:$0xf] %vm662, %v839
        %881 = vst.msk [vmem:[%s872 + $0x20] sm:$0xf] %vm662, %v841
        %882 = vst.msk [vmem:[%s872 + $0x24] sm:$0xf] %vm662, %v843
        %883 = vst.msk [vmem:[%s872 + $0x28] sm:$0xf] %vm662, %v845
        %884 = vst.msk [vmem:[%s872 + $0x2c] sm:$0xf] %vm662, %v847
        %885 = vst.msk [vmem:[%s872 + $0x30] sm:$0xf] %vm662, %v849
        %886 = vst.msk [vmem:[%s872 + $0x34] sm:$0xf] %vm662, %v851
        %887 = vst.msk [vmem:[%s872 + $0x38] sm:$0xf] %vm662, %v853
        %888 = vst.msk [vmem:[%s872 + $0x3c] sm:$0xf] %vm662, %v855
        %889 = vrot.lane.b32.xlu0 %v630, 64
        %v890 = vpop.permute.xlu0 %889
        %891 = vrot.lane.b32.xlu0 %v631, 64
        %v892 = vpop.permute.xlu0 %891
        %893 = vrot.lane.b32.xlu0 %v632, 64
        %v894 = vpop.permute.xlu0 %893
        %895 = vrot.lane.b32.xlu0 %v633, 64
        %v896 = vpop.permute.xlu0 %895
        %897 = vrot.lane.b32.xlu0 %v634, 64
        %v898 = vpop.permute.xlu0 %897
        %899 = vrot.lane.b32.xlu0 %v635, 64
        %v900 = vpop.permute.xlu0 %899
        %901 = vrot.lane.b32.xlu0 %v636, 64
        %v902 = vpop.permute.xlu0 %901
        %903 = vrot.lane.b32.xlu0 %v637, 64
        %v904 = vpop.permute.xlu0 %903
        %905 = vrot.lane.b32.xlu0 %v638, 64
        %v906 = vpop.permute.xlu0 %905
        %907 = vrot.lane.b32.xlu0 %v639, 64
        %v908 = vpop.permute.xlu0 %907
        %909 = vrot.lane.b32.xlu0 %v640, 64
        %v910 = vpop.permute.xlu0 %909
        %911 = vrot.lane.b32.xlu0 %v641, 64
        %v912 = vpop.permute.xlu0 %911
        %913 = vrot.lane.b32.xlu0 %v642, 64
        %v914 = vpop.permute.xlu0 %913
        %915 = vrot.lane.b32.xlu0 %v643, 64
        %v916 = vpop.permute.xlu0 %915
        %917 = vrot.lane.b32.xlu0 %v644, 64
        %v918 = vpop.permute.xlu0 %917
        %919 = vrot.lane.b32.xlu0 %v645, 64
        %v920 = vpop.permute.xlu0 %919
        %s937 = scalar_lea.vmem %s241, 128 [#allocation7]
        %938 = vst.msk [vmem:[%s937] sm:$0xf] %vm662, %v890
        %939 = vst.msk [vmem:[%s937 + $0x4] sm:$0xf] %vm662, %v892
        %940 = vst.msk [vmem:[%s937 + $0x8] sm:$0xf] %vm662, %v894
        %941 = vst.msk [vmem:[%s937 + $0xc] sm:$0xf] %vm662, %v896
        %942 = vst.msk [vmem:[%s937 + $0x10] sm:$0xf] %vm662, %v898
        %943 = vst.msk [vmem:[%s937 + $0x14] sm:$0xf] %vm662, %v900
        %944 = vst.msk [vmem:[%s937 + $0x18] sm:$0xf] %vm662, %v902
        %945 = vst.msk [vmem:[%s937 + $0x1c] sm:$0xf] %vm662, %v904
        %946 = vst.msk [vmem:[%s937 + $0x20] sm:$0xf] %vm662, %v906
        %947 = vst.msk [vmem:[%s937 + $0x24] sm:$0xf] %vm662, %v908
        %948 = vst.msk [vmem:[%s937 + $0x28] sm:$0xf] %vm662, %v910
        %949 = vst.msk [vmem:[%s937 + $0x2c] sm:$0xf] %vm662, %v912
        %950 = vst.msk [vmem:[%s937 + $0x30] sm:$0xf] %vm662, %v914
        %951 = vst.msk [vmem:[%s937 + $0x34] sm:$0xf] %vm662, %v916
        %952 = vst.msk [vmem:[%s937 + $0x38] sm:$0xf] %vm662, %v918
        %953 = vst.msk [vmem:[%s937 + $0x3c] sm:$0xf] %vm662, %v920
        %954 = vrot.lane.b32.xlu0 %v711, 64
        %v955 = vpop.permute.xlu0 %954
        %956 = vrot.lane.b32.xlu0 %v712, 64
        %v957 = vpop.permute.xlu0 %956
        %958 = vrot.lane.b32.xlu0 %v713, 64
        %v959 = vpop.permute.xlu0 %958
        %960 = vrot.lane.b32.xlu0 %v714, 64
        %v961 = vpop.permute.xlu0 %960
        %962 = vrot.lane.b32.xlu0 %v715, 64
        %v963 = vpop.permute.xlu0 %962
        %964 = vrot.lane.b32.xlu0 %v716, 64
        %v965 = vpop.permute.xlu0 %964
        %966 = vrot.lane.b32.xlu0 %v717, 64
        %v967 = vpop.permute.xlu0 %966
        %968 = vrot.lane.b32.xlu0 %v718, 64
        %v969 = vpop.permute.xlu0 %968
        %970 = vrot.lane.b32.xlu0 %v719, 64
        %v971 = vpop.permute.xlu0 %970
        %972 = vrot.lane.b32.xlu0 %v720, 64
        %v973 = vpop.permute.xlu0 %972
        %974 = vrot.lane.b32.xlu0 %v721, 64
        %v975 = vpop.permute.xlu0 %974
        %976 = vrot.lane.b32.xlu0 %v722, 64
        %v977 = vpop.permute.xlu0 %976
        %978 = vrot.lane.b32.xlu0 %v723, 64
        %v979 = vpop.permute.xlu0 %978
        %980 = vrot.lane.b32.xlu0 %v724, 64
        %v981 = vpop.permute.xlu0 %980
        %982 = vrot.lane.b32.xlu0 %v725, 64
        %v983 = vpop.permute.xlu0 %982
        %984 = vrot.lane.b32.xlu0 %v726, 64
        %v985 = vpop.permute.xlu0 %984
        %s1002 = scalar_lea.vmem %s247, 128 [#allocation8]
        %1003 = vst.msk [vmem:[%s1002] sm:$0xf] %vm662, %v955
        %1004 = vst.msk [vmem:[%s1002 + $0x4] sm:$0xf] %vm662, %v957
        %1005 = vst.msk [vmem:[%s1002 + $0x8] sm:$0xf] %vm662, %v959
        %1006 = vst.msk [vmem:[%s1002 + $0xc] sm:$0xf] %vm662, %v961
        %1007 = vst.msk [vmem:[%s1002 + $0x10] sm:$0xf] %vm662, %v963
        %1008 = vst.msk [vmem:[%s1002 + $0x14] sm:$0xf] %vm662, %v965
        %1009 = vst.msk [vmem:[%s1002 + $0x18] sm:$0xf] %vm662, %v967
        %1010 = vst.msk [vmem:[%s1002 + $0x1c] sm:$0xf] %vm662, %v969
        %1011 = vst.msk [vmem:[%s1002 + $0x20] sm:$0xf] %vm662, %v971
        %1012 = vst.msk [vmem:[%s1002 + $0x24] sm:$0xf] %vm662, %v973
        %1013 = vst.msk [vmem:[%s1002 + $0x28] sm:$0xf] %vm662, %v975
        %1014 = vst.msk [vmem:[%s1002 + $0x2c] sm:$0xf] %vm662, %v977
        %1015 = vst.msk [vmem:[%s1002 + $0x30] sm:$0xf] %vm662, %v979
        %1016 = vst.msk [vmem:[%s1002 + $0x34] sm:$0xf] %vm662, %v981
        %1017 = vst.msk [vmem:[%s1002 + $0x38] sm:$0xf] %vm662, %v983
        %1018 = vst.msk [vmem:[%s1002 + $0x3c] sm:$0xf] %vm662, %v985
        %1019 = vrot.lane.b32.xlu0 %v630, 32
        %v1020 = vpop.permute.xlu0 %1019
        %1021 = vrot.lane.b32.xlu0 %v631, 32
        %v1022 = vpop.permute.xlu0 %1021
        %1023 = vrot.lane.b32.xlu0 %v632, 32
        %v1024 = vpop.permute.xlu0 %1023
        %1025 = vrot.lane.b32.xlu0 %v633, 32
        %v1026 = vpop.permute.xlu0 %1025
        %1027 = vrot.lane.b32.xlu0 %v634, 32
        %v1028 = vpop.permute.xlu0 %1027
        %1029 = vrot.lane.b32.xlu0 %v635, 32
        %v1030 = vpop.permute.xlu0 %1029
        %1031 = vrot.lane.b32.xlu0 %v636, 32
        %v1032 = vpop.permute.xlu0 %1031
        %1033 = vrot.lane.b32.xlu0 %v637, 32
        %v1034 = vpop.permute.xlu0 %1033
        %1035 = vrot.lane.b32.xlu0 %v638, 32
        %v1036 = vpop.permute.xlu0 %1035
        %1037 = vrot.lane.b32.xlu0 %v639, 32
        %v1038 = vpop.permute.xlu0 %1037
        %1039 = vrot.lane.b32.xlu0 %v640, 32
        %v1040 = vpop.permute.xlu0 %1039
        %1041 = vrot.lane.b32.xlu0 %v641, 32
        %v1042 = vpop.permute.xlu0 %1041
        %1043 = vrot.lane.b32.xlu0 %v642, 32
        %v1044 = vpop.permute.xlu0 %1043
        %1045 = vrot.lane.b32.xlu0 %v643, 32
        %v1046 = vpop.permute.xlu0 %1045
        %1047 = vrot.lane.b32.xlu0 %v644, 32
        %v1048 = vpop.permute.xlu0 %1047
        %1049 = vrot.lane.b32.xlu0 %v645, 32
        %v1050 = vpop.permute.xlu0 %1049
        %s1067 = scalar_lea.vmem %s241, 192 [#allocation7]
        %1068 = vst.msk [vmem:[%s1067] sm:$0xf] %vm662, %v1020
        %1069 = vst.msk [vmem:[%s1067 + $0x4] sm:$0xf] %vm662, %v1022
        %1070 = vst.msk [vmem:[%s1067 + $0x8] sm:$0xf] %vm662, %v1024
        %1071 = vst.msk [vmem:[%s1067 + $0xc] sm:$0xf] %vm662, %v1026
        %1072 = vst.msk [vmem:[%s1067 + $0x10] sm:$0xf] %vm662, %v1028
        %1073 = vst.msk [vmem:[%s1067 + $0x14] sm:$0xf] %vm662, %v1030
        %1074 = vst.msk [vmem:[%s1067 + $0x18] sm:$0xf] %vm662, %v1032
        %1075 = vst.msk [vmem:[%s1067 + $0x1c] sm:$0xf] %vm662, %v1034
        %1076 = vst.msk [vmem:[%s1067 + $0x20] sm:$0xf] %vm662, %v1036
        %1077 = vst.msk [vmem:[%s1067 + $0x24] sm:$0xf] %vm662, %v1038
        %1078 = vst.msk [vmem:[%s1067 + $0x28] sm:$0xf] %vm662, %v1040
        %1079 = vst.msk [vmem:[%s1067 + $0x2c] sm:$0xf] %vm662, %v1042
        %1080 = vst.msk [vmem:[%s1067 + $0x30] sm:$0xf] %vm662, %v1044
        %1081 = vst.msk [vmem:[%s1067 + $0x34] sm:$0xf] %vm662, %v1046
        %1082 = vst.msk [vmem:[%s1067 + $0x38] sm:$0xf] %vm662, %v1048
        %1083 = vst.msk [vmem:[%s1067 + $0x3c] sm:$0xf] %vm662, %v1050
        %1084 = vrot.lane.b32.xlu0 %v711, 32
        %v1085 = vpop.permute.xlu0 %1084
        %1086 = vrot.lane.b32.xlu0 %v712, 32
        %v1087 = vpop.permute.xlu0 %1086
        %1088 = vrot.lane.b32.xlu0 %v713, 32
        %v1089 = vpop.permute.xlu0 %1088
        %1090 = vrot.lane.b32.xlu0 %v714, 32
        %v1091 = vpop.permute.xlu0 %1090
        %1092 = vrot.lane.b32.xlu0 %v715, 32
        %v1093 = vpop.permute.xlu0 %1092
        %1094 = vrot.lane.b32.xlu0 %v716, 32
        %v1095 = vpop.permute.xlu0 %1094
        %1096 = vrot.lane.b32.xlu0 %v717, 32
        %v1097 = vpop.permute.xlu0 %1096
        %1098 = vrot.lane.b32.xlu0 %v718, 32
        %v1099 = vpop.permute.xlu0 %1098
        %1100 = vrot.lane.b32.xlu0 %v719, 32
        %v1101 = vpop.permute.xlu0 %1100
        %1102 = vrot.lane.b32.xlu0 %v720, 32
        %v1103 = vpop.permute.xlu0 %1102
        %1104 = vrot.lane.b32.xlu0 %v721, 32
        %v1105 = vpop.permute.xlu0 %1104
        %1106 = vrot.lane.b32.xlu0 %v722, 32
        %v1107 = vpop.permute.xlu0 %1106
        %1108 = vrot.lane.b32.xlu0 %v723, 32
        %v1109 = vpop.permute.xlu0 %1108
        %1110 = vrot.lane.b32.xlu0 %v724, 32
        %v1111 = vpop.permute.xlu0 %1110
        %1112 = vrot.lane.b32.xlu0 %v725, 32
        %v1113 = vpop.permute.xlu0 %1112
        %1114 = vrot.lane.b32.xlu0 %v726, 32
        %v1115 = vpop.permute.xlu0 %1114
        %s1132 = scalar_lea.vmem %s247, 192 [#allocation8]
        %1133 = vst.msk [vmem:[%s1132] sm:$0xf] %vm662, %v1085
        %1134 = vst.msk [vmem:[%s1132 + $0x4] sm:$0xf] %vm662, %v1087
        %1135 = vst.msk [vmem:[%s1132 + $0x8] sm:$0xf] %vm662, %v1089
        %1136 = vst.msk [vmem:[%s1132 + $0xc] sm:$0xf] %vm662, %v1091
        %1137 = vst.msk [vmem:[%s1132 + $0x10] sm:$0xf] %vm662, %v1093
        %1138 = vst.msk [vmem:[%s1132 + $0x14] sm:$0xf] %vm662, %v1095
        %1139 = vst.msk [vmem:[%s1132 + $0x18] sm:$0xf] %vm662, %v1097
        %1140 = vst.msk [vmem:[%s1132 + $0x1c] sm:$0xf] %vm662, %v1099
        %1141 = vst.msk [vmem:[%s1132 + $0x20] sm:$0xf] %vm662, %v1101
        %1142 = vst.msk [vmem:[%s1132 + $0x24] sm:$0xf] %vm662, %v1103
        %1143 = vst.msk [vmem:[%s1132 + $0x28] sm:$0xf] %vm662, %v1105
        %1144 = vst.msk [vmem:[%s1132 + $0x2c] sm:$0xf] %vm662, %v1107
        %1145 = vst.msk [vmem:[%s1132 + $0x30] sm:$0xf] %vm662, %v1109
        %1146 = vst.msk [vmem:[%s1132 + $0x34] sm:$0xf] %vm662, %v1111
        %1147 = vst.msk [vmem:[%s1132 + $0x38] sm:$0xf] %vm662, %v1113
        %1148 = vst.msk [vmem:[%s1132 + $0x3c] sm:$0xf] %vm662, %v1115
        %s1149 = sand.u32 %s96, 1
        %s1150 = sand.u32 %s96, 1
        %s1151 = smul.addr %s1150, 256
        %s1152 = scalar_lea.vmem [#allocation7], %s1151
        %s1153 = sand.u32 %s122, 1
        %s1154 = sand.u32 %s122, 1
        %s1155 = smul.addr %s1154, 256
        %s1156 = scalar_lea.vmem [#allocation8], %s1155
        // Predicated region
        $region45: #{tpu_custom_call.1} parent=31 // pred_check
          %p1157 = pneg %p106
        $region46: #{tpu_custom_call.1} parent=31 // pred_check_branch
          %1159 = sbr.rel (%p1157) target = $region48
        $region47: #{tpu_custom_call.1} parent=31 // pred_region
          %s1160 = smul.u32 16, %s20
          %s1161 = smul.addr %s1160, 4
          %s1162 = scalar_lea.vmem %s3, %s1161
          // Predicated region
          $region49: #{tpu_custom_call.1} parent=47 // pred_check
            _
          $region50: #{tpu_custom_call.1} parent=47 // pred_check_branch
            %1164 = sbr.rel (0) target = $region52
          $region51: #{tpu_custom_call.1} parent=47 // pred_region
            // Predicated region
            $region53: #{tpu_custom_call.1} parent=51 // pred_check
              _
            $region54: #{tpu_custom_call.1} parent=51 // pred_check_branch
              %1166 = sbr.rel target = $region56
            $region55: #{tpu_custom_call.1} parent=51 // pred_region
              // Predicated region
              $region68: #{tpu_custom_call.1} parent=55 // pred_check
                _
              $region69: #{tpu_custom_call.1} parent=55 // pred_check_branch
                %1307 = sbr.rel (0) target = $region71
              $region70: #{tpu_custom_call.1} parent=55 // pred_region
                loop: start=0, step=1, limit=1
                $region72: #{tpu_custom_call.1} parent=70 // loop_pre_header
                  _
                $region73: #{tpu_custom_call.1} parent=70 // loop_header
                  %s1309 = sphi 0, %s1313
                  %p1310 = scmp.ge.s32.totalorder %s1309, 1
                  %s1314 = sphi %s1152, %s1152
                  %s1315 = sphi %s1162, %s1162
                $region74: #{tpu_custom_call.1} parent=70 // loop_header_branch
                  %1312 = sbr.rel (%p1310) target = $region78
                $region75: #{tpu_custom_call.1} parent=70 // loop_body
                  _
                $region76: #{tpu_custom_call.1} parent=70 // loop_footer
                  %s1313 = sadd.s32 1, %s1309
                $region77: #{tpu_custom_call.1} parent=70 // loop_footer_branch
                  %1308 = sbr.rel target = $region73
                $region78: #{tpu_custom_call.1} parent=70 // loop_exit
                  _
                loop: start=0, step=1, limit=1
                $region79: #{tpu_custom_call.1} parent=70 // loop_pre_header
                  _
                $region80: #{tpu_custom_call.1} parent=70 // loop_header
                  %s1318 = sphi 0, %s1322
                  %p1319 = scmp.ge.s32.totalorder %s1318, 1
                  %s1323 = sphi %s1152, %s1152
                  %s1324 = sphi %s1162, %s1162
                $region81: #{tpu_custom_call.1} parent=70 // loop_header_branch
                  %1321 = sbr.rel (%p1319) target = $region85
                $region82: #{tpu_custom_call.1} parent=70 // loop_body
                  %v1325 = vld [vmem:[%s1323] sm:$0xf]
                  %1326 = vst [vmem:[%s1324] sm:$0xf] %v1325
                  %v1327 = vld [vmem:[%s1323 + $0x4] sm:$0xf]
                  %1328 = vst [vmem:[%s1324 + $0x4] sm:$0xf] %v1327
                  %v1329 = vld [vmem:[%s1323 + $0x8] sm:$0xf]
                  %1330 = vst [vmem:[%s1324 + $0x8] sm:$0xf] %v1329
                  %v1331 = vld [vmem:[%s1323 + $0xc] sm:$0xf]
                  %1332 = vst [vmem:[%s1324 + $0xc] sm:$0xf] %v1331
                  %v1333 = vld [vmem:[%s1323 + $0x10] sm:$0xf]
                  %1334 = vst [vmem:[%s1324 + $0x10] sm:$0xf] %v1333
                  %v1335 = vld [vmem:[%s1323 + $0x14] sm:$0xf]
                  %1336 = vst [vmem:[%s1324 + $0x14] sm:$0xf] %v1335
                  %v1337 = vld [vmem:[%s1323 + $0x18] sm:$0xf]
                  %1338 = vst [vmem:[%s1324 + $0x18] sm:$0xf] %v1337
                  %v1339 = vld [vmem:[%s1323 + $0x1c] sm:$0xf]
                  %1340 = vst [vmem:[%s1324 + $0x1c] sm:$0xf] %v1339
                  %v1341 = vld [vmem:[%s1323 + $0x20] sm:$0xf]
                  %1342 = vst [vmem:[%s1324 + $0x20] sm:$0xf] %v1341
                  %v1343 = vld [vmem:[%s1323 + $0x24] sm:$0xf]
                  %1344 = vst [vmem:[%s1324 + $0x24] sm:$0xf] %v1343
                  %v1345 = vld [vmem:[%s1323 + $0x28] sm:$0xf]
                  %1346 = vst [vmem:[%s1324 + $0x28] sm:$0xf] %v1345
                  %v1347 = vld [vmem:[%s1323 + $0x2c] sm:$0xf]
                  %1348 = vst [vmem:[%s1324 + $0x2c] sm:$0xf] %v1347
                  %v1349 = vld [vmem:[%s1323 + $0x30] sm:$0xf]
                  %1350 = vst [vmem:[%s1324 + $0x30] sm:$0xf] %v1349
                  %v1351 = vld [vmem:[%s1323 + $0x34] sm:$0xf]
                  %1352 = vst [vmem:[%s1324 + $0x34] sm:$0xf] %v1351
                  %v1353 = vld [vmem:[%s1323 + $0x38] sm:$0xf]
                  %1354 = vst [vmem:[%s1324 + $0x38] sm:$0xf] %v1353
                  %v1355 = vld [vmem:[%s1323 + $0x3c] sm:$0xf]
                  %1356 = vst [vmem:[%s1324 + $0x3c] sm:$0xf] %v1355
                  %v1357 = vld [vmem:[%s1323 + $0x40] sm:$0xf]
                  %1358 = vst [vmem:[%s1324 + $0x80] sm:$0xf] %v1357
                  %v1359 = vld [vmem:[%s1323 + $0x44] sm:$0xf]
                  %1360 = vst [vmem:[%s1324 + $0x84] sm:$0xf] %v1359
                  %v1361 = vld [vmem:[%s1323 + $0x48] sm:$0xf]
                  %1362 = vst [vmem:[%s1324 + $0x88] sm:$0xf] %v1361
                  %v1363 = vld [vmem:[%s1323 + $0x4c] sm:$0xf]
                  %1364 = vst [vmem:[%s1324 + $0x8c] sm:$0xf] %v1363
                  %v1365 = vld [vmem:[%s1323 + $0x50] sm:$0xf]
                  %1366 = vst [vmem:[%s1324 + $0x90] sm:$0xf] %v1365
                  %v1367 = vld [vmem:[%s1323 + $0x54] sm:$0xf]
                  %1368 = vst [vmem:[%s1324 + $0x94] sm:$0xf] %v1367
                  %v1369 = vld [vmem:[%s1323 + $0x58] sm:$0xf]
                  %1370 = vst [vmem:[%s1324 + $0x98] sm:$0xf] %v1369
                  %v1371 = vld [vmem:[%s1323 + $0x5c] sm:$0xf]
                  %1372 = vst [vmem:[%s1324 + $0x9c] sm:$0xf] %v1371
                  %v1373 = vld [vmem:[%s1323 + $0x60] sm:$0xf]
                  %1374 = vst [vmem:[%s1324 + $0xa0] sm:$0xf] %v1373
                  %v1375 = vld [vmem:[%s1323 + $0x64] sm:$0xf]
                  %1376 = vst [vmem:[%s1324 + $0xa4] sm:$0xf] %v1375
                  %v1377 = vld [vmem:[%s1323 + $0x68] sm:$0xf]
                  %1378 = vst [vmem:[%s1324 + $0xa8] sm:$0xf] %v1377
                  %v1379 = vld [vmem:[%s1323 + $0x6c] sm:$0xf]
                  %1380 = vst [vmem:[%s1324 + $0xac] sm:$0xf] %v1379
                  %v1381 = vld [vmem:[%s1323 + $0x70] sm:$0xf]
                  %1382 = vst [vmem:[%s1324 + $0xb0] sm:$0xf] %v1381
                  %v1383 = vld [vmem:[%s1323 + $0x74] sm:$0xf]
                  %1384 = vst [vmem:[%s1324 + $0xb4] sm:$0xf] %v1383
                  %v1385 = vld [vmem:[%s1323 + $0x78] sm:$0xf]
                  %1386 = vst [vmem:[%s1324 + $0xb8] sm:$0xf] %v1385
                  %v1387 = vld [vmem:[%s1323 + $0x7c] sm:$0xf]
                  %1388 = vst [vmem:[%s1324 + $0xbc] sm:$0xf] %v1387
                  %v1389 = vld [vmem:[%s1323 + $0x80] sm:$0xf]
                  %1390 = vst [vmem:[%s1324 + $0x100] sm:$0xf] %v1389
                  %v1391 = vld [vmem:[%s1323 + $0x84] sm:$0xf]
                  %1392 = vst [vmem:[%s1324 + $0x104] sm:$0xf] %v1391
                  %v1393 = vld [vmem:[%s1323 + $0x88] sm:$0xf]
                  %1394 = vst [vmem:[%s1324 + $0x108] sm:$0xf] %v1393
                  %v1395 = vld [vmem:[%s1323 + $0x8c] sm:$0xf]
                  %1396 = vst [vmem:[%s1324 + $0x10c] sm:$0xf] %v1395
                  %v1397 = vld [vmem:[%s1323 + $0x90] sm:$0xf]
                  %1398 = vst [vmem:[%s1324 + $0x110] sm:$0xf] %v1397
                  %v1399 = vld [vmem:[%s1323 + $0x94] sm:$0xf]
                  %1400 = vst [vmem:[%s1324 + $0x114] sm:$0xf] %v1399
                  %v1401 = vld [vmem:[%s1323 + $0x98] sm:$0xf]
                  %1402 = vst [vmem:[%s1324 + $0x118] sm:$0xf] %v1401
                  %v1403 = vld [vmem:[%s1323 + $0x9c] sm:$0xf]
                  %1404 = vst [vmem:[%s1324 + $0x11c] sm:$0xf] %v1403
                  %v1405 = vld [vmem:[%s1323 + $0xa0] sm:$0xf]
                  %1406 = vst [vmem:[%s1324 + $0x120] sm:$0xf] %v1405
                  %v1407 = vld [vmem:[%s1323 + $0xa4] sm:$0xf]
                  %1408 = vst [vmem:[%s1324 + $0x124] sm:$0xf] %v1407
                  %v1409 = vld [vmem:[%s1323 + $0xa8] sm:$0xf]
                  %1410 = vst [vmem:[%s1324 + $0x128] sm:$0xf] %v1409
                  %v1411 = vld [vmem:[%s1323 + $0xac] sm:$0xf]
                  %1412 = vst [vmem:[%s1324 + $0x12c] sm:$0xf] %v1411
                  %v1413 = vld [vmem:[%s1323 + $0xb0] sm:$0xf]
                  %1414 = vst [vmem:[%s1324 + $0x130] sm:$0xf] %v1413
                  %v1415 = vld [vmem:[%s1323 + $0xb4] sm:$0xf]
                  %1416 = vst [vmem:[%s1324 + $0x134] sm:$0xf] %v1415
                  %v1417 = vld [vmem:[%s1323 + $0xb8] sm:$0xf]
                  %1418 = vst [vmem:[%s1324 + $0x138] sm:$0xf] %v1417
                  %v1419 = vld [vmem:[%s1323 + $0xbc] sm:$0xf]
                  %1420 = vst [vmem:[%s1324 + $0x13c] sm:$0xf] %v1419
                  %v1421 = vld [vmem:[%s1323 + $0xc0] sm:$0xf]
                  %1422 = vst [vmem:[%s1324 + $0x180] sm:$0xf] %v1421
                  %v1423 = vld [vmem:[%s1323 + $0xc4] sm:$0xf]
                  %1424 = vst [vmem:[%s1324 + $0x184] sm:$0xf] %v1423
                  %v1425 = vld [vmem:[%s1323 + $0xc8] sm:$0xf]
                  %1426 = vst [vmem:[%s1324 + $0x188] sm:$0xf] %v1425
                  %v1427 = vld [vmem:[%s1323 + $0xcc] sm:$0xf]
                  %1428 = vst [vmem:[%s1324 + $0x18c] sm:$0xf] %v1427
                  %v1429 = vld [vmem:[%s1323 + $0xd0] sm:$0xf]
                  %1430 = vst [vmem:[%s1324 + $0x190] sm:$0xf] %v1429
                  %v1431 = vld [vmem:[%s1323 + $0xd4] sm:$0xf]
                  %1432 = vst [vmem:[%s1324 + $0x194] sm:$0xf] %v1431
                  %v1433 = vld [vmem:[%s1323 + $0xd8] sm:$0xf]
                  %1434 = vst [vmem:[%s1324 + $0x198] sm:$0xf] %v1433
                  %v1435 = vld [vmem:[%s1323 + $0xdc] sm:$0xf]
                  %1436 = vst [vmem:[%s1324 + $0x19c] sm:$0xf] %v1435
                  %v1437 = vld [vmem:[%s1323 + $0xe0] sm:$0xf]
                  %1438 = vst [vmem:[%s1324 + $0x1a0] sm:$0xf] %v1437
                  %v1439 = vld [vmem:[%s1323 + $0xe4] sm:$0xf]
                  %1440 = vst [vmem:[%s1324 + $0x1a4] sm:$0xf] %v1439
                  %v1441 = vld [vmem:[%s1323 + $0xe8] sm:$0xf]
                  %1442 = vst [vmem:[%s1324 + $0x1a8] sm:$0xf] %v1441
                  %v1443 = vld [vmem:[%s1323 + $0xec] sm:$0xf]
                  %1444 = vst [vmem:[%s1324 + $0x1ac] sm:$0xf] %v1443
                  %v1445 = vld [vmem:[%s1323 + $0xf0] sm:$0xf]
                  %1446 = vst [vmem:[%s1324 + $0x1b0] sm:$0xf] %v1445
                  %v1447 = vld [vmem:[%s1323 + $0xf4] sm:$0xf]
                  %1448 = vst [vmem:[%s1324 + $0x1b4] sm:$0xf] %v1447
                  %v1449 = vld [vmem:[%s1323 + $0xf8] sm:$0xf]
                  %1450 = vst [vmem:[%s1324 + $0x1b8] sm:$0xf] %v1449
                  %v1451 = vld [vmem:[%s1323 + $0xfc] sm:$0xf]
                  %1452 = vst [vmem:[%s1324 + $0x1bc] sm:$0xf] %v1451
                $region83: #{tpu_custom_call.1} parent=70 // loop_footer
                  %s1322 = sadd.s32 1, %s1318
                $region84: #{tpu_custom_call.1} parent=70 // loop_footer_branch
                  %1317 = sbr.rel target = $region80
                $region85: #{tpu_custom_call.1} parent=70 // loop_exit
                  _
              $region71: #{tpu_custom_call.1} parent=55 // pred_fallthru
                _
            $region56: #{tpu_custom_call.1} parent=51 // pred_fallthru
              _
            // Predicated region
            $region57: #{tpu_custom_call.1} parent=51 // pred_check
              _
            $region58: #{tpu_custom_call.1} parent=51 // pred_check_branch
              %1168 = sbr.rel (0) target = $region60
            $region59: #{tpu_custom_call.1} parent=51 // pred_region
              loop: start=0, step=1, limit=1
              $region61: #{tpu_custom_call.1} parent=59 // loop_pre_header
                _
              $region62: #{tpu_custom_call.1} parent=59 // loop_header
                %s1171 = sphi 0, %s1175
                %p1172 = scmp.ge.s32.totalorder %s1171, 1
                %s1176 = sphi %s1152, %s1152
                %s1177 = sphi %s1162, %s1162
              $region63: #{tpu_custom_call.1} parent=59 // loop_header_branch
                %1174 = sbr.rel (%p1172) target = $region67
              $region64: #{tpu_custom_call.1} parent=59 // loop_body
                %v1178 = vld [vmem:[%s1176] sm:$0xf]
                %1179 = vst [vmem:[%s1177] sm:$0xf] %v1178
                %v1180 = vld [vmem:[%s1176 + $0x4] sm:$0xf]
                %1181 = vst [vmem:[%s1177 + $0x4] sm:$0xf] %v1180
                %v1182 = vld [vmem:[%s1176 + $0x8] sm:$0xf]
                %1183 = vst [vmem:[%s1177 + $0x8] sm:$0xf] %v1182
                %v1184 = vld [vmem:[%s1176 + $0xc] sm:$0xf]
                %1185 = vst [vmem:[%s1177 + $0xc] sm:$0xf] %v1184
                %v1186 = vld [vmem:[%s1176 + $0x10] sm:$0xf]
                %1187 = vst [vmem:[%s1177 + $0x10] sm:$0xf] %v1186
                %v1188 = vld [vmem:[%s1176 + $0x14] sm:$0xf]
                %1189 = vst [vmem:[%s1177 + $0x14] sm:$0xf] %v1188
                %v1190 = vld [vmem:[%s1176 + $0x18] sm:$0xf]
                %1191 = vst [vmem:[%s1177 + $0x18] sm:$0xf] %v1190
                %v1192 = vld [vmem:[%s1176 + $0x1c] sm:$0xf]
                %1193 = vst [vmem:[%s1177 + $0x1c] sm:$0xf] %v1192
                %v1194 = vld [vmem:[%s1176 + $0x20] sm:$0xf]
                %1195 = vst [vmem:[%s1177 + $0x20] sm:$0xf] %v1194
                %v1196 = vld [vmem:[%s1176 + $0x24] sm:$0xf]
                %1197 = vst [vmem:[%s1177 + $0x24] sm:$0xf] %v1196
                %v1198 = vld [vmem:[%s1176 + $0x28] sm:$0xf]
                %1199 = vst [vmem:[%s1177 + $0x28] sm:$0xf] %v1198
                %v1200 = vld [vmem:[%s1176 + $0x2c] sm:$0xf]
                %1201 = vst [vmem:[%s1177 + $0x2c] sm:$0xf] %v1200
                %v1202 = vld [vmem:[%s1176 + $0x30] sm:$0xf]
                %1203 = vst [vmem:[%s1177 + $0x30] sm:$0xf] %v1202
                %v1204 = vld [vmem:[%s1176 + $0x34] sm:$0xf]
                %1205 = vst [vmem:[%s1177 + $0x34] sm:$0xf] %v1204
                %v1206 = vld [vmem:[%s1176 + $0x38] sm:$0xf]
                %1207 = vst [vmem:[%s1177 + $0x38] sm:$0xf] %v1206
                %v1208 = vld [vmem:[%s1176 + $0x3c] sm:$0xf]
                %1209 = vst [vmem:[%s1177 + $0x3c] sm:$0xf] %v1208
                %v1210 = vld [vmem:[%s1176 + $0x40] sm:$0xf]
                %1211 = vst [vmem:[%s1177 + $0x80] sm:$0xf] %v1210
                %v1212 = vld [vmem:[%s1176 + $0x44] sm:$0xf]
                %1213 = vst [vmem:[%s1177 + $0x84] sm:$0xf] %v1212
                %v1214 = vld [vmem:[%s1176 + $0x48] sm:$0xf]
                %1215 = vst [vmem:[%s1177 + $0x88] sm:$0xf] %v1214
                %v1216 = vld [vmem:[%s1176 + $0x4c] sm:$0xf]
                %1217 = vst [vmem:[%s1177 + $0x8c] sm:$0xf] %v1216
                %v1218 = vld [vmem:[%s1176 + $0x50] sm:$0xf]
                %1219 = vst [vmem:[%s1177 + $0x90] sm:$0xf] %v1218
                %v1220 = vld [vmem:[%s1176 + $0x54] sm:$0xf]
                %1221 = vst [vmem:[%s1177 + $0x94] sm:$0xf] %v1220
                %v1222 = vld [vmem:[%s1176 + $0x58] sm:$0xf]
                %1223 = vst [vmem:[%s1177 + $0x98] sm:$0xf] %v1222
                %v1224 = vld [vmem:[%s1176 + $0x5c] sm:$0xf]
                %1225 = vst [vmem:[%s1177 + $0x9c] sm:$0xf] %v1224
                %v1226 = vld [vmem:[%s1176 + $0x60] sm:$0xf]
                %1227 = vst [vmem:[%s1177 + $0xa0] sm:$0xf] %v1226
                %v1228 = vld [vmem:[%s1176 + $0x64] sm:$0xf]
                %1229 = vst [vmem:[%s1177 + $0xa4] sm:$0xf] %v1228
                %v1230 = vld [vmem:[%s1176 + $0x68] sm:$0xf]
                %1231 = vst [vmem:[%s1177 + $0xa8] sm:$0xf] %v1230
                %v1232 = vld [vmem:[%s1176 + $0x6c] sm:$0xf]
                %1233 = vst [vmem:[%s1177 + $0xac] sm:$0xf] %v1232
                %v1234 = vld [vmem:[%s1176 + $0x70] sm:$0xf]
                %1235 = vst [vmem:[%s1177 + $0xb0] sm:$0xf] %v1234
                %v1236 = vld [vmem:[%s1176 + $0x74] sm:$0xf]
                %1237 = vst [vmem:[%s1177 + $0xb4] sm:$0xf] %v1236
                %v1238 = vld [vmem:[%s1176 + $0x78] sm:$0xf]
                %1239 = vst [vmem:[%s1177 + $0xb8] sm:$0xf] %v1238
                %v1240 = vld [vmem:[%s1176 + $0x7c] sm:$0xf]
                %1241 = vst [vmem:[%s1177 + $0xbc] sm:$0xf] %v1240
                %v1242 = vld [vmem:[%s1176 + $0x80] sm:$0xf]
                %1243 = vst [vmem:[%s1177 + $0x100] sm:$0xf] %v1242
                %v1244 = vld [vmem:[%s1176 + $0x84] sm:$0xf]
                %1245 = vst [vmem:[%s1177 + $0x104] sm:$0xf] %v1244
                %v1246 = vld [vmem:[%s1176 + $0x88] sm:$0xf]
                %1247 = vst [vmem:[%s1177 + $0x108] sm:$0xf] %v1246
                %v1248 = vld [vmem:[%s1176 + $0x8c] sm:$0xf]
                %1249 = vst [vmem:[%s1177 + $0x10c] sm:$0xf] %v1248
                %v1250 = vld [vmem:[%s1176 + $0x90] sm:$0xf]
                %1251 = vst [vmem:[%s1177 + $0x110] sm:$0xf] %v1250
                %v1252 = vld [vmem:[%s1176 + $0x94] sm:$0xf]
                %1253 = vst [vmem:[%s1177 + $0x114] sm:$0xf] %v1252
                %v1254 = vld [vmem:[%s1176 + $0x98] sm:$0xf]
                %1255 = vst [vmem:[%s1177 + $0x118] sm:$0xf] %v1254
                %v1256 = vld [vmem:[%s1176 + $0x9c] sm:$0xf]
                %1257 = vst [vmem:[%s1177 + $0x11c] sm:$0xf] %v1256
                %v1258 = vld [vmem:[%s1176 + $0xa0] sm:$0xf]
                %1259 = vst [vmem:[%s1177 + $0x120] sm:$0xf] %v1258
                %v1260 = vld [vmem:[%s1176 + $0xa4] sm:$0xf]
                %1261 = vst [vmem:[%s1177 + $0x124] sm:$0xf] %v1260
                %v1262 = vld [vmem:[%s1176 + $0xa8] sm:$0xf]
                %1263 = vst [vmem:[%s1177 + $0x128] sm:$0xf] %v1262
                %v1264 = vld [vmem:[%s1176 + $0xac] sm:$0xf]
                %1265 = vst [vmem:[%s1177 + $0x12c] sm:$0xf] %v1264
                %v1266 = vld [vmem:[%s1176 + $0xb0] sm:$0xf]
                %1267 = vst [vmem:[%s1177 + $0x130] sm:$0xf] %v1266
                %v1268 = vld [vmem:[%s1176 + $0xb4] sm:$0xf]
                %1269 = vst [vmem:[%s1177 + $0x134] sm:$0xf] %v1268
                %v1270 = vld [vmem:[%s1176 + $0xb8] sm:$0xf]
                %1271 = vst [vmem:[%s1177 + $0x138] sm:$0xf] %v1270
                %v1272 = vld [vmem:[%s1176 + $0xbc] sm:$0xf]
                %1273 = vst [vmem:[%s1177 + $0x13c] sm:$0xf] %v1272
                %v1274 = vld [vmem:[%s1176 + $0xc0] sm:$0xf]
                %1275 = vst [vmem:[%s1177 + $0x180] sm:$0xf] %v1274
                %v1276 = vld [vmem:[%s1176 + $0xc4] sm:$0xf]
                %1277 = vst [vmem:[%s1177 + $0x184] sm:$0xf] %v1276
                %v1278 = vld [vmem:[%s1176 + $0xc8] sm:$0xf]
                %1279 = vst [vmem:[%s1177 + $0x188] sm:$0xf] %v1278
                %v1280 = vld [vmem:[%s1176 + $0xcc] sm:$0xf]
                %1281 = vst [vmem:[%s1177 + $0x18c] sm:$0xf] %v1280
                %v1282 = vld [vmem:[%s1176 + $0xd0] sm:$0xf]
                %1283 = vst [vmem:[%s1177 + $0x190] sm:$0xf] %v1282
                %v1284 = vld [vmem:[%s1176 + $0xd4] sm:$0xf]
                %1285 = vst [vmem:[%s1177 + $0x194] sm:$0xf] %v1284
                %v1286 = vld [vmem:[%s1176 + $0xd8] sm:$0xf]
                %1287 = vst [vmem:[%s1177 + $0x198] sm:$0xf] %v1286
                %v1288 = vld [vmem:[%s1176 + $0xdc] sm:$0xf]
                %1289 = vst [vmem:[%s1177 + $0x19c] sm:$0xf] %v1288
                %v1290 = vld [vmem:[%s1176 + $0xe0] sm:$0xf]
                %1291 = vst [vmem:[%s1177 + $0x1a0] sm:$0xf] %v1290
                %v1292 = vld [vmem:[%s1176 + $0xe4] sm:$0xf]
                %1293 = vst [vmem:[%s1177 + $0x1a4] sm:$0xf] %v1292
                %v1294 = vld [vmem:[%s1176 + $0xe8] sm:$0xf]
                %1295 = vst [vmem:[%s1177 + $0x1a8] sm:$0xf] %v1294
                %v1296 = vld [vmem:[%s1176 + $0xec] sm:$0xf]
                %1297 = vst [vmem:[%s1177 + $0x1ac] sm:$0xf] %v1296
                %v1298 = vld [vmem:[%s1176 + $0xf0] sm:$0xf]
                %1299 = vst [vmem:[%s1177 + $0x1b0] sm:$0xf] %v1298
                %v1300 = vld [vmem:[%s1176 + $0xf4] sm:$0xf]
                %1301 = vst [vmem:[%s1177 + $0x1b4] sm:$0xf] %v1300
                %v1302 = vld [vmem:[%s1176 + $0xf8] sm:$0xf]
                %1303 = vst [vmem:[%s1177 + $0x1b8] sm:$0xf] %v1302
                %v1304 = vld [vmem:[%s1176 + $0xfc] sm:$0xf]
                %1305 = vst [vmem:[%s1177 + $0x1bc] sm:$0xf] %v1304
              $region65: #{tpu_custom_call.1} parent=59 // loop_footer
                %s1175 = sadd.s32 1, %s1171
              $region66: #{tpu_custom_call.1} parent=59 // loop_footer_branch
                %1170 = sbr.rel target = $region62
              $region67: #{tpu_custom_call.1} parent=59 // loop_exit
                _
            $region60: #{tpu_custom_call.1} parent=51 // pred_fallthru
              _
          $region52: #{tpu_custom_call.1} parent=47 // pred_fallthru
            _
          %1453 = vnop
        $region48: #{tpu_custom_call.1} parent=31 // pred_fallthru
          _
        // Predicated region
        $region86: #{tpu_custom_call.1} parent=31 // pred_check
          %p1454 = pneg %p132
        $region87: #{tpu_custom_call.1} parent=31 // pred_check_branch
          %1456 = sbr.rel (%p1454) target = $region89
        $region88: #{tpu_custom_call.1} parent=31 // pred_region
          %s1457 = smul.u32 16, %s20
          %s1458 = smul.addr %s1457, 4
          %s1459 = scalar_lea.vmem %s4, %s1458
          // Predicated region
          $region90: #{tpu_custom_call.1} parent=88 // pred_check
            _
          $region91: #{tpu_custom_call.1} parent=88 // pred_check_branch
            %1461 = sbr.rel (0) target = $region93
          $region92: #{tpu_custom_call.1} parent=88 // pred_region
            // Predicated region
            $region94: #{tpu_custom_call.1} parent=92 // pred_check
              _
            $region95: #{tpu_custom_call.1} parent=92 // pred_check_branch
              %1463 = sbr.rel target = $region97
            $region96: #{tpu_custom_call.1} parent=92 // pred_region
              // Predicated region
              $region109: #{tpu_custom_call.1} parent=96 // pred_check
                _
              $region110: #{tpu_custom_call.1} parent=96 // pred_check_branch
                %1604 = sbr.rel (0) target = $region112
              $region111: #{tpu_custom_call.1} parent=96 // pred_region
                loop: start=0, step=1, limit=1
                $region113: #{tpu_custom_call.1} parent=111 // loop_pre_header
                  _
                $region114: #{tpu_custom_call.1} parent=111 // loop_header
                  %s1606 = sphi 0, %s1610
                  %p1607 = scmp.ge.s32.totalorder %s1606, 1
                  %s1611 = sphi %s1156, %s1156
                  %s1612 = sphi %s1459, %s1459
                $region115: #{tpu_custom_call.1} parent=111 // loop_header_branch
                  %1609 = sbr.rel (%p1607) target = $region119
                $region116: #{tpu_custom_call.1} parent=111 // loop_body
                  _
                $region117: #{tpu_custom_call.1} parent=111 // loop_footer
                  %s1610 = sadd.s32 1, %s1606
                $region118: #{tpu_custom_call.1} parent=111 // loop_footer_branch
                  %1605 = sbr.rel target = $region114
                $region119: #{tpu_custom_call.1} parent=111 // loop_exit
                  _
                loop: start=0, step=1, limit=1
                $region120: #{tpu_custom_call.1} parent=111 // loop_pre_header
                  _
                $region121: #{tpu_custom_call.1} parent=111 // loop_header
                  %s1615 = sphi 0, %s1619
                  %p1616 = scmp.ge.s32.totalorder %s1615, 1
                  %s1620 = sphi %s1156, %s1156
                  %s1621 = sphi %s1459, %s1459
                $region122: #{tpu_custom_call.1} parent=111 // loop_header_branch
                  %1618 = sbr.rel (%p1616) target = $region126
                $region123: #{tpu_custom_call.1} parent=111 // loop_body
                  %v1622 = vld [vmem:[%s1620] sm:$0xf]
                  %1623 = vst [vmem:[%s1621] sm:$0xf] %v1622
                  %v1624 = vld [vmem:[%s1620 + $0x4] sm:$0xf]
                  %1625 = vst [vmem:[%s1621 + $0x4] sm:$0xf] %v1624
                  %v1626 = vld [vmem:[%s1620 + $0x8] sm:$0xf]
                  %1627 = vst [vmem:[%s1621 + $0x8] sm:$0xf] %v1626
                  %v1628 = vld [vmem:[%s1620 + $0xc] sm:$0xf]
                  %1629 = vst [vmem:[%s1621 + $0xc] sm:$0xf] %v1628
                  %v1630 = vld [vmem:[%s1620 + $0x10] sm:$0xf]
                  %1631 = vst [vmem:[%s1621 + $0x10] sm:$0xf] %v1630
                  %v1632 = vld [vmem:[%s1620 + $0x14] sm:$0xf]
                  %1633 = vst [vmem:[%s1621 + $0x14] sm:$0xf] %v1632
                  %v1634 = vld [vmem:[%s1620 + $0x18] sm:$0xf]
                  %1635 = vst [vmem:[%s1621 + $0x18] sm:$0xf] %v1634
                  %v1636 = vld [vmem:[%s1620 + $0x1c] sm:$0xf]
                  %1637 = vst [vmem:[%s1621 + $0x1c] sm:$0xf] %v1636
                  %v1638 = vld [vmem:[%s1620 + $0x20] sm:$0xf]
                  %1639 = vst [vmem:[%s1621 + $0x20] sm:$0xf] %v1638
                  %v1640 = vld [vmem:[%s1620 + $0x24] sm:$0xf]
                  %1641 = vst [vmem:[%s1621 + $0x24] sm:$0xf] %v1640
                  %v1642 = vld [vmem:[%s1620 + $0x28] sm:$0xf]
                  %1643 = vst [vmem:[%s1621 + $0x28] sm:$0xf] %v1642
                  %v1644 = vld [vmem:[%s1620 + $0x2c] sm:$0xf]
                  %1645 = vst [vmem:[%s1621 + $0x2c] sm:$0xf] %v1644
                  %v1646 = vld [vmem:[%s1620 + $0x30] sm:$0xf]
                  %1647 = vst [vmem:[%s1621 + $0x30] sm:$0xf] %v1646
                  %v1648 = vld [vmem:[%s1620 + $0x34] sm:$0xf]
                  %1649 = vst [vmem:[%s1621 + $0x34] sm:$0xf] %v1648
                  %v1650 = vld [vmem:[%s1620 + $0x38] sm:$0xf]
                  %1651 = vst [vmem:[%s1621 + $0x38] sm:$0xf] %v1650
                  %v1652 = vld [vmem:[%s1620 + $0x3c] sm:$0xf]
                  %1653 = vst [vmem:[%s1621 + $0x3c] sm:$0xf] %v1652
                  %v1654 = vld [vmem:[%s1620 + $0x40] sm:$0xf]
                  %1655 = vst [vmem:[%s1621 + $0x80] sm:$0xf] %v1654
                  %v1656 = vld [vmem:[%s1620 + $0x44] sm:$0xf]
                  %1657 = vst [vmem:[%s1621 + $0x84] sm:$0xf] %v1656
                  %v1658 = vld [vmem:[%s1620 + $0x48] sm:$0xf]
                  %1659 = vst [vmem:[%s1621 + $0x88] sm:$0xf] %v1658
                  %v1660 = vld [vmem:[%s1620 + $0x4c] sm:$0xf]
                  %1661 = vst [vmem:[%s1621 + $0x8c] sm:$0xf] %v1660
                  %v1662 = vld [vmem:[%s1620 + $0x50] sm:$0xf]
                  %1663 = vst [vmem:[%s1621 + $0x90] sm:$0xf] %v1662
                  %v1664 = vld [vmem:[%s1620 + $0x54] sm:$0xf]
                  %1665 = vst [vmem:[%s1621 + $0x94] sm:$0xf] %v1664
                  %v1666 = vld [vmem:[%s1620 + $0x58] sm:$0xf]
                  %1667 = vst [vmem:[%s1621 + $0x98] sm:$0xf] %v1666
                  %v1668 = vld [vmem:[%s1620 + $0x5c] sm:$0xf]
                  %1669 = vst [vmem:[%s1621 + $0x9c] sm:$0xf] %v1668
                  %v1670 = vld [vmem:[%s1620 + $0x60] sm:$0xf]
                  %1671 = vst [vmem:[%s1621 + $0xa0] sm:$0xf] %v1670
                  %v1672 = vld [vmem:[%s1620 + $0x64] sm:$0xf]
                  %1673 = vst [vmem:[%s1621 + $0xa4] sm:$0xf] %v1672
                  %v1674 = vld [vmem:[%s1620 + $0x68] sm:$0xf]
                  %1675 = vst [vmem:[%s1621 + $0xa8] sm:$0xf] %v1674
                  %v1676 = vld [vmem:[%s1620 + $0x6c] sm:$0xf]
                  %1677 = vst [vmem:[%s1621 + $0xac] sm:$0xf] %v1676
                  %v1678 = vld [vmem:[%s1620 + $0x70] sm:$0xf]
                  %1679 = vst [vmem:[%s1621 + $0xb0] sm:$0xf] %v1678
                  %v1680 = vld [vmem:[%s1620 + $0x74] sm:$0xf]
                  %1681 = vst [vmem:[%s1621 + $0xb4] sm:$0xf] %v1680
                  %v1682 = vld [vmem:[%s1620 + $0x78] sm:$0xf]
                  %1683 = vst [vmem:[%s1621 + $0xb8] sm:$0xf] %v1682
                  %v1684 = vld [vmem:[%s1620 + $0x7c] sm:$0xf]
                  %1685 = vst [vmem:[%s1621 + $0xbc] sm:$0xf] %v1684
                  %v1686 = vld [vmem:[%s1620 + $0x80] sm:$0xf]
                  %1687 = vst [vmem:[%s1621 + $0x100] sm:$0xf] %v1686
                  %v1688 = vld [vmem:[%s1620 + $0x84] sm:$0xf]
                  %1689 = vst [vmem:[%s1621 + $0x104] sm:$0xf] %v1688
                  %v1690 = vld [vmem:[%s1620 + $0x88] sm:$0xf]
                  %1691 = vst [vmem:[%s1621 + $0x108] sm:$0xf] %v1690
                  %v1692 = vld [vmem:[%s1620 + $0x8c] sm:$0xf]
                  %1693 = vst [vmem:[%s1621 + $0x10c] sm:$0xf] %v1692
                  %v1694 = vld [vmem:[%s1620 + $0x90] sm:$0xf]
                  %1695 = vst [vmem:[%s1621 + $0x110] sm:$0xf] %v1694
                  %v1696 = vld [vmem:[%s1620 + $0x94] sm:$0xf]
                  %1697 = vst [vmem:[%s1621 + $0x114] sm:$0xf] %v1696
                  %v1698 = vld [vmem:[%s1620 + $0x98] sm:$0xf]
                  %1699 = vst [vmem:[%s1621 + $0x118] sm:$0xf] %v1698
                  %v1700 = vld [vmem:[%s1620 + $0x9c] sm:$0xf]
                  %1701 = vst [vmem:[%s1621 + $0x11c] sm:$0xf] %v1700
                  %v1702 = vld [vmem:[%s1620 + $0xa0] sm:$0xf]
                  %1703 = vst [vmem:[%s1621 + $0x120] sm:$0xf] %v1702
                  %v1704 = vld [vmem:[%s1620 + $0xa4] sm:$0xf]
                  %1705 = vst [vmem:[%s1621 + $0x124] sm:$0xf] %v1704
                  %v1706 = vld [vmem:[%s1620 + $0xa8] sm:$0xf]
                  %1707 = vst [vmem:[%s1621 + $0x128] sm:$0xf] %v1706
                  %v1708 = vld [vmem:[%s1620 + $0xac] sm:$0xf]
                  %1709 = vst [vmem:[%s1621 + $0x12c] sm:$0xf] %v1708
                  %v1710 = vld [vmem:[%s1620 + $0xb0] sm:$0xf]
                  %1711 = vst [vmem:[%s1621 + $0x130] sm:$0xf] %v1710
                  %v1712 = vld [vmem:[%s1620 + $0xb4] sm:$0xf]
                  %1713 = vst [vmem:[%s1621 + $0x134] sm:$0xf] %v1712
                  %v1714 = vld [vmem:[%s1620 + $0xb8] sm:$0xf]
                  %1715 = vst [vmem:[%s1621 + $0x138] sm:$0xf] %v1714
                  %v1716 = vld [vmem:[%s1620 + $0xbc] sm:$0xf]
                  %1717 = vst [vmem:[%s1621 + $0x13c] sm:$0xf] %v1716
                  %v1718 = vld [vmem:[%s1620 + $0xc0] sm:$0xf]
                  %1719 = vst [vmem:[%s1621 + $0x180] sm:$0xf] %v1718
                  %v1720 = vld [vmem:[%s1620 + $0xc4] sm:$0xf]
                  %1721 = vst [vmem:[%s1621 + $0x184] sm:$0xf] %v1720
                  %v1722 = vld [vmem:[%s1620 + $0xc8] sm:$0xf]
                  %1723 = vst [vmem:[%s1621 + $0x188] sm:$0xf] %v1722
                  %v1724 = vld [vmem:[%s1620 + $0xcc] sm:$0xf]
                  %1725 = vst [vmem:[%s1621 + $0x18c] sm:$0xf] %v1724
                  %v1726 = vld [vmem:[%s1620 + $0xd0] sm:$0xf]
                  %1727 = vst [vmem:[%s1621 + $0x190] sm:$0xf] %v1726
                  %v1728 = vld [vmem:[%s1620 + $0xd4] sm:$0xf]
                  %1729 = vst [vmem:[%s1621 + $0x194] sm:$0xf] %v1728
                  %v1730 = vld [vmem:[%s1620 + $0xd8] sm:$0xf]
                  %1731 = vst [vmem:[%s1621 + $0x198] sm:$0xf] %v1730
                  %v1732 = vld [vmem:[%s1620 + $0xdc] sm:$0xf]
                  %1733 = vst [vmem:[%s1621 + $0x19c] sm:$0xf] %v1732
                  %v1734 = vld [vmem:[%s1620 + $0xe0] sm:$0xf]
                  %1735 = vst [vmem:[%s1621 + $0x1a0] sm:$0xf] %v1734
                  %v1736 = vld [vmem:[%s1620 + $0xe4] sm:$0xf]
                  %1737 = vst [vmem:[%s1621 + $0x1a4] sm:$0xf] %v1736
                  %v1738 = vld [vmem:[%s1620 + $0xe8] sm:$0xf]
                  %1739 = vst [vmem:[%s1621 + $0x1a8] sm:$0xf] %v1738
                  %v1740 = vld [vmem:[%s1620 + $0xec] sm:$0xf]
                  %1741 = vst [vmem:[%s1621 + $0x1ac] sm:$0xf] %v1740
                  %v1742 = vld [vmem:[%s1620 + $0xf0] sm:$0xf]
                  %1743 = vst [vmem:[%s1621 + $0x1b0] sm:$0xf] %v1742
                  %v1744 = vld [vmem:[%s1620 + $0xf4] sm:$0xf]
                  %1745 = vst [vmem:[%s1621 + $0x1b4] sm:$0xf] %v1744
                  %v1746 = vld [vmem:[%s1620 + $0xf8] sm:$0xf]
                  %1747 = vst [vmem:[%s1621 + $0x1b8] sm:$0xf] %v1746
                  %v1748 = vld [vmem:[%s1620 + $0xfc] sm:$0xf]
                  %1749 = vst [vmem:[%s1621 + $0x1bc] sm:$0xf] %v1748
                $region124: #{tpu_custom_call.1} parent=111 // loop_footer
                  %s1619 = sadd.s32 1, %s1615
                $region125: #{tpu_custom_call.1} parent=111 // loop_footer_branch
                  %1614 = sbr.rel target = $region121
                $region126: #{tpu_custom_call.1} parent=111 // loop_exit
                  _
              $region112: #{tpu_custom_call.1} parent=96 // pred_fallthru
                _
            $region97: #{tpu_custom_call.1} parent=92 // pred_fallthru
              _
            // Predicated region
            $region98: #{tpu_custom_call.1} parent=92 // pred_check
              _
            $region99: #{tpu_custom_call.1} parent=92 // pred_check_branch
              %1465 = sbr.rel (0) target = $region101
            $region100: #{tpu_custom_call.1} parent=92 // pred_region
              loop: start=0, step=1, limit=1
              $region102: #{tpu_custom_call.1} parent=100 // loop_pre_header
                _
              $region103: #{tpu_custom_call.1} parent=100 // loop_header
                %s1468 = sphi 0, %s1472
                %p1469 = scmp.ge.s32.totalorder %s1468, 1
                %s1473 = sphi %s1156, %s1156
                %s1474 = sphi %s1459, %s1459
              $region104: #{tpu_custom_call.1} parent=100 // loop_header_branch
                %1471 = sbr.rel (%p1469) target = $region108
              $region105: #{tpu_custom_call.1} parent=100 // loop_body
                %v1475 = vld [vmem:[%s1473] sm:$0xf]
                %1476 = vst [vmem:[%s1474] sm:$0xf] %v1475
                %v1477 = vld [vmem:[%s1473 + $0x4] sm:$0xf]
                %1478 = vst [vmem:[%s1474 + $0x4] sm:$0xf] %v1477
                %v1479 = vld [vmem:[%s1473 + $0x8] sm:$0xf]
                %1480 = vst [vmem:[%s1474 + $0x8] sm:$0xf] %v1479
                %v1481 = vld [vmem:[%s1473 + $0xc] sm:$0xf]
                %1482 = vst [vmem:[%s1474 + $0xc] sm:$0xf] %v1481
                %v1483 = vld [vmem:[%s1473 + $0x10] sm:$0xf]
                %1484 = vst [vmem:[%s1474 + $0x10] sm:$0xf] %v1483
                %v1485 = vld [vmem:[%s1473 + $0x14] sm:$0xf]
                %1486 = vst [vmem:[%s1474 + $0x14] sm:$0xf] %v1485
                %v1487 = vld [vmem:[%s1473 + $0x18] sm:$0xf]
                %1488 = vst [vmem:[%s1474 + $0x18] sm:$0xf] %v1487
                %v1489 = vld [vmem:[%s1473 + $0x1c] sm:$0xf]
                %1490 = vst [vmem:[%s1474 + $0x1c] sm:$0xf] %v1489
                %v1491 = vld [vmem:[%s1473 + $0x20] sm:$0xf]
                %1492 = vst [vmem:[%s1474 + $0x20] sm:$0xf] %v1491
                %v1493 = vld [vmem:[%s1473 + $0x24] sm:$0xf]
                %1494 = vst [vmem:[%s1474 + $0x24] sm:$0xf] %v1493
                %v1495 = vld [vmem:[%s1473 + $0x28] sm:$0xf]
                %1496 = vst [vmem:[%s1474 + $0x28] sm:$0xf] %v1495
                %v1497 = vld [vmem:[%s1473 + $0x2c] sm:$0xf]
                %1498 = vst [vmem:[%s1474 + $0x2c] sm:$0xf] %v1497
                %v1499 = vld [vmem:[%s1473 + $0x30] sm:$0xf]
                %1500 = vst [vmem:[%s1474 + $0x30] sm:$0xf] %v1499
                %v1501 = vld [vmem:[%s1473 + $0x34] sm:$0xf]
                %1502 = vst [vmem:[%s1474 + $0x34] sm:$0xf] %v1501
                %v1503 = vld [vmem:[%s1473 + $0x38] sm:$0xf]
                %1504 = vst [vmem:[%s1474 + $0x38] sm:$0xf] %v1503
                %v1505 = vld [vmem:[%s1473 + $0x3c] sm:$0xf]
                %1506 = vst [vmem:[%s1474 + $0x3c] sm:$0xf] %v1505
                %v1507 = vld [vmem:[%s1473 + $0x40] sm:$0xf]
                %1508 = vst [vmem:[%s1474 + $0x80] sm:$0xf] %v1507
                %v1509 = vld [vmem:[%s1473 + $0x44] sm:$0xf]
                %1510 = vst [vmem:[%s1474 + $0x84] sm:$0xf] %v1509
                %v1511 = vld [vmem:[%s1473 + $0x48] sm:$0xf]
                %1512 = vst [vmem:[%s1474 + $0x88] sm:$0xf] %v1511
                %v1513 = vld [vmem:[%s1473 + $0x4c] sm:$0xf]
                %1514 = vst [vmem:[%s1474 + $0x8c] sm:$0xf] %v1513
                %v1515 = vld [vmem:[%s1473 + $0x50] sm:$0xf]
                %1516 = vst [vmem:[%s1474 + $0x90] sm:$0xf] %v1515
                %v1517 = vld [vmem:[%s1473 + $0x54] sm:$0xf]
                %1518 = vst [vmem:[%s1474 + $0x94] sm:$0xf] %v1517
                %v1519 = vld [vmem:[%s1473 + $0x58] sm:$0xf]
                %1520 = vst [vmem:[%s1474 + $0x98] sm:$0xf] %v1519
                %v1521 = vld [vmem:[%s1473 + $0x5c] sm:$0xf]
                %1522 = vst [vmem:[%s1474 + $0x9c] sm:$0xf] %v1521
                %v1523 = vld [vmem:[%s1473 + $0x60] sm:$0xf]
                %1524 = vst [vmem:[%s1474 + $0xa0] sm:$0xf] %v1523
                %v1525 = vld [vmem:[%s1473 + $0x64] sm:$0xf]
                %1526 = vst [vmem:[%s1474 + $0xa4] sm:$0xf] %v1525
                %v1527 = vld [vmem:[%s1473 + $0x68] sm:$0xf]
                %1528 = vst [vmem:[%s1474 + $0xa8] sm:$0xf] %v1527
                %v1529 = vld [vmem:[%s1473 + $0x6c] sm:$0xf]
                %1530 = vst [vmem:[%s1474 + $0xac] sm:$0xf] %v1529
                %v1531 = vld [vmem:[%s1473 + $0x70] sm:$0xf]
                %1532 = vst [vmem:[%s1474 + $0xb0] sm:$0xf] %v1531
                %v1533 = vld [vmem:[%s1473 + $0x74] sm:$0xf]
                %1534 = vst [vmem:[%s1474 + $0xb4] sm:$0xf] %v1533
                %v1535 = vld [vmem:[%s1473 + $0x78] sm:$0xf]
                %1536 = vst [vmem:[%s1474 + $0xb8] sm:$0xf] %v1535
                %v1537 = vld [vmem:[%s1473 + $0x7c] sm:$0xf]
                %1538 = vst [vmem:[%s1474 + $0xbc] sm:$0xf] %v1537
                %v1539 = vld [vmem:[%s1473 + $0x80] sm:$0xf]
                %1540 = vst [vmem:[%s1474 + $0x100] sm:$0xf] %v1539
                %v1541 = vld [vmem:[%s1473 + $0x84] sm:$0xf]
                %1542 = vst [vmem:[%s1474 + $0x104] sm:$0xf] %v1541
                %v1543 = vld [vmem:[%s1473 + $0x88] sm:$0xf]
                %1544 = vst [vmem:[%s1474 + $0x108] sm:$0xf] %v1543
                %v1545 = vld [vmem:[%s1473 + $0x8c] sm:$0xf]
                %1546 = vst [vmem:[%s1474 + $0x10c] sm:$0xf] %v1545
                %v1547 = vld [vmem:[%s1473 + $0x90] sm:$0xf]
                %1548 = vst [vmem:[%s1474 + $0x110] sm:$0xf] %v1547
                %v1549 = vld [vmem:[%s1473 + $0x94] sm:$0xf]
                %1550 = vst [vmem:[%s1474 + $0x114] sm:$0xf] %v1549
                %v1551 = vld [vmem:[%s1473 + $0x98] sm:$0xf]
                %1552 = vst [vmem:[%s1474 + $0x118] sm:$0xf] %v1551
                %v1553 = vld [vmem:[%s1473 + $0x9c] sm:$0xf]
                %1554 = vst [vmem:[%s1474 + $0x11c] sm:$0xf] %v1553
                %v1555 = vld [vmem:[%s1473 + $0xa0] sm:$0xf]
                %1556 = vst [vmem:[%s1474 + $0x120] sm:$0xf] %v1555
                %v1557 = vld [vmem:[%s1473 + $0xa4] sm:$0xf]
                %1558 = vst [vmem:[%s1474 + $0x124] sm:$0xf] %v1557
                %v1559 = vld [vmem:[%s1473 + $0xa8] sm:$0xf]
                %1560 = vst [vmem:[%s1474 + $0x128] sm:$0xf] %v1559
                %v1561 = vld [vmem:[%s1473 + $0xac] sm:$0xf]
                %1562 = vst [vmem:[%s1474 + $0x12c] sm:$0xf] %v1561
                %v1563 = vld [vmem:[%s1473 + $0xb0] sm:$0xf]
                %1564 = vst [vmem:[%s1474 + $0x130] sm:$0xf] %v1563
                %v1565 = vld [vmem:[%s1473 + $0xb4] sm:$0xf]
                %1566 = vst [vmem:[%s1474 + $0x134] sm:$0xf] %v1565
                %v1567 = vld [vmem:[%s1473 + $0xb8] sm:$0xf]
                %1568 = vst [vmem:[%s1474 + $0x138] sm:$0xf] %v1567
                %v1569 = vld [vmem:[%s1473 + $0xbc] sm:$0xf]
                %1570 = vst [vmem:[%s1474 + $0x13c] sm:$0xf] %v1569
                %v1571 = vld [vmem:[%s1473 + $0xc0] sm:$0xf]
                %1572 = vst [vmem:[%s1474 + $0x180] sm:$0xf] %v1571
                %v1573 = vld [vmem:[%s1473 + $0xc4] sm:$0xf]
                %1574 = vst [vmem:[%s1474 + $0x184] sm:$0xf] %v1573
                %v1575 = vld [vmem:[%s1473 + $0xc8] sm:$0xf]
                %1576 = vst [vmem:[%s1474 + $0x188] sm:$0xf] %v1575
                %v1577 = vld [vmem:[%s1473 + $0xcc] sm:$0xf]
                %1578 = vst [vmem:[%s1474 + $0x18c] sm:$0xf] %v1577
                %v1579 = vld [vmem:[%s1473 + $0xd0] sm:$0xf]
                %1580 = vst [vmem:[%s1474 + $0x190] sm:$0xf] %v1579
                %v1581 = vld [vmem:[%s1473 + $0xd4] sm:$0xf]
                %1582 = vst [vmem:[%s1474 + $0x194] sm:$0xf] %v1581
                %v1583 = vld [vmem:[%s1473 + $0xd8] sm:$0xf]
                %1584 = vst [vmem:[%s1474 + $0x198] sm:$0xf] %v1583
                %v1585 = vld [vmem:[%s1473 + $0xdc] sm:$0xf]
                %1586 = vst [vmem:[%s1474 + $0x19c] sm:$0xf] %v1585
                %v1587 = vld [vmem:[%s1473 + $0xe0] sm:$0xf]
                %1588 = vst [vmem:[%s1474 + $0x1a0] sm:$0xf] %v1587
                %v1589 = vld [vmem:[%s1473 + $0xe4] sm:$0xf]
                %1590 = vst [vmem:[%s1474 + $0x1a4] sm:$0xf] %v1589
                %v1591 = vld [vmem:[%s1473 + $0xe8] sm:$0xf]
                %1592 = vst [vmem:[%s1474 + $0x1a8] sm:$0xf] %v1591
                %v1593 = vld [vmem:[%s1473 + $0xec] sm:$0xf]
                %1594 = vst [vmem:[%s1474 + $0x1ac] sm:$0xf] %v1593
                %v1595 = vld [vmem:[%s1473 + $0xf0] sm:$0xf]
                %1596 = vst [vmem:[%s1474 + $0x1b0] sm:$0xf] %v1595
                %v1597 = vld [vmem:[%s1473 + $0xf4] sm:$0xf]
                %1598 = vst [vmem:[%s1474 + $0x1b4] sm:$0xf] %v1597
                %v1599 = vld [vmem:[%s1473 + $0xf8] sm:$0xf]
                %1600 = vst [vmem:[%s1474 + $0x1b8] sm:$0xf] %v1599
                %v1601 = vld [vmem:[%s1473 + $0xfc] sm:$0xf]
                %1602 = vst [vmem:[%s1474 + $0x1bc] sm:$0xf] %v1601
              $region106: #{tpu_custom_call.1} parent=100 // loop_footer
                %s1472 = sadd.s32 1, %s1468
              $region107: #{tpu_custom_call.1} parent=100 // loop_footer_branch
                %1467 = sbr.rel target = $region103
              $region108: #{tpu_custom_call.1} parent=100 // loop_exit
                _
            $region101: #{tpu_custom_call.1} parent=92 // pred_fallthru
              _
          $region93: #{tpu_custom_call.1} parent=88 // pred_fallthru
            _
          %1750 = vnop
        $region89: #{tpu_custom_call.1} parent=31 // pred_fallthru
          _
      $region32: #{tpu_custom_call.1} parent=5 // pred_fallthru
        _
      %p1751 = scmp.le.s32.totalorder 2, %s15
      // Predicated region
      $region127: #{tpu_custom_call.1} parent=5 // pred_check
        %p1752 = pneg %p1751
      $region128: #{tpu_custom_call.1} parent=5 // pred_check_branch
        %1754 = sbr.rel (%p1752) target = $region130
      $region129: #{tpu_custom_call.1} parent=5 // pred_region
        %s1755 = ssub.s32 %s15, 2
        // Predicated region
        $region131: #{tpu_custom_call.1} parent=129 // pred_check
          %p1756 = pneg %p112
        $region132: #{tpu_custom_call.1} parent=129 // pred_check_branch
          %1758 = sbr.rel (%p1756) target = $region134
        $region133: #{tpu_custom_call.1} parent=129 // pred_region
          %s1759 = sand.u32 %s97, 1
          %s1760 = sand.u32 %s97, 1
          %s1761 = smul.addr %s1760, 256
          %s1762 = scalar_lea.vmem [#allocation7], %s1761
        $region134: #{tpu_custom_call.1} parent=129 // pred_fallthru
          _
        // Predicated region
        $region135: #{tpu_custom_call.1} parent=129 // pred_check
          %p1763 = pneg %p138
        $region136: #{tpu_custom_call.1} parent=129 // pred_check_branch
          %1765 = sbr.rel (%p1763) target = $region138
        $region137: #{tpu_custom_call.1} parent=129 // pred_region
          %s1766 = sand.u32 %s123, 1
          %s1767 = sand.u32 %s123, 1
          %s1768 = smul.addr %s1767, 256
          %s1769 = scalar_lea.vmem [#allocation8], %s1768
        $region138: #{tpu_custom_call.1} parent=129 // pred_fallthru
          _
      $region130: #{tpu_custom_call.1} parent=5 // pred_fallthru
        _
    $region6: #{tpu_custom_call.1} parent=1 // loop_footer
      %s19 = sadd.s32 1, %s15
    $region7: #{tpu_custom_call.1} parent=1 // loop_footer_branch
      %14 = sbr.rel target = $region3
    $region8: #{tpu_custom_call.1} parent=1 // loop_exit
      _
    %1770 = vsyncpa [#allocation3], 1
    %s1771 = scalar_lea.sflag [#allocation3], 1
    %1772 = vsyncpa %s1771, 1
    %1773 = vsyncpa [#allocation5], 1

// kernel: tpu_custom_call.1
$region0: #{tpu_custom_call.1}
  #allocation0 [shape = 'u32[]', space=smem, size = 0x4, offset = 0x4, fixed_abs, tag = 'smem constant byte address 0x4 - core index']
  #allocation1 [shape = 'u32[144,128]{1,0:T(1,128)}', space=vmem, size = 0x12000, scoped, tag = 'internal scratch']
  %s0 = inlined_call_operand.hbm [shape: f32[256,128], index: 0, kind: input, shape index: {}]
  %s1 = inlined_call_operand.hbm [shape: bf16[128,128], index: 1, kind: input, shape index: {}]
  %s2 = inlined_call_operand.hbm [shape: bf16[128,128], index: 2, kind: input, shape index: {}]
  %s3 = inlined_call_operand.vmem [shape: bf16[4,256,32], index: 3, kind: output, shape index: {0}]
  %s4 = inlined_call_operand.vmem [shape: bf16[4,256,32], index: 4, kind: output, shape index: {1}]
  %5 = xla_tuple %s3, %s4
  %s6 = sld [smem:[#allocation0]]
  $region139: #{tpu_custom_call.1} parent=0
    _
  %s8 = ssub.s32 1, %s6
  %s9 = scalar_select 0, %s8, %s6
  $region1: #{tpu_custom_call.1} parent=0
    #allocation2 [shape = 'u8[131072]{0}', space=vmem, size = 0x20000, scoped, tag = 'input window, operand 0']
    #allocation3 [shape = 's32[2]{0}', space=sflag, size = 0x8, scoped, tag = 'scoped memory for tpu_custom_call.1']
    #allocation4 [shape = 'u8[32768]{0}', space=vmem, size = 0x8000, scoped, tag = 'input window, operand 1, single buffered']
    #allocation5 [shape = 's32[1]{0}', space=sflag, size = 0x4, scoped, tag = 'scoped memory for tpu_custom_call.1']
    #allocation6 [shape = 'u8[32768]{0}', space=vmem, size = 0x8000, scoped, tag = 'input window, operand 2, single buffered']
    #allocation7 [shape = 'u8[262144]{0}', space=vmem, size = 0x40000, scoped, tag = 'output window, operand 0']
    #allocation8 [shape = 'u8[262144]{0}', space=vmem, size = 0x40000, scoped, tag = 'output window, operand 1']
    %10 = vsyncpa [#allocation3], 0
    %s11 = scalar_lea.sflag [#allocation3], 1
    %12 = vsyncpa %s11, 0
    %13 = vsyncpa [#allocation5], 0
    loop: start=0, step=1, limit=4
    $region2: #{tpu_custom_call.1} parent=1 // loop_pre_header
      _
    $region3: #{tpu_custom_call.1} parent=1 // loop_header
      %s15 = sphi 0, %s19
      %p16 = scmp.ge.s32.totalorder %s15, 4
      %s25 = sphi 0, %s27
      %s28 = sphi 0, %s25
      %s29 = sphi 0, %s28
      %s45 = sphi 0, %s29
      %s49 = sphi 0, %s49
      %s51 = sphi 0, %s49
      %s52 = sphi 0, %s51
      %s66 = sphi 0, %s52
      %s70 = sphi 0, %s70
      %s72 = sphi 0, %s70
      %s73 = sphi 0, %s72
      %s87 = sphi 0, %s73
      %s93 = sphi 0, %s95
      %s96 = sphi 0, %s93
      %s97 = sphi 0, %s96
      %s113 = sphi 0, %s97
      %s119 = sphi 0, %s121
      %s122 = sphi 0, %s119
      %s123 = sphi 0, %s122
      %s139 = sphi 0, %s123
    $region4: #{tpu_custom_call.1} parent=1 // loop_header_branch
      %18 = sbr.rel (%p16) target = $region8
    $region5: #{tpu_custom_call.1} parent=1 // loop_body
      %s20 = ssub.s32 %s15, 1
      %s21 = ssub.s32 %s15, 2
      %s22 = sadd.s32 %s15, 1
      %s23 = ssub.s32 %s15, %s22
      %p24 = scmp.eq.s32.totalorder %s23, 0
      %s26 = sadd.s32 %s25, 1
      %s27 = scalar_select %p24, %s25, %s26
      %p30 = pneg %p24
      %p31 = scmp.eq.s32.totalorder %s15, 1
      %p32 = por %p30, %p31
      %p33 = scmp.ne.s32.totalorder %s25, %s28
      %p34 = scmp.eq.s32.totalorder %s15, 0
      %p35 = por %p33, %p34
      %p36 = scmp.ne.s32.totalorder %s25, %s28
      %p37 = scmp.eq.s32.totalorder %s20, 1
      %p38 = por %p36, %p37
      %p39 = scmp.ne.s32.totalorder %s28, %s29
      %p40 = scmp.eq.s32.totalorder %s20, 0
      %p41 = por %p39, %p40
      %p42 = scmp.ne.s32.totalorder %s28, %s29
      %p43 = scmp.eq.s32.totalorder %s21, 1
      %p44 = por %p42, %p43
      %p46 = scmp.ne.s32.totalorder %s29, %s45
      %p47 = scmp.eq.s32.totalorder %s21, 0
      %p48 = por %p46, %p47
      %s50 = sadd.s32 %s49, 1
      %p53 = scmp.eq.s32.totalorder %s15, 1
      %p54 = scmp.ne.s32.totalorder %s49, %s51
      %p55 = scmp.eq.s32.totalorder %s15, 0
      %p56 = por %p54, %p55
      %p57 = scmp.ne.s32.totalorder %s49, %s51
      %p58 = scmp.eq.s32.totalorder %s20, 1
      %p59 = por %p57, %p58
      %p60 = scmp.ne.s32.totalorder %s51, %s52
      %p61 = scmp.eq.s32.totalorder %s20, 0
      %p62 = por %p60, %p61
      %p63 = scmp.ne.s32.totalorder %s51, %s52
      %p64 = scmp.eq.s32.totalorder %s21, 1
      %p65 = por %p63, %p64
      %p67 = scmp.ne.s32.totalorder %s52, %s66
      %p68 = scmp.eq.s32.totalorder %s21, 0
      %p69 = por %p67, %p68
      %s71 = sadd.s32 %s70, 1
      %p74 = scmp.eq.s32.totalorder %s15, 1
      %p75 = scmp.ne.s32.totalorder %s70, %s72
      %p76 = scmp.eq.s32.totalorder %s15, 0
      %p77 = por %p75, %p76
      %p78 = scmp.ne.s32.totalorder %s70, %s72
      %p79 = scmp.eq.s32.totalorder %s20, 1
      %p80 = por %p78, %p79
      %p81 = scmp.ne.s32.totalorder %s72, %s73
      %p82 = scmp.eq.s32.totalorder %s20, 0
      %p83 = por %p81, %p82
      %p84 = scmp.ne.s32.totalorder %s72, %s73
      %p85 = scmp.eq.s32.totalorder %s21, 1
      %p86 = por %p84, %p85
      %p88 = scmp.ne.s32.totalorder %s73, %s87
      %p89 = scmp.eq.s32.totalorder %s21, 0
      %p90 = por %p88, %p89
      %s91 = ssub.s32 %s15, %s22
      %p92 = scmp.eq.s32.totalorder %s91, 0
      %s94 = sadd.s32 %s93, 1
      %s95 = scalar_select %p92, %s93, %s94
      %p98 = pneg %p92
      %p99 = scmp.eq.s32.totalorder %s15, 1
      %p100 = por %p98, %p99
      %p101 = scmp.ne.s32.totalorder %s93, %s96
      %p102 = scmp.eq.s32.totalorder %s15, 0
      %p103 = por %p101, %p102
      %p104 = scmp.ne.s32.totalorder %s93, %s96
      %p105 = scmp.eq.s32.totalorder %s20, 1
      %p106 = por %p104, %p105
      %p107 = scmp.ne.s32.totalorder %s96, %s97
      %p108 = scmp.eq.s32.totalorder %s20, 0
      %p109 = por %p107, %p108
      %p110 = scmp.ne.s32.totalorder %s96, %s97
      %p111 = scmp.eq.s32.totalorder %s21, 1
      %p112 = por %p110, %p111
      %p114 = scmp.ne.s32.totalorder %s97, %s113
      %p115 = scmp.eq.s32.totalorder %s21, 0
      %p116 = por %p114, %p115
      %s117 = ssub.s32 %s15, %s22
      %p118 = scmp.eq.s32.totalorder %s117, 0
      %s120 = sadd.s32 %s119, 1
      %s121 = scalar_select %p118, %s119, %s120
      %p124 = pneg %p118
      %p125 = scmp.eq.s32.totalorder %s15, 1
      %p126 = por %p124, %p125
      %p127 = scmp.ne.s32.totalorder %s119, %s122
      %p128 = scmp.eq.s32.totalorder %s15, 0
      %p129 = por %p127, %p128
      %p130 = scmp.ne.s32.totalorder %s119, %s122
      %p131 = scmp.eq.s32.totalorder %s20, 1
      %p132 = por %p130, %p131
      %p133 = scmp.ne.s32.totalorder %s122, %s123
      %p134 = scmp.eq.s32.totalorder %s20, 0
      %p135 = por %p133, %p134
      %p136 = scmp.ne.s32.totalorder %s122, %s123
      %p137 = scmp.eq.s32.totalorder %s21, 1
      %p138 = por %p136, %p137
      %p140 = scmp.ne.s32.totalorder %s123, %s139
      %p141 = scmp.eq.s32.totalorder %s21, 0
      %p142 = por %p140, %p141
      %p143 = scmp.le.s32.totalorder 1, %s15
      %p144 = scmp.lt.s32.totalorder %s15, 3
      %p145 = pnand %p143, %p144
      %p146 = pneg %p145
      // Predicated region
      $region9: #{tpu_custom_call.1} parent=5 // pred_check
        _
      $region10: #{tpu_custom_call.1} parent=5 // pred_check_branch
        %148 = sbr.rel (%p145) target = $region12
      $region11: #{tpu_custom_call.1} parent=5 // pred_region
        %s149 = ssub.s32 %s15, 1
        // Predicated region
        $region13: #{tpu_custom_call.1} parent=11 // pred_check
          %p150 = pneg %p62
        $region14: #{tpu_custom_call.1} parent=11 // pred_check_branch
          %152 = sbr.rel (%p150) target = $region16
        $region15: #{tpu_custom_call.1} parent=11 // pred_region
          %s154 = ssub.s32 1024, 1024
          %155 = vsyncadd [#allocation5], %s154
          %s156 = sshll.u32 [#allocation4], 4
          %s157 = int_to_ptr.vmem [resolvable:$true] %s156
          %162 = dma.hbm_to_vmem [thread:$0]  %s1, 1024, %s157, [#allocation5], 64, 64, 4
        $region16: #{tpu_custom_call.1} parent=11 // pred_fallthru
          _
        // Predicated region
        $region17: #{tpu_custom_call.1} parent=11 // pred_check
          %p163 = pneg %p83
        $region18: #{tpu_custom_call.1} parent=11 // pred_check_branch
          %165 = sbr.rel (%p163) target = $region20
        $region19: #{tpu_custom_call.1} parent=11 // pred_region
          %s167 = ssub.s32 1024, 1024
          %168 = vsyncadd [#allocation5], %s167
          %s169 = sshll.u32 [#allocation6], 4
          %s170 = int_to_ptr.vmem [resolvable:$true] %s169
          %175 = dma.hbm_to_vmem [thread:$0]  %s2, 1024, %s170, [#allocation5], 64, 64, 4
        $region20: #{tpu_custom_call.1} parent=11 // pred_fallthru
          _
      $region12: #{tpu_custom_call.1} parent=5 // pred_fallthru
        _
      %p176 = scmp.lt.s32.totalorder %s15, 2
      // Predicated region
      $region21: #{tpu_custom_call.1} parent=5 // pred_check
        %p177 = pneg %p176
      $region22: #{tpu_custom_call.1} parent=5 // pred_check_branch
        %179 = sbr.rel (%p177) target = $region24
      $region23: #{tpu_custom_call.1} parent=5 // pred_region
        // Predicated region
        $region25: #{tpu_custom_call.1} parent=23 // pred_check
          %p180 = pneg %p35
        $region26: #{tpu_custom_call.1} parent=23 // pred_check_branch
          %182 = sbr.rel (%p180) target = $region28
        $region27: #{tpu_custom_call.1} parent=23 // pred_region
          %s183 = sand.u32 %s25, 1
          %s184 = scalar_lea.sflag [#allocation3], %s183
          %s185 = sand.u32 %s25, 1
          %s186 = smul.addr %s185, 128
          %s187 = scalar_lea.vmem [#allocation2], %s186
          %s188 = smul.u32 16, %s15
          %s190 = ssub.s32 2048, 2048
          %191 = vsyncadd %s184, %s190
          %s192 = smul.addr %s188, 128
          %s193 = scalar_lea.hbm %s0, %s192
          %s194 = sshll.u32 %s187, 4
          %s195 = int_to_ptr.vmem [resolvable:$true] %s194
          %200 = dma.hbm_to_vmem [thread:$0]  %s193, 2048, %s195, %s184, 128, 128, 8
        $region28: #{tpu_custom_call.1} parent=23 // pred_fallthru
          _
      $region24: #{tpu_custom_call.1} parent=5 // pred_fallthru
        _
      %p201 = scmp.le.s32.totalorder 1, %s15
      %p202 = scmp.lt.s32.totalorder %s15, 3
      %p203 = pnand %p201, %p202
      %p204 = pneg %p203
      // Predicated region
      $region29: #{tpu_custom_call.1} parent=5 // pred_check
        _
      $region30: #{tpu_custom_call.1} parent=5 // pred_check_branch
        %206 = sbr.rel (%p203) target = $region32
      $region31: #{tpu_custom_call.1} parent=5 // pred_region
        %s207 = ssub.s32 %s15, 1
        %s208 = sand.u32 %s28, 1
        %s209 = scalar_lea.sflag [#allocation3], %s208
        %s210 = sand.u32 %s28, 1
        %s211 = smul.addr %s210, 128
        %s212 = scalar_lea.vmem [#allocation2], %s211
        // Predicated region
        $region33: #{tpu_custom_call.1} parent=31 // pred_check
          %p213 = pneg %p41
        $region34: #{tpu_custom_call.1} parent=31 // pred_check_branch
          %215 = sbr.rel (%p213) target = $region36
        $region35: #{tpu_custom_call.1} parent=31 // pred_region
          %216 = dma.done %s209, 2048
        $region36: #{tpu_custom_call.1} parent=31 // pred_fallthru
          _
        // Predicated region
        $region37: #{tpu_custom_call.1} parent=31 // pred_check
          %p217 = pneg %p62
        $region38: #{tpu_custom_call.1} parent=31 // pred_check_branch
          %219 = sbr.rel (%p217) target = $region40
        $region39: #{tpu_custom_call.1} parent=31 // pred_region
          %220 = dma.done [#allocation5], 1024
        $region40: #{tpu_custom_call.1} parent=31 // pred_fallthru
          _
        // Predicated region
        $region41: #{tpu_custom_call.1} parent=31 // pred_check
          %p221 = pneg %p83
        $region42: #{tpu_custom_call.1} parent=31 // pred_check_branch
          %223 = sbr.rel (%p221) target = $region44
        $region43: #{tpu_custom_call.1} parent=31 // pred_region
          %224 = dma.done [#allocation5], 1024
        $region44: #{tpu_custom_call.1} parent=31 // pred_fallthru
          _
        %s225 = sand.u32 %s28, 1
        %s226 = scalar_lea.sflag [#allocation3], %s225
        %s227 = sand.u32 %s28, 1
        %s228 = smul.addr %s227, 128
        %s229 = scalar_lea.vmem [#allocation2], %s228
        %p230 = pneg %p41
        %p231 = pneg %p38
        %p232 = pneg %p62
        %p233 = pneg %p59
        %p234 = pneg %p83
        %p235 = pneg %p80
        %p236 = pneg %p109
        %p237 = pneg %p106
        %s238 = sand.u32 %s96, 1
        %s239 = sand.u32 %s96, 1
        %s240 = smul.addr %s239, 256
        %s241 = scalar_lea.vmem [#allocation7], %s240
        %p242 = pneg %p135
        %p243 = pneg %p132
        %s244 = sand.u32 %s122, 1
        %s245 = sand.u32 %s122, 1
        %s246 = smul.addr %s245, 256
        %s247 = scalar_lea.vmem [#allocation8], %s246
        %s248 = smul.u32 16, %s20
        %s249 = smul.u32 16, %s20
        %s250 = smul.u32 16, %s20
        %v252 = vld [vmem:[%s212] sm:$0xff]
        %v253 = vld [vmem:[%s212 + $0x8] sm:$0xff]
        %v254 = vld [vmem:[%s212 + $0x10] sm:$0xff]
        %v255 = vld [vmem:[%s212 + $0x18] sm:$0xff]
        %v256 = vld [vmem:[%s212 + $0x20] sm:$0xff]
        %v257 = vld [vmem:[%s212 + $0x28] sm:$0xff]
        %v258 = vld [vmem:[%s212 + $0x30] sm:$0xff]
        %v259 = vld [vmem:[%s212 + $0x38] sm:$0xff]
        %v260 = vld [vmem:[%s212 + $0x40] sm:$0xff]
        %v261 = vld [vmem:[%s212 + $0x48] sm:$0xff]
        %v262 = vld [vmem:[%s212 + $0x50] sm:$0xff]
        %v263 = vld [vmem:[%s212 + $0x58] sm:$0xff]
        %v264 = vld [vmem:[%s212 + $0x60] sm:$0xff]
        %v265 = vld [vmem:[%s212 + $0x68] sm:$0xff]
        %v266 = vld [vmem:[%s212 + $0x70] sm:$0xff]
        %v267 = vld [vmem:[%s212 + $0x78] sm:$0xff]
        %v268 = vpack.c.bf16 %v253, %v252
        %v269 = vpack.c.bf16 %v255, %v254
        %v270 = vpack.c.bf16 %v257, %v256
        %v271 = vpack.c.bf16 %v259, %v258
        %v272 = vpack.c.bf16 %v261, %v260
        %v273 = vpack.c.bf16 %v263, %v262
        %v274 = vpack.c.bf16 %v265, %v264
        %v275 = vpack.c.bf16 %v267, %v266
        %v276 = vld [vmem:[#allocation4] sm:$0xf]
        %v277 = vld [vmem:[#allocation4 + $0x4] sm:$0xf]
        %v278 = vld [vmem:[#allocation4 + $0x8] sm:$0xf]
        %v279 = vld [vmem:[#allocation4 + $0xc] sm:$0xf]
        %v280 = vld [vmem:[#allocation4 + $0x10] sm:$0xf]
        %v281 = vld [vmem:[#allocation4 + $0x14] sm:$0xf]
        %v282 = vld [vmem:[#allocation4 + $0x18] sm:$0xf]
        %v283 = vld [vmem:[#allocation4 + $0x1c] sm:$0xf]
        %v284 = vld [vmem:[#allocation4 + $0x20] sm:$0xf]
        %v285 = vld [vmem:[#allocation4 + $0x24] sm:$0xf]
        %v286 = vld [vmem:[#allocation4 + $0x28] sm:$0xf]
        %v287 = vld [vmem:[#allocation4 + $0x2c] sm:$0xf]
        %v288 = vld [vmem:[#allocation4 + $0x30] sm:$0xf]
        %v289 = vld [vmem:[#allocation4 + $0x34] sm:$0xf]
        %v290 = vld [vmem:[#allocation4 + $0x38] sm:$0xf]
        %v291 = vld [vmem:[#allocation4 + $0x3c] sm:$0xf]
        %v308 = vunpack.c.l.b16 %v276
        %v309 = vunpack.c.l.b16 %v277
        %v310 = vunpack.c.l.b16 %v278
        %v311 = vunpack.c.l.b16 %v279
        %v312 = vunpack.c.l.b16 %v280
        %v313 = vunpack.c.l.b16 %v281
        %v314 = vunpack.c.l.b16 %v282
        %v315 = vunpack.c.l.b16 %v283
        %v316 = vunpack.c.l.b16 %v284
        %v317 = vunpack.c.l.b16 %v285
        %v318 = vunpack.c.l.b16 %v286
        %v319 = vunpack.c.l.b16 %v287
        %v320 = vunpack.c.l.b16 %v288
        %v321 = vunpack.c.l.b16 %v289
        %v322 = vunpack.c.l.b16 %v290
        %v323 = vunpack.c.l.b16 %v291
        %v324 = vpack.c.b16 %v309, %v308
        %v325 = vpack.c.b16 %v311, %v310
        %v326 = vpack.c.b16 %v313, %v312
        %v327 = vpack.c.b16 %v315, %v314
        %v328 = vpack.c.b16 %v317, %v316
        %v329 = vpack.c.b16 %v319, %v318
        %v330 = vpack.c.b16 %v321, %v320
        %v331 = vpack.c.b16 %v323, %v322
        %340 = vmatprep.subr.bf16.mxu0 0
        %341 = vmatpush1.bf16.msra.mxu0 %v324
        %342 = vmatprep.subr.bf16.mxu0 0
        %343 = vmatpush1.bf16.msra.mxu0 %v325
        %344 = vmatprep.subr.bf16.mxu0 0
        %345 = vmatpush1.bf16.msra.mxu0 %v326
        %346 = vmatprep.subr.bf16.mxu0 0
        %347 = vmatpush1.bf16.msra.mxu0 %v327
        %348 = vmatprep.subr.bf16.mxu0 0
        %349 = vmatpush1.bf16.msra.mxu0 %v328
        %350 = vmatprep.subr.bf16.mxu0 0
        %351 = vmatpush1.bf16.msra.mxu0 %v329
        %352 = vmatprep.subr.bf16.mxu0 0
        %353 = vmatpush1.bf16.msra.mxu0 %v330
        %354 = vmatprep.subr.bf16.mxu0 0
        %355 = vmatpush1.bf16.msra.mxu0 %v331
        %356 = vmatprep.subr.bf16.mxu0 0
        %357 = vmatpush1.bf16.msra.mxu0 0
        %358 = vmatprep.subr.bf16.mxu0 0
        %359 = vmatpush1.bf16.msra.mxu0 0
        %360 = vmatprep.subr.bf16.mxu0 0
        %361 = vmatpush1.bf16.msra.mxu0 0
        %362 = vmatprep.subr.bf16.mxu0 0
        %363 = vmatpush1.bf16.msra.mxu0 0
        %364 = vmatprep.subr.bf16.mxu0 0
        %365 = vmatpush1.bf16.msra.mxu0 0
        %366 = vmatprep.subr.bf16.mxu0 0
        %367 = vmatpush1.bf16.msra.mxu0 0
        %368 = vmatprep.subr.bf16.mxu0 0
        %369 = vmatpush1.bf16.msra.mxu0 0
        %370 = vmatprep.subr.bf16.mxu0 0
        %371 = vmatpush1.bf16.msra.mxu0 0
        %372 = vmatprep.mubr.bf16.mxu0 0
        %373 = vmatmul.mubr.bf16.gmra.mrb[0].mxu0 %v268
        %v374 = vpop.f32.mrb[0].mxu0
        %v375 = vadd.f32 0.0, %v374
        %v376 = vpop.f32.mrb[0].mxu0
        %v377 = vpop.f32.mrb[0].mxu0
        %v378 = vadd.f32 0.0, %v377
        %v379 = vpop.f32.mrb[0].mxu0
        %380 = vmatprep.mubr.bf16.mxu0 0
        %381 = vmatmul.mubr.bf16.gmra.mrb[0].mxu0 %v269
        %v382 = vpop.f32.mrb[0].mxu0
        %v383 = vadd.f32 0.0, %v382
        %v384 = vpop.f32.mrb[0].mxu0
        %v385 = vpop.f32.mrb[0].mxu0
        %v386 = vadd.f32 0.0, %v385
        %v387 = vpop.f32.mrb[0].mxu0
        %388 = vmatprep.mubr.bf16.mxu0 0
        %389 = vmatmul.mubr.bf16.gmra.mrb[0].mxu0 %v270
        %v390 = vpop.f32.mrb[0].mxu0
        %v391 = vadd.f32 0.0, %v390
        %v392 = vpop.f32.mrb[0].mxu0
        %v393 = vpop.f32.mrb[0].mxu0
        %v394 = vadd.f32 0.0, %v393
        %v395 = vpop.f32.mrb[0].mxu0
        %396 = vmatprep.mubr.bf16.mxu0 0
        %397 = vmatmul.mubr.bf16.gmra.mrb[0].mxu0 %v271
        %v398 = vpop.f32.mrb[0].mxu0
        %v399 = vadd.f32 0.0, %v398
        %v400 = vpop.f32.mrb[0].mxu0
        %v401 = vpop.f32.mrb[0].mxu0
        %v402 = vadd.f32 0.0, %v401
        %v403 = vpop.f32.mrb[0].mxu0
        %404 = vmatprep.mubr.bf16.mxu0 0
        %405 = vmatmul.mubr.bf16.gmra.mrb[0].mxu0 %v272
        %v406 = vpop.f32.mrb[0].mxu0
        %v407 = vadd.f32 0.0, %v406
        %v408 = vpop.f32.mrb[0].mxu0
        %v409 = vpop.f32.mrb[0].mxu0
        %v410 = vadd.f32 0.0, %v409
        %v411 = vpop.f32.mrb[0].mxu0
        %412 = vmatprep.mubr.bf16.mxu0 0
        %413 = vmatmul.mubr.bf16.gmra.mrb[0].mxu0 %v273
        %v414 = vpop.f32.mrb[0].mxu0
        %v415 = vadd.f32 0.0, %v414
        %v416 = vpop.f32.mrb[0].mxu0
        %v417 = vpop.f32.mrb[0].mxu0
        %v418 = vadd.f32 0.0, %v417
        %v419 = vpop.f32.mrb[0].mxu0
        %420 = vmatprep.mubr.bf16.mxu0 0
        %421 = vmatmul.mubr.bf16.gmra.mrb[0].mxu0 %v274
        %v422 = vpop.f32.mrb[0].mxu0
        %v423 = vadd.f32 0.0, %v422
        %v424 = vpop.f32.mrb[0].mxu0
        %v425 = vpop.f32.mrb[0].mxu0
        %v426 = vadd.f32 0.0, %v425
        %v427 = vpop.f32.mrb[0].mxu0
        %428 = vmatprep.mubr.bf16.mxu0 0
        %429 = vmatmul.mubr.bf16.gmra.mrb[0].mxu0 %v275
        %v430 = vpop.f32.mrb[0].mxu0
        %v431 = vadd.f32 0.0, %v430
        %v432 = vpop.f32.mrb[0].mxu0
        %v433 = vpop.f32.mrb[0].mxu0
        %v434 = vadd.f32 0.0, %v433
        %v435 = vpop.f32.mrb[0].mxu0
        %436 = vdwg.mxu0
        %v437 = vld [vmem:[#allocation6] sm:$0xf]
        %v438 = vld [vmem:[#allocation6 + $0x4] sm:$0xf]
        %v439 = vld [vmem:[#allocation6 + $0x8] sm:$0xf]
        %v440 = vld [vmem:[#allocation6 + $0xc] sm:$0xf]
        %v441 = vld [vmem:[#allocation6 + $0x10] sm:$0xf]
        %v442 = vld [vmem:[#allocation6 + $0x14] sm:$0xf]
        %v443 = vld [vmem:[#allocation6 + $0x18] sm:$0xf]
        %v444 = vld [vmem:[#allocation6 + $0x1c] sm:$0xf]
        %v445 = vld [vmem:[#allocation6 + $0x20] sm:$0xf]
        %v446 = vld [vmem:[#allocation6 + $0x24] sm:$0xf]
        %v447 = vld [vmem:[#allocation6 + $0x28] sm:$0xf]
        %v448 = vld [vmem:[#allocation6 + $0x2c] sm:$0xf]
        %v449 = vld [vmem:[#allocation6 + $0x30] sm:$0xf]
        %v450 = vld [vmem:[#allocation6 + $0x34] sm:$0xf]
        %v451 = vld [vmem:[#allocation6 + $0x38] sm:$0xf]
        %v452 = vld [vmem:[#allocation6 + $0x3c] sm:$0xf]
        %v469 = vunpack.c.l.b16 %v437
        %v470 = vunpack.c.l.b16 %v438
        %v471 = vunpack.c.l.b16 %v439
        %v472 = vunpack.c.l.b16 %v440
        %v473 = vunpack.c.l.b16 %v441
        %v474 = vunpack.c.l.b16 %v442
        %v475 = vunpack.c.l.b16 %v443
        %v476 = vunpack.c.l.b16 %v444
        %v477 = vunpack.c.l.b16 %v445
        %v478 = vunpack.c.l.b16 %v446
        %v479 = vunpack.c.l.b16 %v447
        %v480 = vunpack.c.l.b16 %v448
        %v481 = vunpack.c.l.b16 %v449
        %v482 = vunpack.c.l.b16 %v450
        %v483 = vunpack.c.l.b16 %v451
        %v484 = vunpack.c.l.b16 %v452
        %v485 = vpack.c.b16 %v470, %v469
        %v486 = vpack.c.b16 %v472, %v471
        %v487 = vpack.c.b16 %v474, %v473
        %v488 = vpack.c.b16 %v476, %v475
        %v489 = vpack.c.b16 %v478, %v477
        %v490 = vpack.c.b16 %v480, %v479
        %v491 = vpack.c.b16 %v482, %v481
        %v492 = vpack.c.b16 %v484, %v483
        %501 = vmatprep.subr.bf16.mxu0 0
        %502 = vmatpush1.bf16.msra.mxu0 %v485
        %503 = vmatprep.subr.bf16.mxu0 0
        %504 = vmatpush1.bf16.msra.mxu0 %v486
        %505 = vmatprep.subr.bf16.mxu0 0
        %506 = vmatpush1.bf16.msra.mxu0 %v487
        %507 = vmatprep.subr.bf16.mxu0 0
        %508 = vmatpush1.bf16.msra.mxu0 %v488
        %509 = vmatprep.subr.bf16.mxu0 0
        %510 = vmatpush1.bf16.msra.mxu0 %v489
        %511 = vmatprep.subr.bf16.mxu0 0
        %512 = vmatpush1.bf16.msra.mxu0 %v490
        %513 = vmatprep.subr.bf16.mxu0 0
        %514 = vmatpush1.bf16.msra.mxu0 %v491
        %515 = vmatprep.subr.bf16.mxu0 0
        %516 = vmatpush1.bf16.msra.mxu0 %v492
        %517 = vmatprep.subr.bf16.mxu0 0
        %518 = vmatpush1.bf16.msra.mxu0 0
        %519 = vmatprep.subr.bf16.mxu0 0
        %520 = vmatpush1.bf16.msra.mxu0 0
        %521 = vmatprep.subr.bf16.mxu0 0
        %522 = vmatpush1.bf16.msra.mxu0 0
        %523 = vmatprep.subr.bf16.mxu0 0
        %524 = vmatpush1.bf16.msra.mxu0 0
        %525 = vmatprep.subr.bf16.mxu0 0
        %526 = vmatpush1.bf16.msra.mxu0 0
        %527 = vmatprep.subr.bf16.mxu0 0
        %528 = vmatpush1.bf16.msra.mxu0 0
        %529 = vmatprep.subr.bf16.mxu0 0
        %530 = vmatpush1.bf16.msra.mxu0 0
        %531 = vmatprep.subr.bf16.mxu0 0
        %532 = vmatpush1.bf16.msra.mxu0 0
        %533 = vmatprep.mubr.bf16.mxu0 0
        %534 = vmatmul.mubr.bf16.gmra.mrb[0].mxu0 %v268
        %v535 = vpop.f32.mrb[0].mxu0
        %v536 = vadd.f32 0.0, %v535
        %v537 = vpop.f32.mrb[0].mxu0
        %v538 = vpop.f32.mrb[0].mxu0
        %v539 = vadd.f32 0.0, %v538
        %v540 = vpop.f32.mrb[0].mxu0
        %541 = vmatprep.mubr.bf16.mxu0 0
        %542 = vmatmul.mubr.bf16.gmra.mrb[0].mxu0 %v269
        %v543 = vpop.f32.mrb[0].mxu0
        %v544 = vadd.f32 0.0, %v543
        %v545 = vpop.f32.mrb[0].mxu0
        %v546 = vpop.f32.mrb[0].mxu0
        %v547 = vadd.f32 0.0, %v546
        %v548 = vpop.f32.mrb[0].mxu0
        %549 = vmatprep.mubr.bf16.mxu0 0
        %550 = vmatmul.mubr.bf16.gmra.mrb[0].mxu0 %v270
        %v551 = vpop.f32.mrb[0].mxu0
        %v552 = vadd.f32 0.0, %v551
        %v553 = vpop.f32.mrb[0].mxu0
        %v554 = vpop.f32.mrb[0].mxu0
        %v555 = vadd.f32 0.0, %v554
        %v556 = vpop.f32.mrb[0].mxu0
        %557 = vmatprep.mubr.bf16.mxu0 0
        %558 = vmatmul.mubr.bf16.gmra.mrb[0].mxu0 %v271
        %v559 = vpop.f32.mrb[0].mxu0
        %v560 = vadd.f32 0.0, %v559
        %v561 = vpop.f32.mrb[0].mxu0
        %v562 = vpop.f32.mrb[0].mxu0
        %v563 = vadd.f32 0.0, %v562
        %v564 = vpop.f32.mrb[0].mxu0
        %565 = vmatprep.mubr.bf16.mxu0 0
        %566 = vmatmul.mubr.bf16.gmra.mrb[0].mxu0 %v272
        %v567 = vpop.f32.mrb[0].mxu0
        %v568 = vadd.f32 0.0, %v567
        %v569 = vpop.f32.mrb[0].mxu0
        %v570 = vpop.f32.mrb[0].mxu0
        %v571 = vadd.f32 0.0, %v570
        %v572 = vpop.f32.mrb[0].mxu0
        %573 = vmatprep.mubr.bf16.mxu0 0
        %574 = vmatmul.mubr.bf16.gmra.mrb[0].mxu0 %v273
        %v575 = vpop.f32.mrb[0].mxu0
        %v576 = vadd.f32 0.0, %v575
        %v577 = vpop.f32.mrb[0].mxu0
        %v578 = vpop.f32.mrb[0].mxu0
        %v579 = vadd.f32 0.0, %v578
        %v580 = vpop.f32.mrb[0].mxu0
        %581 = vmatprep.mubr.bf16.mxu0 0
        %582 = vmatmul.mubr.bf16.gmra.mrb[0].mxu0 %v274
        %v583 = vpop.f32.mrb[0].mxu0
        %v584 = vadd.f32 0.0, %v583
        %v585 = vpop.f32.mrb[0].mxu0
        %v586 = vpop.f32.mrb[0].mxu0
        %v587 = vadd.f32 0.0, %v586
        %v588 = vpop.f32.mrb[0].mxu0
        %589 = vmatprep.mubr.bf16.mxu0 0
        %590 = vmatmul.mubr.bf16.gmra.mrb[0].mxu0 %v275
        %v591 = vpop.f32.mrb[0].mxu0
        %v592 = vadd.f32 0.0, %v591
        %v593 = vpop.f32.mrb[0].mxu0
        %v594 = vpop.f32.mrb[0].mxu0
        %v595 = vadd.f32 0.0, %v594
        %v596 = vpop.f32.mrb[0].mxu0
        %597 = vdwg.mxu0
        %v598 = vpack.c.bf16 %v378, %v375
        %v599 = vpack.c.bf16 %v386, %v383
        %v600 = vpack.c.bf16 %v394, %v391
        %v601 = vpack.c.bf16 %v402, %v399
        %v602 = vpack.c.bf16 %v410, %v407
        %v603 = vpack.c.bf16 %v418, %v415
        %v604 = vpack.c.bf16 %v426, %v423
        %v605 = vpack.c.bf16 %v434, %v431
        %v614 = vunpack.c.l.b16 %v598
        %v615 = vunpack.c.h.b16 %v598
        %v616 = vunpack.c.l.b16 %v599
        %v617 = vunpack.c.h.b16 %v599
        %v618 = vunpack.c.l.b16 %v600
        %v619 = vunpack.c.h.b16 %v600
        %v620 = vunpack.c.l.b16 %v601
        %v621 = vunpack.c.h.b16 %v601
        %v622 = vunpack.c.l.b16 %v602
        %v623 = vunpack.c.h.b16 %v602
        %v624 = vunpack.c.l.b16 %v603
        %v625 = vunpack.c.h.b16 %v603
        %v626 = vunpack.c.l.b16 %v604
        %v627 = vunpack.c.h.b16 %v604
        %v628 = vunpack.c.l.b16 %v605
        %v629 = vunpack.c.h.b16 %v605
        %v630 = vpack.c.b16 %v614, %v614
        %v631 = vpack.c.b16 %v615, %v615
        %v632 = vpack.c.b16 %v616, %v616
        %v633 = vpack.c.b16 %v617, %v617
        %v634 = vpack.c.b16 %v618, %v618
        %v635 = vpack.c.b16 %v619, %v619
        %v636 = vpack.c.b16 %v620, %v620
        %v637 = vpack.c.b16 %v621, %v621
        %v638 = vpack.c.b16 %v622, %v622
        %v639 = vpack.c.b16 %v623, %v623
        %v640 = vpack.c.b16 %v624, %v624
        %v641 = vpack.c.b16 %v625, %v625
        %v642 = vpack.c.b16 %v626, %v626
        %v643 = vpack.c.b16 %v627, %v627
        %v644 = vpack.c.b16 %v628, %v628
        %v645 = vpack.c.b16 %v629, %v629
        %vm662 = vcmask 257024
        %663 = vst.msk [vmem:[%s241] sm:$0xf] %vm662, %v630
        %664 = vst.msk [vmem:[%s241 + $0x4] sm:$0xf] %vm662, %v631
        %665 = vst.msk [vmem:[%s241 + $0x8] sm:$0xf] %vm662, %v632
        %666 = vst.msk [vmem:[%s241 + $0xc] sm:$0xf] %vm662, %v633
        %667 = vst.msk [vmem:[%s241 + $0x10] sm:$0xf] %vm662, %v634
        %668 = vst.msk [vmem:[%s241 + $0x14] sm:$0xf] %vm662, %v635
        %669 = vst.msk [vmem:[%s241 + $0x18] sm:$0xf] %vm662, %v636
        %670 = vst.msk [vmem:[%s241 + $0x1c] sm:$0xf] %vm662, %v637
        %671 = vst.msk [vmem:[%s241 + $0x20] sm:$0xf] %vm662, %v638
        %672 = vst.msk [vmem:[%s241 + $0x24] sm:$0xf] %vm662, %v639
        %673 = vst.msk [vmem:[%s241 + $0x28] sm:$0xf] %vm662, %v640
        %674 = vst.msk [vmem:[%s241 + $0x2c] sm:$0xf] %vm662, %v641
        %675 = vst.msk [vmem:[%s241 + $0x30] sm:$0xf] %vm662, %v642
        %676 = vst.msk [vmem:[%s241 + $0x34] sm:$0xf] %vm662, %v643
        %677 = vst.msk [vmem:[%s241 + $0x38] sm:$0xf] %vm662, %v644
        %678 = vst.msk [vmem:[%s241 + $0x3c] sm:$0xf] %vm662, %v645
        %v679 = vpack.c.bf16 %v539, %v536
        %v680 = vpack.c.bf16 %v547, %v544
        %v681 = vpack.c.bf16 %v555, %v552
        %v682 = vpack.c.bf16 %v563, %v560
        %v683 = vpack.c.bf16 %v571, %v568
        %v684 = vpack.c.bf16 %v579, %v576
        %v685 = vpack.c.bf16 %v587, %v584
        %v686 = vpack.c.bf16 %v595, %v592
        %v695 = vunpack.c.l.b16 %v679
        %v696 = vunpack.c.h.b16 %v679
        %v697 = vunpack.c.l.b16 %v680
        %v698 = vunpack.c.h.b16 %v680
        %v699 = vunpack.c.l.b16 %v681
        %v700 = vunpack.c.h.b16 %v681
        %v701 = vunpack.c.l.b16 %v682
        %v702 = vunpack.c.h.b16 %v682
        %v703 = vunpack.c.l.b16 %v683
        %v704 = vunpack.c.h.b16 %v683
        %v705 = vunpack.c.l.b16 %v684
        %v706 = vunpack.c.h.b16 %v684
        %v707 = vunpack.c.l.b16 %v685
        %v708 = vunpack.c.h.b16 %v685
        %v709 = vunpack.c.l.b16 %v686
        %v710 = vunpack.c.h.b16 %v686
        %v711 = vpack.c.b16 %v695, %v695
        %v712 = vpack.c.b16 %v696, %v696
        %v713 = vpack.c.b16 %v697, %v697
        %v714 = vpack.c.b16 %v698, %v698
        %v715 = vpack.c.b16 %v699, %v699
        %v716 = vpack.c.b16 %v700, %v700
        %v717 = vpack.c.b16 %v701, %v701
        %v718 = vpack.c.b16 %v702, %v702
        %v719 = vpack.c.b16 %v703, %v703
        %v720 = vpack.c.b16 %v704, %v704
        %v721 = vpack.c.b16 %v705, %v705
        %v722 = vpack.c.b16 %v706, %v706
        %v723 = vpack.c.b16 %v707, %v707
        %v724 = vpack.c.b16 %v708, %v708
        %v725 = vpack.c.b16 %v709, %v709
        %v726 = vpack.c.b16 %v710, %v710
        %743 = vst.msk [vmem:[%s247] sm:$0xf] %vm662, %v711
        %744 = vst.msk [vmem:[%s247 + $0x4] sm:$0xf] %vm662, %v712
        %745 = vst.msk [vmem:[%s247 + $0x8] sm:$0xf] %vm662, %v713
        %746 = vst.msk [vmem:[%s247 + $0xc] sm:$0xf] %vm662, %v714
        %747 = vst.msk [vmem:[%s247 + $0x10] sm:$0xf] %vm662, %v715
        %748 = vst.msk [vmem:[%s247 + $0x14] sm:$0xf] %vm662, %v716
        %749 = vst.msk [vmem:[%s247 + $0x18] sm:$0xf] %vm662, %v717
        %750 = vst.msk [vmem:[%s247 + $0x1c] sm:$0xf] %vm662, %v718
        %751 = vst.msk [vmem:[%s247 + $0x20] sm:$0xf] %vm662, %v719
        %752 = vst.msk [vmem:[%s247 + $0x24] sm:$0xf] %vm662, %v720
        %753 = vst.msk [vmem:[%s247 + $0x28] sm:$0xf] %vm662, %v721
        %754 = vst.msk [vmem:[%s247 + $0x2c] sm:$0xf] %vm662, %v722
        %755 = vst.msk [vmem:[%s247 + $0x30] sm:$0xf] %vm662, %v723
        %756 = vst.msk [vmem:[%s247 + $0x34] sm:$0xf] %vm662, %v724
        %757 = vst.msk [vmem:[%s247 + $0x38] sm:$0xf] %vm662, %v725
        %758 = vst.msk [vmem:[%s247 + $0x3c] sm:$0xf] %vm662, %v726
        %759 = vrot.lane.b32.xlu0 %v630, 96
        %v760 = vpop.permute.xlu0 %759
        %761 = vrot.lane.b32.xlu0 %v631, 96
        %v762 = vpop.permute.xlu0 %761
        %763 = vrot.lane.b32.xlu0 %v632, 96
        %v764 = vpop.permute.xlu0 %763
        %765 = vrot.lane.b32.xlu0 %v633, 96
        %v766 = vpop.permute.xlu0 %765
        %767 = vrot.lane.b32.xlu0 %v634, 96
        %v768 = vpop.permute.xlu0 %767
        %769 = vrot.lane.b32.xlu0 %v635, 96
        %v770 = vpop.permute.xlu0 %769
        %771 = vrot.lane.b32.xlu0 %v636, 96
        %v772 = vpop.permute.xlu0 %771
        %773 = vrot.lane.b32.xlu0 %v637, 96
        %v774 = vpop.permute.xlu0 %773
        %775 = vrot.lane.b32.xlu0 %v638, 96
        %v776 = vpop.permute.xlu0 %775
        %777 = vrot.lane.b32.xlu0 %v639, 96
        %v778 = vpop.permute.xlu0 %777
        %779 = vrot.lane.b32.xlu0 %v640, 96
        %v780 = vpop.permute.xlu0 %779
        %781 = vrot.lane.b32.xlu0 %v641, 96
        %v782 = vpop.permute.xlu0 %781
        %783 = vrot.lane.b32.xlu0 %v642, 96
        %v784 = vpop.permute.xlu0 %783
        %785 = vrot.lane.b32.xlu0 %v643, 96
        %v786 = vpop.permute.xlu0 %785
        %787 = vrot.lane.b32.xlu0 %v644, 96
        %v788 = vpop.permute.xlu0 %787
        %789 = vrot.lane.b32.xlu0 %v645, 96
        %v790 = vpop.permute.xlu0 %789
        %s807 = scalar_lea.vmem %s241, 64 [#allocation7]
        %808 = vst.msk [vmem:[%s807] sm:$0xf] %vm662, %v760
        %809 = vst.msk [vmem:[%s807 + $0x4] sm:$0xf] %vm662, %v762
        %810 = vst.msk [vmem:[%s807 + $0x8] sm:$0xf] %vm662, %v764
        %811 = vst.msk [vmem:[%s807 + $0xc] sm:$0xf] %vm662, %v766
        %812 = vst.msk [vmem:[%s807 + $0x10] sm:$0xf] %vm662, %v768
        %813 = vst.msk [vmem:[%s807 + $0x14] sm:$0xf] %vm662, %v770
        %814 = vst.msk [vmem:[%s807 + $0x18] sm:$0xf] %vm662, %v772
        %815 = vst.msk [vmem:[%s807 + $0x1c] sm:$0xf] %vm662, %v774
        %816 = vst.msk [vmem:[%s807 + $0x20] sm:$0xf] %vm662, %v776
        %817 = vst.msk [vmem:[%s807 + $0x24] sm:$0xf] %vm662, %v778
        %818 = vst.msk [vmem:[%s807 + $0x28] sm:$0xf] %vm662, %v780
        %819 = vst.msk [vmem:[%s807 + $0x2c] sm:$0xf] %vm662, %v782
        %820 = vst.msk [vmem:[%s807 + $0x30] sm:$0xf] %vm662, %v784
        %821 = vst.msk [vmem:[%s807 + $0x34] sm:$0xf] %vm662, %v786
        %822 = vst.msk [vmem:[%s807 + $0x38] sm:$0xf] %vm662, %v788
        %823 = vst.msk [vmem:[%s807 + $0x3c] sm:$0xf] %vm662, %v790
        %824 = vrot.lane.b32.xlu0 %v711, 96
        %v825 = vpop.permute.xlu0 %824
        %826 = vrot.lane.b32.xlu0 %v712, 96
        %v827 = vpop.permute.xlu0 %826
        %828 = vrot.lane.b32.xlu0 %v713, 96
        %v829 = vpop.permute.xlu0 %828
        %830 = vrot.lane.b32.xlu0 %v714, 96
        %v831 = vpop.permute.xlu0 %830
        %832 = vrot.lane.b32.xlu0 %v715, 96
        %v833 = vpop.permute.xlu0 %832
        %834 = vrot.lane.b32.xlu0 %v716, 96
        %v835 = vpop.permute.xlu0 %834
        %836 = vrot.lane.b32.xlu0 %v717, 96
        %v837 = vpop.permute.xlu0 %836
        %838 = vrot.lane.b32.xlu0 %v718, 96
        %v839 = vpop.permute.xlu0 %838
        %840 = vrot.lane.b32.xlu0 %v719, 96
        %v841 = vpop.permute.xlu0 %840
        %842 = vrot.lane.b32.xlu0 %v720, 96
        %v843 = vpop.permute.xlu0 %842
        %844 = vrot.lane.b32.xlu0 %v721, 96
        %v845 = vpop.permute.xlu0 %844
        %846 = vrot.lane.b32.xlu0 %v722, 96
        %v847 = vpop.permute.xlu0 %846
        %848 = vrot.lane.b32.xlu0 %v723, 96
        %v849 = vpop.permute.xlu0 %848
        %850 = vrot.lane.b32.xlu0 %v724, 96
        %v851 = vpop.permute.xlu0 %850
        %852 = vrot.lane.b32.xlu0 %v725, 96
        %v853 = vpop.permute.xlu0 %852
        %854 = vrot.lane.b32.xlu0 %v726, 96
        %v855 = vpop.permute.xlu0 %854
        %s872 = scalar_lea.vmem %s247, 64 [#allocation8]
        %873 = vst.msk [vmem:[%s872] sm:$0xf] %vm662, %v825
        %874 = vst.msk [vmem:[%s872 + $0x4] sm:$0xf] %vm662, %v827
        %875 = vst.msk [vmem:[%s872 + $0x8] sm:$0xf] %vm662, %v829
        %876 = vst.msk [vmem:[%s872 + $0xc] sm:$0xf] %vm662, %v831
        %877 = vst.msk [vmem:[%s872 + $0x10] sm:$0xf] %vm662, %v833
        %878 = vst.msk [vmem:[%s872 + $0x14] sm:$0xf] %vm662, %v835
        %879 = vst.msk [vmem:[%s872 + $0x18] sm:$0xf] %vm662, %v837
        %880 = vst.msk [vmem:[%s872 + $0x1c] sm:$0xf] %vm662, %v839
        %881 = vst.msk [vmem:[%s872 + $0x20] sm:$0xf] %vm662, %v841
        %882 = vst.msk [vmem:[%s872 + $0x24] sm:$0xf] %vm662, %v843
        %883 = vst.msk [vmem:[%s872 + $0x28] sm:$0xf] %vm662, %v845
        %884 = vst.msk [vmem:[%s872 + $0x2c] sm:$0xf] %vm662, %v847
        %885 = vst.msk [vmem:[%s872 + $0x30] sm:$0xf] %vm662, %v849
        %886 = vst.msk [vmem:[%s872 + $0x34] sm:$0xf] %vm662, %v851
        %887 = vst.msk [vmem:[%s872 + $0x38] sm:$0xf] %vm662, %v853
        %888 = vst.msk [vmem:[%s872 + $0x3c] sm:$0xf] %vm662, %v855
        %889 = vrot.lane.b32.xlu0 %v630, 64
        %v890 = vpop.permute.xlu0 %889
        %891 = vrot.lane.b32.xlu0 %v631, 64
        %v892 = vpop.permute.xlu0 %891
        %893 = vrot.lane.b32.xlu0 %v632, 64
        %v894 = vpop.permute.xlu0 %893
        %895 = vrot.lane.b32.xlu0 %v633, 64
        %v896 = vpop.permute.xlu0 %895
        %897 = vrot.lane.b32.xlu0 %v634, 64
        %v898 = vpop.permute.xlu0 %897
        %899 = vrot.lane.b32.xlu0 %v635, 64
        %v900 = vpop.permute.xlu0 %899
        %901 = vrot.lane.b32.xlu0 %v636, 64
        %v902 = vpop.permute.xlu0 %901
        %903 = vrot.lane.b32.xlu0 %v637, 64
        %v904 = vpop.permute.xlu0 %903
        %905 = vrot.lane.b32.xlu0 %v638, 64
        %v906 = vpop.permute.xlu0 %905
        %907 = vrot.lane.b32.xlu0 %v639, 64
        %v908 = vpop.permute.xlu0 %907
        %909 = vrot.lane.b32.xlu0 %v640, 64
        %v910 = vpop.permute.xlu0 %909
        %911 = vrot.lane.b32.xlu0 %v641, 64
        %v912 = vpop.permute.xlu0 %911
        %913 = vrot.lane.b32.xlu0 %v642, 64
        %v914 = vpop.permute.xlu0 %913
        %915 = vrot.lane.b32.xlu0 %v643, 64
        %v916 = vpop.permute.xlu0 %915
        %917 = vrot.lane.b32.xlu0 %v644, 64
        %v918 = vpop.permute.xlu0 %917
        %919 = vrot.lane.b32.xlu0 %v645, 64
        %v920 = vpop.permute.xlu0 %919
        %s937 = scalar_lea.vmem %s241, 128 [#allocation7]
        %938 = vst.msk [vmem:[%s937] sm:$0xf] %vm662, %v890
        %939 = vst.msk [vmem:[%s937 + $0x4] sm:$0xf] %vm662, %v892
        %940 = vst.msk [vmem:[%s937 + $0x8] sm:$0xf] %vm662, %v894
        %941 = vst.msk [vmem:[%s937 + $0xc] sm:$0xf] %vm662, %v896
        %942 = vst.msk [vmem:[%s937 + $0x10] sm:$0xf] %vm662, %v898
        %943 = vst.msk [vmem:[%s937 + $0x14] sm:$0xf] %vm662, %v900
        %944 = vst.msk [vmem:[%s937 + $0x18] sm:$0xf] %vm662, %v902
        %945 = vst.msk [vmem:[%s937 + $0x1c] sm:$0xf] %vm662, %v904
        %946 = vst.msk [vmem:[%s937 + $0x20] sm:$0xf] %vm662, %v906
        %947 = vst.msk [vmem:[%s937 + $0x24] sm:$0xf] %vm662, %v908
        %948 = vst.msk [vmem:[%s937 + $0x28] sm:$0xf] %vm662, %v910
        %949 = vst.msk [vmem:[%s937 + $0x2c] sm:$0xf] %vm662, %v912
        %950 = vst.msk [vmem:[%s937 + $0x30] sm:$0xf] %vm662, %v914
        %951 = vst.msk [vmem:[%s937 + $0x34] sm:$0xf] %vm662, %v916
        %952 = vst.msk [vmem:[%s937 + $0x38] sm:$0xf] %vm662, %v918
        %953 = vst.msk [vmem:[%s937 + $0x3c] sm:$0xf] %vm662, %v920
        %954 = vrot.lane.b32.xlu0 %v711, 64
        %v955 = vpop.permute.xlu0 %954
        %956 = vrot.lane.b32.xlu0 %v712, 64
        %v957 = vpop.permute.xlu0 %956
        %958 = vrot.lane.b32.xlu0 %v713, 64
        %v959 = vpop.permute.xlu0 %958
        %960 = vrot.lane.b32.xlu0 %v714, 64
        %v961 = vpop.permute.xlu0 %960
        %962 = vrot.lane.b32.xlu0 %v715, 64
        %v963 = vpop.permute.xlu0 %962
        %964 = vrot.lane.b32.xlu0 %v716, 64
        %v965 = vpop.permute.xlu0 %964
        %966 = vrot.lane.b32.xlu0 %v717, 64
        %v967 = vpop.permute.xlu0 %966
        %968 = vrot.lane.b32.xlu0 %v718, 64
        %v969 = vpop.permute.xlu0 %968
        %970 = vrot.lane.b32.xlu0 %v719, 64
        %v971 = vpop.permute.xlu0 %970
        %972 = vrot.lane.b32.xlu0 %v720, 64
        %v973 = vpop.permute.xlu0 %972
        %974 = vrot.lane.b32.xlu0 %v721, 64
        %v975 = vpop.permute.xlu0 %974
        %976 = vrot.lane.b32.xlu0 %v722, 64
        %v977 = vpop.permute.xlu0 %976
        %978 = vrot.lane.b32.xlu0 %v723, 64
        %v979 = vpop.permute.xlu0 %978
        %980 = vrot.lane.b32.xlu0 %v724, 64
        %v981 = vpop.permute.xlu0 %980
        %982 = vrot.lane.b32.xlu0 %v725, 64
        %v983 = vpop.permute.xlu0 %982
        %984 = vrot.lane.b32.xlu0 %v726, 64
        %v985 = vpop.permute.xlu0 %984
        %s1002 = scalar_lea.vmem %s247, 128 [#allocation8]
        %1003 = vst.msk [vmem:[%s1002] sm:$0xf] %vm662, %v955
        %1004 = vst.msk [vmem:[%s1002 + $0x4] sm:$0xf] %vm662, %v957
        %1005 = vst.msk [vmem:[%s1002 + $0x8] sm:$0xf] %vm662, %v959
        %1006 = vst.msk [vmem:[%s1002 + $0xc] sm:$0xf] %vm662, %v961
        %1007 = vst.msk [vmem:[%s1002 + $0x10] sm:$0xf] %vm662, %v963
        %1008 = vst.msk [vmem:[%s1002 + $0x14] sm:$0xf] %vm662, %v965
        %1009 = vst.msk [vmem:[%s1002 + $0x18] sm:$0xf] %vm662, %v967
        %1010 = vst.msk [vmem:[%s1002 + $0x1c] sm:$0xf] %vm662, %v969
        %1011 = vst.msk [vmem:[%s1002 + $0x20] sm:$0xf] %vm662, %v971
        %1012 = vst.msk [vmem:[%s1002 + $0x24] sm:$0xf] %vm662, %v973
        %1013 = vst.msk [vmem:[%s1002 + $0x28] sm:$0xf] %vm662, %v975
        %1014 = vst.msk [vmem:[%s1002 + $0x2c] sm:$0xf] %vm662, %v977
        %1015 = vst.msk [vmem:[%s1002 + $0x30] sm:$0xf] %vm662, %v979
        %1016 = vst.msk [vmem:[%s1002 + $0x34] sm:$0xf] %vm662, %v981
        %1017 = vst.msk [vmem:[%s1002 + $0x38] sm:$0xf] %vm662, %v983
        %1018 = vst.msk [vmem:[%s1002 + $0x3c] sm:$0xf] %vm662, %v985
        %1019 = vrot.lane.b32.xlu0 %v630, 32
        %v1020 = vpop.permute.xlu0 %1019
        %1021 = vrot.lane.b32.xlu0 %v631, 32
        %v1022 = vpop.permute.xlu0 %1021
        %1023 = vrot.lane.b32.xlu0 %v632, 32
        %v1024 = vpop.permute.xlu0 %1023
        %1025 = vrot.lane.b32.xlu0 %v633, 32
        %v1026 = vpop.permute.xlu0 %1025
        %1027 = vrot.lane.b32.xlu0 %v634, 32
        %v1028 = vpop.permute.xlu0 %1027
        %1029 = vrot.lane.b32.xlu0 %v635, 32
        %v1030 = vpop.permute.xlu0 %1029
        %1031 = vrot.lane.b32.xlu0 %v636, 32
        %v1032 = vpop.permute.xlu0 %1031
        %1033 = vrot.lane.b32.xlu0 %v637, 32
        %v1034 = vpop.permute.xlu0 %1033
        %1035 = vrot.lane.b32.xlu0 %v638, 32
        %v1036 = vpop.permute.xlu0 %1035
        %1037 = vrot.lane.b32.xlu0 %v639, 32
        %v1038 = vpop.permute.xlu0 %1037
        %1039 = vrot.lane.b32.xlu0 %v640, 32
        %v1040 = vpop.permute.xlu0 %1039
        %1041 = vrot.lane.b32.xlu0 %v641, 32
        %v1042 = vpop.permute.xlu0 %1041
        %1043 = vrot.lane.b32.xlu0 %v642, 32
        %v1044 = vpop.permute.xlu0 %1043
        %1045 = vrot.lane.b32.xlu0 %v643, 32
        %v1046 = vpop.permute.xlu0 %1045
        %1047 = vrot.lane.b32.xlu0 %v644, 32
        %v1048 = vpop.permute.xlu0 %1047
        %1049 = vrot.lane.b32.xlu0 %v645, 32
        %v1050 = vpop.permute.xlu0 %1049
        %s1067 = scalar_lea.vmem %s241, 192 [#allocation7]
        %1068 = vst.msk [vmem:[%s1067] sm:$0xf] %vm662, %v1020
        %1069 = vst.msk [vmem:[%s1067 + $0x4] sm:$0xf] %vm662, %v1022
        %1070 = vst.msk [vmem:[%s1067 + $0x8] sm:$0xf] %vm662, %v1024
        %1071 = vst.msk [vmem:[%s1067 + $0xc] sm:$0xf] %vm662, %v1026
        %1072 = vst.msk [vmem:[%s1067 + $0x10] sm:$0xf] %vm662, %v1028
        %1073 = vst.msk [vmem:[%s1067 + $0x14] sm:$0xf] %vm662, %v1030
        %1074 = vst.msk [vmem:[%s1067 + $0x18] sm:$0xf] %vm662, %v1032
        %1075 = vst.msk [vmem:[%s1067 + $0x1c] sm:$0xf] %vm662, %v1034
        %1076 = vst.msk [vmem:[%s1067 + $0x20] sm:$0xf] %vm662, %v1036
        %1077 = vst.msk [vmem:[%s1067 + $0x24] sm:$0xf] %vm662, %v1038
        %1078 = vst.msk [vmem:[%s1067 + $0x28] sm:$0xf] %vm662, %v1040
        %1079 = vst.msk [vmem:[%s1067 + $0x2c] sm:$0xf] %vm662, %v1042
        %1080 = vst.msk [vmem:[%s1067 + $0x30] sm:$0xf] %vm662, %v1044
        %1081 = vst.msk [vmem:[%s1067 + $0x34] sm:$0xf] %vm662, %v1046
        %1082 = vst.msk [vmem:[%s1067 + $0x38] sm:$0xf] %vm662, %v1048
        %1083 = vst.msk [vmem:[%s1067 + $0x3c] sm:$0xf] %vm662, %v1050
        %1084 = vrot.lane.b32.xlu0 %v711, 32
        %v1085 = vpop.permute.xlu0 %1084
        %1086 = vrot.lane.b32.xlu0 %v712, 32
        %v1087 = vpop.permute.xlu0 %1086
        %1088 = vrot.lane.b32.xlu0 %v713, 32
        %v1089 = vpop.permute.xlu0 %1088
        %1090 = vrot.lane.b32.xlu0 %v714, 32
        %v1091 = vpop.permute.xlu0 %1090
        %1092 = vrot.lane.b32.xlu0 %v715, 32
        %v1093 = vpop.permute.xlu0 %1092
        %1094 = vrot.lane.b32.xlu0 %v716, 32
        %v1095 = vpop.permute.xlu0 %1094
        %1096 = vrot.lane.b32.xlu0 %v717, 32
        %v1097 = vpop.permute.xlu0 %1096
        %1098 = vrot.lane.b32.xlu0 %v718, 32
        %v1099 = vpop.permute.xlu0 %1098
        %1100 = vrot.lane.b32.xlu0 %v719, 32
        %v1101 = vpop.permute.xlu0 %1100
        %1102 = vrot.lane.b32.xlu0 %v720, 32
        %v1103 = vpop.permute.xlu0 %1102
        %1104 = vrot.lane.b32.xlu0 %v721, 32
        %v1105 = vpop.permute.xlu0 %1104
        %1106 = vrot.lane.b32.xlu0 %v722, 32
        %v1107 = vpop.permute.xlu0 %1106
        %1108 = vrot.lane.b32.xlu0 %v723, 32
        %v1109 = vpop.permute.xlu0 %1108
        %1110 = vrot.lane.b32.xlu0 %v724, 32
        %v1111 = vpop.permute.xlu0 %1110
        %1112 = vrot.lane.b32.xlu0 %v725, 32
        %v1113 = vpop.permute.xlu0 %1112
        %1114 = vrot.lane.b32.xlu0 %v726, 32
        %v1115 = vpop.permute.xlu0 %1114
        %s1132 = scalar_lea.vmem %s247, 192 [#allocation8]
        %1133 = vst.msk [vmem:[%s1132] sm:$0xf] %vm662, %v1085
        %1134 = vst.msk [vmem:[%s1132 + $0x4] sm:$0xf] %vm662, %v1087
        %1135 = vst.msk [vmem:[%s1132 + $0x8] sm:$0xf] %vm662, %v1089
        %1136 = vst.msk [vmem:[%s1132 + $0xc] sm:$0xf] %vm662, %v1091
        %1137 = vst.msk [vmem:[%s1132 + $0x10] sm:$0xf] %vm662, %v1093
        %1138 = vst.msk [vmem:[%s1132 + $0x14] sm:$0xf] %vm662, %v1095
        %1139 = vst.msk [vmem:[%s1132 + $0x18] sm:$0xf] %vm662, %v1097
        %1140 = vst.msk [vmem:[%s1132 + $0x1c] sm:$0xf] %vm662, %v1099
        %1141 = vst.msk [vmem:[%s1132 + $0x20] sm:$0xf] %vm662, %v1101
        %1142 = vst.msk [vmem:[%s1132 + $0x24] sm:$0xf] %vm662, %v1103
        %1143 = vst.msk [vmem:[%s1132 + $0x28] sm:$0xf] %vm662, %v1105
        %1144 = vst.msk [vmem:[%s1132 + $0x2c] sm:$0xf] %vm662, %v1107
        %1145 = vst.msk [vmem:[%s1132 + $0x30] sm:$0xf] %vm662, %v1109
        %1146 = vst.msk [vmem:[%s1132 + $0x34] sm:$0xf] %vm662, %v1111
        %1147 = vst.msk [vmem:[%s1132 + $0x38] sm:$0xf] %vm662, %v1113
        %1148 = vst.msk [vmem:[%s1132 + $0x3c] sm:$0xf] %vm662, %v1115
        %s1149 = sand.u32 %s96, 1
        %s1150 = sand.u32 %s96, 1
        %s1151 = smul.addr %s1150, 256
        %s1152 = scalar_lea.vmem [#allocation7], %s1151
        %s1153 = sand.u32 %s122, 1
        %s1154 = sand.u32 %s122, 1
        %s1155 = smul.addr %s1154, 256
        %s1156 = scalar_lea.vmem [#allocation8], %s1155
        // Predicated region
        $region45: #{tpu_custom_call.1} parent=31 // pred_check
          %p1157 = pneg %p106
        $region46: #{tpu_custom_call.1} parent=31 // pred_check_branch
          %1159 = sbr.rel (%p1157) target = $region48
        $region47: #{tpu_custom_call.1} parent=31 // pred_region
          %s1160 = smul.u32 16, %s20
          %s1161 = smul.addr %s1160, 4
          %s1162 = scalar_lea.vmem %s3, %s1161
          // Predicated region
          $region49: #{tpu_custom_call.1} parent=47 // pred_check
            _
          $region50: #{tpu_custom_call.1} parent=47 // pred_check_branch
            %1164 = sbr.rel (0) target = $region52
          $region51: #{tpu_custom_call.1} parent=47 // pred_region
            // Predicated region
            $region53: #{tpu_custom_call.1} parent=51 // pred_check
              _
            $region54: #{tpu_custom_call.1} parent=51 // pred_check_branch
              %1166 = sbr.rel target = $region56
            $region55: #{tpu_custom_call.1} parent=51 // pred_region
              // Predicated region
              $region68: #{tpu_custom_call.1} parent=55 // pred_check
                _
              $region69: #{tpu_custom_call.1} parent=55 // pred_check_branch
                %1307 = sbr.rel (0) target = $region71
              $region70: #{tpu_custom_call.1} parent=55 // pred_region
                loop: start=0, step=1, limit=1
                $region72: #{tpu_custom_call.1} parent=70 // loop_pre_header
                  _
                $region73: #{tpu_custom_call.1} parent=70 // loop_header
                  %s1309 = sphi 0, %s1313
                  %p1310 = scmp.ge.s32.totalorder %s1309, 1
                  %s1314 = sphi %s1152, %s1152
                  %s1315 = sphi %s1162, %s1162
                $region74: #{tpu_custom_call.1} parent=70 // loop_header_branch
                  %1312 = sbr.rel (%p1310) target = $region78
                $region75: #{tpu_custom_call.1} parent=70 // loop_body
                  _
                $region76: #{tpu_custom_call.1} parent=70 // loop_footer
                  %s1313 = sadd.s32 1, %s1309
                $region77: #{tpu_custom_call.1} parent=70 // loop_footer_branch
                  %1308 = sbr.rel target = $region73
                $region78: #{tpu_custom_call.1} parent=70 // loop_exit
                  _
                loop: start=0, step=1, limit=1
                $region79: #{tpu_custom_call.1} parent=70 // loop_pre_header
                  _
                $region80: #{tpu_custom_call.1} parent=70 // loop_header
                  %s1318 = sphi 0, %s1322
                  %p1319 = scmp.ge.s32.totalorder %s1318, 1
                  %s1323 = sphi %s1152, %s1152
                  %s1324 = sphi %s1162, %s1162
                $region81: #{tpu_custom_call.1} parent=70 // loop_header_branch
                  %1321 = sbr.rel (%p1319) target = $region85
                $region82: #{tpu_custom_call.1} parent=70 // loop_body
                  %v1325 = vld [vmem:[%s1323] sm:$0xf]
                  %1326 = vst [vmem:[%s1324] sm:$0xf] %v1325
                  %v1327 = vld [vmem:[%s1323 + $0x4] sm:$0xf]
                  %1328 = vst [vmem:[%s1324 + $0x4] sm:$0xf] %v1327
                  %v1329 = vld [vmem:[%s1323 + $0x8] sm:$0xf]
                  %1330 = vst [vmem:[%s1324 + $0x8] sm:$0xf] %v1329
                  %v1331 = vld [vmem:[%s1323 + $0xc] sm:$0xf]
                  %1332 = vst [vmem:[%s1324 + $0xc] sm:$0xf] %v1331
                  %v1333 = vld [vmem:[%s1323 + $0x10] sm:$0xf]
                  %1334 = vst [vmem:[%s1324 + $0x10] sm:$0xf] %v1333
                  %v1335 = vld [vmem:[%s1323 + $0x14] sm:$0xf]
                  %1336 = vst [vmem:[%s1324 + $0x14] sm:$0xf] %v1335
                  %v1337 = vld [vmem:[%s1323 + $0x18] sm:$0xf]
                  %1338 = vst [vmem:[%s1324 + $0x18] sm:$0xf] %v1337
                  %v1339 = vld [vmem:[%s1323 + $0x1c] sm:$0xf]
                  %1340 = vst [vmem:[%s1324 + $0x1c] sm:$0xf] %v1339
                  %v1341 = vld [vmem:[%s1323 + $0x20] sm:$0xf]
                  %1342 = vst [vmem:[%s1324 + $0x20] sm:$0xf] %v1341
                  %v1343 = vld [vmem:[%s1323 + $0x24] sm:$0xf]
                  %1344 = vst [vmem:[%s1324 + $0x24] sm:$0xf] %v1343
                  %v1345 = vld [vmem:[%s1323 + $0x28] sm:$0xf]
                  %1346 = vst [vmem:[%s1324 + $0x28] sm:$0xf] %v1345
                  %v1347 = vld [vmem:[%s1323 + $0x2c] sm:$0xf]
                  %1348 = vst [vmem:[%s1324 + $0x2c] sm:$0xf] %v1347
                  %v1349 = vld [vmem:[%s1323 + $0x30] sm:$0xf]
                  %1350 = vst [vmem:[%s1324 + $0x30] sm:$0xf] %v1349
                  %v1351 = vld [vmem:[%s1323 + $0x34] sm:$0xf]
                  %1352 = vst [vmem:[%s1324 + $0x34] sm:$0xf] %v1351
                  %v1353 = vld [vmem:[%s1323 + $0x38] sm:$0xf]
                  %1354 = vst [vmem:[%s1324 + $0x38] sm:$0xf] %v1353
                  %v1355 = vld [vmem:[%s1323 + $0x3c] sm:$0xf]
                  %1356 = vst [vmem:[%s1324 + $0x3c] sm:$0xf] %v1355
                  %v1357 = vld [vmem:[%s1323 + $0x40] sm:$0xf]
                  %1358 = vst [vmem:[%s1324 + $0x80] sm:$0xf] %v1357
                  %v1359 = vld [vmem:[%s1323 + $0x44] sm:$0xf]
                  %1360 = vst [vmem:[%s1324 + $0x84] sm:$0xf] %v1359
                  %v1361 = vld [vmem:[%s1323 + $0x48] sm:$0xf]
                  %1362 = vst [vmem:[%s1324 + $0x88] sm:$0xf] %v1361
                  %v1363 = vld [vmem:[%s1323 + $0x4c] sm:$0xf]
                  %1364 = vst [vmem:[%s1324 + $0x8c] sm:$0xf] %v1363
                  %v1365 = vld [vmem:[%s1323 + $0x50] sm:$0xf]
                  %1366 = vst [vmem:[%s1324 + $0x90] sm:$0xf] %v1365
                  %v1367 = vld [vmem:[%s1323 + $0x54] sm:$0xf]
                  %1368 = vst [vmem:[%s1324 + $0x94] sm:$0xf] %v1367
                  %v1369 = vld [vmem:[%s1323 + $0x58] sm:$0xf]
                  %1370 = vst [vmem:[%s1324 + $0x98] sm:$0xf] %v1369
                  %v1371 = vld [vmem:[%s1323 + $0x5c] sm:$0xf]
                  %1372 = vst [vmem:[%s1324 + $0x9c] sm:$0xf] %v1371
                  %v1373 = vld [vmem:[%s1323 + $0x60] sm:$0xf]
                  %1374 = vst [vmem:[%s1324 + $0xa0] sm:$0xf] %v1373
                  %v1375 = vld [vmem:[%s1323 + $0x64] sm:$0xf]
                  %1376 = vst [vmem:[%s1324 + $0xa4] sm:$0xf] %v1375
                  %v1377 = vld [vmem:[%s1323 + $0x68] sm:$0xf]
                  %1378 = vst [vmem:[%s1324 + $0xa8] sm:$0xf] %v1377
                  %v1379 = vld [vmem:[%s1323 + $0x6c] sm:$0xf]
                  %1380 = vst [vmem:[%s1324 + $0xac] sm:$0xf] %v1379
                  %v1381 = vld [vmem:[%s1323 + $0x70] sm:$0xf]
                  %1382 = vst [vmem:[%s1324 + $0xb0] sm:$0xf] %v1381
                  %v1383 = vld [vmem:[%s1323 + $0x74] sm:$0xf]
                  %1384 = vst [vmem:[%s1324 + $0xb4] sm:$0xf] %v1383
                  %v1385 = vld [vmem:[%s1323 + $0x78] sm:$0xf]
                  %1386 = vst [vmem:[%s1324 + $0xb8] sm:$0xf] %v1385
                  %v1387 = vld [vmem:[%s1323 + $0x7c] sm:$0xf]
                  %1388 = vst [vmem:[%s1324 + $0xbc] sm:$0xf] %v1387
                  %v1389 = vld [vmem:[%s1323 + $0x80] sm:$0xf]
                  %1390 = vst [vmem:[%s1324 + $0x100] sm:$0xf] %v1389
                  %v1391 = vld [vmem:[%s1323 + $0x84] sm:$0xf]
                  %1392 = vst [vmem:[%s1324 + $0x104] sm:$0xf] %v1391
                  %v1393 = vld [vmem:[%s1323 + $0x88] sm:$0xf]
                  %1394 = vst [vmem:[%s1324 + $0x108] sm:$0xf] %v1393
                  %v1395 = vld [vmem:[%s1323 + $0x8c] sm:$0xf]
                  %1396 = vst [vmem:[%s1324 + $0x10c] sm:$0xf] %v1395
                  %v1397 = vld [vmem:[%s1323 + $0x90] sm:$0xf]
                  %1398 = vst [vmem:[%s1324 + $0x110] sm:$0xf] %v1397
                  %v1399 = vld [vmem:[%s1323 + $0x94] sm:$0xf]
                  %1400 = vst [vmem:[%s1324 + $0x114] sm:$0xf] %v1399
                  %v1401 = vld [vmem:[%s1323 + $0x98] sm:$0xf]
                  %1402 = vst [vmem:[%s1324 + $0x118] sm:$0xf] %v1401
                  %v1403 = vld [vmem:[%s1323 + $0x9c] sm:$0xf]
                  %1404 = vst [vmem:[%s1324 + $0x11c] sm:$0xf] %v1403
                  %v1405 = vld [vmem:[%s1323 + $0xa0] sm:$0xf]
                  %1406 = vst [vmem:[%s1324 + $0x120] sm:$0xf] %v1405
                  %v1407 = vld [vmem:[%s1323 + $0xa4] sm:$0xf]
                  %1408 = vst [vmem:[%s1324 + $0x124] sm:$0xf] %v1407
                  %v1409 = vld [vmem:[%s1323 + $0xa8] sm:$0xf]
                  %1410 = vst [vmem:[%s1324 + $0x128] sm:$0xf] %v1409
                  %v1411 = vld [vmem:[%s1323 + $0xac] sm:$0xf]
                  %1412 = vst [vmem:[%s1324 + $0x12c] sm:$0xf] %v1411
                  %v1413 = vld [vmem:[%s1323 + $0xb0] sm:$0xf]
                  %1414 = vst [vmem:[%s1324 + $0x130] sm:$0xf] %v1413
                  %v1415 = vld [vmem:[%s1323 + $0xb4] sm:$0xf]
                  %1416 = vst [vmem:[%s1324 + $0x134] sm:$0xf] %v1415
                  %v1417 = vld [vmem:[%s1323 + $0xb8] sm:$0xf]
                  %1418 = vst [vmem:[%s1324 + $0x138] sm:$0xf] %v1417
                  %v1419 = vld [vmem:[%s1323 + $0xbc] sm:$0xf]
                  %1420 = vst [vmem:[%s1324 + $0x13c] sm:$0xf] %v1419
                  %v1421 = vld [vmem:[%s1323 + $0xc0] sm:$0xf]
                  %1422 = vst [vmem:[%s1324 + $0x180] sm:$0xf] %v1421
                  %v1423 = vld [vmem:[%s1323 + $0xc4] sm:$0xf]
                  %1424 = vst [vmem:[%s1324 + $0x184] sm:$0xf] %v1423
                  %v1425 = vld [vmem:[%s1323 + $0xc8] sm:$0xf]
                  %1426 = vst [vmem:[%s1324 + $0x188] sm:$0xf] %v1425
                  %v1427 = vld [vmem:[%s1323 + $0xcc] sm:$0xf]
                  %1428 = vst [vmem:[%s1324 + $0x18c] sm:$0xf] %v1427
                  %v1429 = vld [vmem:[%s1323 + $0xd0] sm:$0xf]
                  %1430 = vst [vmem:[%s1324 + $0x190] sm:$0xf] %v1429
                  %v1431 = vld [vmem:[%s1323 + $0xd4] sm:$0xf]
                  %1432 = vst [vmem:[%s1324 + $0x194] sm:$0xf] %v1431
                  %v1433 = vld [vmem:[%s1323 + $0xd8] sm:$0xf]
                  %1434 = vst [vmem:[%s1324 + $0x198] sm:$0xf] %v1433
                  %v1435 = vld [vmem:[%s1323 + $0xdc] sm:$0xf]
                  %1436 = vst [vmem:[%s1324 + $0x19c] sm:$0xf] %v1435
                  %v1437 = vld [vmem:[%s1323 + $0xe0] sm:$0xf]
                  %1438 = vst [vmem:[%s1324 + $0x1a0] sm:$0xf] %v1437
                  %v1439 = vld [vmem:[%s1323 + $0xe4] sm:$0xf]
                  %1440 = vst [vmem:[%s1324 + $0x1a4] sm:$0xf] %v1439
                  %v1441 = vld [vmem:[%s1323 + $0xe8] sm:$0xf]
                  %1442 = vst [vmem:[%s1324 + $0x1a8] sm:$0xf] %v1441
                  %v1443 = vld [vmem:[%s1323 + $0xec] sm:$0xf]
                  %1444 = vst [vmem:[%s1324 + $0x1ac] sm:$0xf] %v1443
                  %v1445 = vld [vmem:[%s1323 + $0xf0] sm:$0xf]
                  %1446 = vst [vmem:[%s1324 + $0x1b0] sm:$0xf] %v1445
                  %v1447 = vld [vmem:[%s1323 + $0xf4] sm:$0xf]
                  %1448 = vst [vmem:[%s1324 + $0x1b4] sm:$0xf] %v1447
                  %v1449 = vld [vmem:[%s1323 + $0xf8] sm:$0xf]
                  %1450 = vst [vmem:[%s1324 + $0x1b8] sm:$0xf] %v1449
                  %v1451 = vld [vmem:[%s1323 + $0xfc] sm:$0xf]
                  %1452 = vst [vmem:[%s1324 + $0x1bc] sm:$0xf] %v1451
                $region83: #{tpu_custom_call.1} parent=70 // loop_footer
                  %s1322 = sadd.s32 1, %s1318
                $region84: #{tpu_custom_call.1} parent=70 // loop_footer_branch
                  %1317 = sbr.rel target = $region80
                $region85: #{tpu_custom_call.1} parent=70 // loop_exit
                  _
              $region71: #{tpu_custom_call.1} parent=55 // pred_fallthru
                _
            $region56: #{tpu_custom_call.1} parent=51 // pred_fallthru
              _
            // Predicated region
            $region57: #{tpu_custom_call.1} parent=51 // pred_check
              _
            $region58: #{tpu_custom_call.1} parent=51 // pred_check_branch
              %1168 = sbr.rel (0) target = $region60
            $region59: #{tpu_custom_call.1} parent=51 // pred_region
              loop: start=0, step=1, limit=1
              $region61: #{tpu_custom_call.1} parent=59 // loop_pre_header
                _
              $region62: #{tpu_custom_call.1} parent=59 // loop_header
                %s1171 = sphi 0, %s1175
                %p1172 = scmp.ge.s32.totalorder %s1171, 1
                %s1176 = sphi %s1152, %s1152
                %s1177 = sphi %s1162, %s1162
              $region63: #{tpu_custom_call.1} parent=59 // loop_header_branch
                %1174 = sbr.rel (%p1172) target = $region67
              $region64: #{tpu_custom_call.1} parent=59 // loop_body
                %v1178 = vld [vmem:[%s1176] sm:$0xf]
                %1179 = vst [vmem:[%s1177] sm:$0xf] %v1178
                %v1180 = vld [vmem:[%s1176 + $0x4] sm:$0xf]
                %1181 = vst [vmem:[%s1177 + $0x4] sm:$0xf] %v1180
                %v1182 = vld [vmem:[%s1176 + $0x8] sm:$0xf]
                %1183 = vst [vmem:[%s1177 + $0x8] sm:$0xf] %v1182
                %v1184 = vld [vmem:[%s1176 + $0xc] sm:$0xf]
                %1185 = vst [vmem:[%s1177 + $0xc] sm:$0xf] %v1184
                %v1186 = vld [vmem:[%s1176 + $0x10] sm:$0xf]
                %1187 = vst [vmem:[%s1177 + $0x10] sm:$0xf] %v1186
                %v1188 = vld [vmem:[%s1176 + $0x14] sm:$0xf]
                %1189 = vst [vmem:[%s1177 + $0x14] sm:$0xf] %v1188
                %v1190 = vld [vmem:[%s1176 + $0x18] sm:$0xf]
                %1191 = vst [vmem:[%s1177 + $0x18] sm:$0xf] %v1190
                %v1192 = vld [vmem:[%s1176 + $0x1c] sm:$0xf]
                %1193 = vst [vmem:[%s1177 + $0x1c] sm:$0xf] %v1192
                %v1194 = vld [vmem:[%s1176 + $0x20] sm:$0xf]
                %1195 = vst [vmem:[%s1177 + $0x20] sm:$0xf] %v1194
                %v1196 = vld [vmem:[%s1176 + $0x24] sm:$0xf]
                %1197 = vst [vmem:[%s1177 + $0x24] sm:$0xf] %v1196
                %v1198 = vld [vmem:[%s1176 + $0x28] sm:$0xf]
                %1199 = vst [vmem:[%s1177 + $0x28] sm:$0xf] %v1198
                %v1200 = vld [vmem:[%s1176 + $0x2c] sm:$0xf]
                %1201 = vst [vmem:[%s1177 + $0x2c] sm:$0xf] %v1200
                %v1202 = vld [vmem:[%s1176 + $0x30] sm:$0xf]
                %1203 = vst [vmem:[%s1177 + $0x30] sm:$0xf] %v1202
                %v1204 = vld [vmem:[%s1176 + $0x34] sm:$0xf]
                %1205 = vst [vmem:[%s1177 + $0x34] sm:$0xf] %v1204
                %v1206 = vld [vmem:[%s1176 + $0x38] sm:$0xf]
                %1207 = vst [vmem:[%s1177 + $0x38] sm:$0xf] %v1206
                %v1208 = vld [vmem:[%s1176 + $0x3c] sm:$0xf]
                %1209 = vst [vmem:[%s1177 + $0x3c] sm:$0xf] %v1208
                %v1210 = vld [vmem:[%s1176 + $0x40] sm:$0xf]
                %1211 = vst [vmem:[%s1177 + $0x80] sm:$0xf] %v1210
                %v1212 = vld [vmem:[%s1176 + $0x44] sm:$0xf]
                %1213 = vst [vmem:[%s1177 + $0x84] sm:$0xf] %v1212
                %v1214 = vld [vmem:[%s1176 + $0x48] sm:$0xf]
                %1215 = vst [vmem:[%s1177 + $0x88] sm:$0xf] %v1214
                %v1216 = vld [vmem:[%s1176 + $0x4c] sm:$0xf]
                %1217 = vst [vmem:[%s1177 + $0x8c] sm:$0xf] %v1216
                %v1218 = vld [vmem:[%s1176 + $0x50] sm:$0xf]
                %1219 = vst [vmem:[%s1177 + $0x90] sm:$0xf] %v1218
                %v1220 = vld [vmem:[%s1176 + $0x54] sm:$0xf]
                %1221 = vst [vmem:[%s1177 + $0x94] sm:$0xf] %v1220
                %v1222 = vld [vmem:[%s1176 + $0x58] sm:$0xf]
                %1223 = vst [vmem:[%s1177 + $0x98] sm:$0xf] %v1222
                %v1224 = vld [vmem:[%s1176 + $0x5c] sm:$0xf]
                %1225 = vst [vmem:[%s1177 + $0x9c] sm:$0xf] %v1224
                %v1226 = vld [vmem:[%s1176 + $0x60] sm:$0xf]
                %1227 = vst [vmem:[%s1177 + $0xa0] sm:$0xf] %v1226
                %v1228 = vld [vmem:[%s1176 + $0x64] sm:$0xf]
                %1229 = vst [vmem:[%s1177 + $0xa4] sm:$0xf] %v1228
                %v1230 = vld [vmem:[%s1176 + $0x68] sm:$0xf]
                %1231 = vst [vmem:[%s1177 + $0xa8] sm:$0xf] %v1230
                %v1232 = vld [vmem:[%s1176 + $0x6c] sm:$0xf]
                %1233 = vst [vmem:[%s1177 + $0xac] sm:$0xf] %v1232
                %v1234 = vld [vmem:[%s1176 + $0x70] sm:$0xf]
                %1235 = vst [vmem:[%s1177 + $0xb0] sm:$0xf] %v1234
                %v1236 = vld [vmem:[%s1176 + $0x74] sm:$0xf]
                %1237 = vst [vmem:[%s1177 + $0xb4] sm:$0xf] %v1236
                %v1238 = vld [vmem:[%s1176 + $0x78] sm:$0xf]
                %1239 = vst [vmem:[%s1177 + $0xb8] sm:$0xf] %v1238
                %v1240 = vld [vmem:[%s1176 + $0x7c] sm:$0xf]
                %1241 = vst [vmem:[%s1177 + $0xbc] sm:$0xf] %v1240
                %v1242 = vld [vmem:[%s1176 + $0x80] sm:$0xf]
                %1243 = vst [vmem:[%s1177 + $0x100] sm:$0xf] %v1242
                %v1244 = vld [vmem:[%s1176 + $0x84] sm:$0xf]
                %1245 = vst [vmem:[%s1177 + $0x104] sm:$0xf] %v1244
                %v1246 = vld [vmem:[%s1176 + $0x88] sm:$0xf]
                %1247 = vst [vmem:[%s1177 + $0x108] sm:$0xf] %v1246
                %v1248 = vld [vmem:[%s1176 + $0x8c] sm:$0xf]
                %1249 = vst [vmem:[%s1177 + $0x10c] sm:$0xf] %v1248
                %v1250 = vld [vmem:[%s1176 + $0x90] sm:$0xf]
                %1251 = vst [vmem:[%s1177 + $0x110] sm:$0xf] %v1250
                %v1252 = vld [vmem:[%s1176 + $0x94] sm:$0xf]
                %1253 = vst [vmem:[%s1177 + $0x114] sm:$0xf] %v1252
                %v1254 = vld [vmem:[%s1176 + $0x98] sm:$0xf]
                %1255 = vst [vmem:[%s1177 + $0x118] sm:$0xf] %v1254
                %v1256 = vld [vmem:[%s1176 + $0x9c] sm:$0xf]
                %1257 = vst [vmem:[%s1177 + $0x11c] sm:$0xf] %v1256
                %v1258 = vld [vmem:[%s1176 + $0xa0] sm:$0xf]
                %1259 = vst [vmem:[%s1177 + $0x120] sm:$0xf] %v1258
                %v1260 = vld [vmem:[%s1176 + $0xa4] sm:$0xf]
                %1261 = vst [vmem:[%s1177 + $0x124] sm:$0xf] %v1260
                %v1262 = vld [vmem:[%s1176 + $0xa8] sm:$0xf]
                %1263 = vst [vmem:[%s1177 + $0x128] sm:$0xf] %v1262
                %v1264 = vld [vmem:[%s1176 + $0xac] sm:$0xf]
                %1265 = vst [vmem:[%s1177 + $0x12c] sm:$0xf] %v1264
                %v1266 = vld [vmem:[%s1176 + $0xb0] sm:$0xf]
                %1267 = vst [vmem:[%s1177 + $0x130] sm:$0xf] %v1266
                %v1268 = vld [vmem:[%s1176 + $0xb4] sm:$0xf]
                %1269 = vst [vmem:[%s1177 + $0x134] sm:$0xf] %v1268
                %v1270 = vld [vmem:[%s1176 + $0xb8] sm:$0xf]
                %1271 = vst [vmem:[%s1177 + $0x138] sm:$0xf] %v1270
                %v1272 = vld [vmem:[%s1176 + $0xbc] sm:$0xf]
                %1273 = vst [vmem:[%s1177 + $0x13c] sm:$0xf] %v1272
                %v1274 = vld [vmem:[%s1176 + $0xc0] sm:$0xf]
                %1275 = vst [vmem:[%s1177 + $0x180] sm:$0xf] %v1274
                %v1276 = vld [vmem:[%s1176 + $0xc4] sm:$0xf]
                %1277 = vst [vmem:[%s1177 + $0x184] sm:$0xf] %v1276
                %v1278 = vld [vmem:[%s1176 + $0xc8] sm:$0xf]
                %1279 = vst [vmem:[%s1177 + $0x188] sm:$0xf] %v1278
                %v1280 = vld [vmem:[%s1176 + $0xcc] sm:$0xf]
                %1281 = vst [vmem:[%s1177 + $0x18c] sm:$0xf] %v1280
                %v1282 = vld [vmem:[%s1176 + $0xd0] sm:$0xf]
                %1283 = vst [vmem:[%s1177 + $0x190] sm:$0xf] %v1282
                %v1284 = vld [vmem:[%s1176 + $0xd4] sm:$0xf]
                %1285 = vst [vmem:[%s1177 + $0x194] sm:$0xf] %v1284
                %v1286 = vld [vmem:[%s1176 + $0xd8] sm:$0xf]
                %1287 = vst [vmem:[%s1177 + $0x198] sm:$0xf] %v1286
                %v1288 = vld [vmem:[%s1176 + $0xdc] sm:$0xf]
                %1289 = vst [vmem:[%s1177 + $0x19c] sm:$0xf] %v1288
                %v1290 = vld [vmem:[%s1176 + $0xe0] sm:$0xf]
                %1291 = vst [vmem:[%s1177 + $0x1a0] sm:$0xf] %v1290
                %v1292 = vld [vmem:[%s1176 + $0xe4] sm:$0xf]
                %1293 = vst [vmem:[%s1177 + $0x1a4] sm:$0xf] %v1292
                %v1294 = vld [vmem:[%s1176 + $0xe8] sm:$0xf]
                %1295 = vst [vmem:[%s1177 + $0x1a8] sm:$0xf] %v1294
                %v1296 = vld [vmem:[%s1176 + $0xec] sm:$0xf]
                %1297 = vst [vmem:[%s1177 + $0x1ac] sm:$0xf] %v1296
                %v1298 = vld [vmem:[%s1176 + $0xf0] sm:$0xf]
                %1299 = vst [vmem:[%s1177 + $0x1b0] sm:$0xf] %v1298
                %v1300 = vld [vmem:[%s1176 + $0xf4] sm:$0xf]
                %1301 = vst [vmem:[%s1177 + $0x1b4] sm:$0xf] %v1300
                %v1302 = vld [vmem:[%s1176 + $0xf8] sm:$0xf]
                %1303 = vst [vmem:[%s1177 + $0x1b8] sm:$0xf] %v1302
                %v1304 = vld [vmem:[%s1176 + $0xfc] sm:$0xf]
                %1305 = vst [vmem:[%s1177 + $0x1bc] sm:$0xf] %v1304
              $region65: #{tpu_custom_call.1} parent=59 // loop_footer
                %s1175 = sadd.s32 1, %s1171
              $region66: #{tpu_custom_call.1} parent=59 // loop_footer_branch
                %1170 = sbr.rel target = $region62
              $region67: #{tpu_custom_call.1} parent=59 // loop_exit
                _
            $region60: #{tpu_custom_call.1} parent=51 // pred_fallthru
              _
          $region52: #{tpu_custom_call.1} parent=47 // pred_fallthru
            _
          %1453 = vnop
        $region48: #{tpu_custom_call.1} parent=31 // pred_fallthru
          _
        // Predicated region
        $region86: #{tpu_custom_call.1} parent=31 // pred_check
          %p1454 = pneg %p132
        $region87: #{tpu_custom_call.1} parent=31 // pred_check_branch
          %1456 = sbr.rel (%p1454) target = $region89
        $region88: #{tpu_custom_call.1} parent=31 // pred_region
          %s1457 = smul.u32 16, %s20
          %s1458 = smul.addr %s1457, 4
          %s1459 = scalar_lea.vmem %s4, %s1458
          // Predicated region
          $region90: #{tpu_custom_call.1} parent=88 // pred_check
            _
          $region91: #{tpu_custom_call.1} parent=88 // pred_check_branch
            %1461 = sbr.rel (0) target = $region93
          $region92: #{tpu_custom_call.1} parent=88 // pred_region
            // Predicated region
            $region94: #{tpu_custom_call.1} parent=92 // pred_check
              _
            $region95: #{tpu_custom_call.1} parent=92 // pred_check_branch
              %1463 = sbr.rel target = $region97
            $region96: #{tpu_custom_call.1} parent=92 // pred_region
              // Predicated region
              $region109: #{tpu_custom_call.1} parent=96 // pred_check
                _
              $region110: #{tpu_custom_call.1} parent=96 // pred_check_branch
                %1604 = sbr.rel (0) target = $region112
              $region111: #{tpu_custom_call.1} parent=96 // pred_region
                loop: start=0, step=1, limit=1
                $region113: #{tpu_custom_call.1} parent=111 // loop_pre_header
                  _
                $region114: #{tpu_custom_call.1} parent=111 // loop_header
                  %s1606 = sphi 0, %s1610
                  %p1607 = scmp.ge.s32.totalorder %s1606, 1
                  %s1611 = sphi %s1156, %s1156
                  %s1612 = sphi %s1459, %s1459
                $region115: #{tpu_custom_call.1} parent=111 // loop_header_branch
                  %1609 = sbr.rel (%p1607) target = $region119
                $region116: #{tpu_custom_call.1} parent=111 // loop_body
                  _
                $region117: #{tpu_custom_call.1} parent=111 // loop_footer
                  %s1610 = sadd.s32 1, %s1606
                $region118: #{tpu_custom_call.1} parent=111 // loop_footer_branch
                  %1605 = sbr.rel target = $region114
                $region119: #{tpu_custom_call.1} parent=111 // loop_exit
                  _
                loop: start=0, step=1, limit=1
                $region120: #{tpu_custom_call.1} parent=111 // loop_pre_header
                  _
                $region121: #{tpu_custom_call.1} parent=111 // loop_header
                  %s1615 = sphi 0, %s1619
                  %p1616 = scmp.ge.s32.totalorder %s1615, 1
                  %s1620 = sphi %s1156, %s1156
                  %s1621 = sphi %s1459, %s1459
                $region122: #{tpu_custom_call.1} parent=111 // loop_header_branch
                  %1618 = sbr.rel (%p1616) target = $region126
                $region123: #{tpu_custom_call.1} parent=111 // loop_body
                  %v1622 = vld [vmem:[%s1620] sm:$0xf]
                  %1623 = vst [vmem:[%s1621] sm:$0xf] %v1622
                  %v1624 = vld [vmem:[%s1620 + $0x4] sm:$0xf]
                  %1625 = vst [vmem:[%s1621 + $0x4] sm:$0xf] %v1624
                  %v1626 = vld [vmem:[%s1620 + $0x8] sm:$0xf]
                  %1627 = vst [vmem:[%s1621 + $0x8] sm:$0xf] %v1626
                  %v1628 = vld [vmem:[%s1620 + $0xc] sm:$0xf]
                  %1629 = vst [vmem:[%s1621 + $0xc] sm:$0xf] %v1628
                  %v1630 = vld [vmem:[%s1620 + $0x10] sm:$0xf]
                  %1631 = vst [vmem:[%s1621 + $0x10] sm:$0xf] %v1630
                  %v1632 = vld [vmem:[%s1620 + $0x14] sm:$0xf]
                  %1633 = vst [vmem:[%s1621 + $0x14] sm:$0xf] %v1632
                  %v1634 = vld [vmem:[%s1620 + $0x18] sm:$0xf]
                  %1635 = vst [vmem:[%s1621 + $0x18] sm:$0xf] %v1634
                  %v1636 = vld [vmem:[%s1620 + $0x1c] sm:$0xf]
                  %1637 = vst [vmem:[%s1621 + $0x1c] sm:$0xf] %v1636
                  %v1638 = vld [vmem:[%s1620 + $0x20] sm:$0xf]
                  %1639 = vst [vmem:[%s1621 + $0x20] sm:$0xf] %v1638
                  %v1640 = vld [vmem:[%s1620 + $0x24] sm:$0xf]
                  %1641 = vst [vmem:[%s1621 + $0x24] sm:$0xf] %v1640
                  %v1642 = vld [vmem:[%s1620 + $0x28] sm:$0xf]
                  %1643 = vst [vmem:[%s1621 + $0x28] sm:$0xf] %v1642
                  %v1644 = vld [vmem:[%s1620 + $0x2c] sm:$0xf]
                  %1645 = vst [vmem:[%s1621 + $0x2c] sm:$0xf] %v1644
                  %v1646 = vld [vmem:[%s1620 + $0x30] sm:$0xf]
                  %1647 = vst [vmem:[%s1621 + $0x30] sm:$0xf] %v1646
                  %v1648 = vld [vmem:[%s1620 + $0x34] sm:$0xf]
                  %1649 = vst [vmem:[%s1621 + $0x34] sm:$0xf] %v1648
                  %v1650 = vld [vmem:[%s1620 + $0x38] sm:$0xf]
                  %1651 = vst [vmem:[%s1621 + $0x38] sm:$0xf] %v1650
                  %v1652 = vld [vmem:[%s1620 + $0x3c] sm:$0xf]
                  %1653 = vst [vmem:[%s1621 + $0x3c] sm:$0xf] %v1652
                  %v1654 = vld [vmem:[%s1620 + $0x40] sm:$0xf]
                  %1655 = vst [vmem:[%s1621 + $0x80] sm:$0xf] %v1654
                  %v1656 = vld [vmem:[%s1620 + $0x44] sm:$0xf]
                  %1657 = vst [vmem:[%s1621 + $0x84] sm:$0xf] %v1656
                  %v1658 = vld [vmem:[%s1620 + $0x48] sm:$0xf]
                  %1659 = vst [vmem:[%s1621 + $0x88] sm:$0xf] %v1658
                  %v1660 = vld [vmem:[%s1620 + $0x4c] sm:$0xf]
                  %1661 = vst [vmem:[%s1621 + $0x8c] sm:$0xf] %v1660
                  %v1662 = vld [vmem:[%s1620 + $0x50] sm:$0xf]
                  %1663 = vst [vmem:[%s1621 + $0x90] sm:$0xf] %v1662
                  %v1664 = vld [vmem:[%s1620 + $0x54] sm:$0xf]
                  %1665 = vst [vmem:[%s1621 + $0x94] sm:$0xf] %v1664
                  %v1666 = vld [vmem:[%s1620 + $0x58] sm:$0xf]
                  %1667 = vst [vmem:[%s1621 + $0x98] sm:$0xf] %v1666
                  %v1668 = vld [vmem:[%s1620 + $0x5c] sm:$0xf]
                  %1669 = vst [vmem:[%s1621 + $0x9c] sm:$0xf] %v1668
                  %v1670 = vld [vmem:[%s1620 + $0x60] sm:$0xf]
                  %1671 = vst [vmem:[%s1621 + $0xa0] sm:$0xf] %v1670
                  %v1672 = vld [vmem:[%s1620 + $0x64] sm:$0xf]
                  %1673 = vst [vmem:[%s1621 + $0xa4] sm:$0xf] %v1672
                  %v1674 = vld [vmem:[%s1620 + $0x68] sm:$0xf]
                  %1675 = vst [vmem:[%s1621 + $0xa8] sm:$0xf] %v1674
                  %v1676 = vld [vmem:[%s1620 + $0x6c] sm:$0xf]
                  %1677 = vst [vmem:[%s1621 + $0xac] sm:$0xf] %v1676
                  %v1678 = vld [vmem:[%s1620 + $0x70] sm:$0xf]
                  %1679 = vst [vmem:[%s1621 + $0xb0] sm:$0xf] %v1678
                  %v1680 = vld [vmem:[%s1620 + $0x74] sm:$0xf]
                  %1681 = vst [vmem:[%s1621 + $0xb4] sm:$0xf] %v1680
                  %v1682 = vld [vmem:[%s1620 + $0x78] sm:$0xf]
                  %1683 = vst [vmem:[%s1621 + $0xb8] sm:$0xf] %v1682
                  %v1684 = vld [vmem:[%s1620 + $0x7c] sm:$0xf]
                  %1685 = vst [vmem:[%s1621 + $0xbc] sm:$0xf] %v1684
                  %v1686 = vld [vmem:[%s1620 + $0x80] sm:$0xf]
                  %1687 = vst [vmem:[%s1621 + $0x100] sm:$0xf] %v1686
                  %v1688 = vld [vmem:[%s1620 + $0x84] sm:$0xf]
                  %1689 = vst [vmem:[%s1621 + $0x104] sm:$0xf] %v1688
                  %v1690 = vld [vmem:[%s1620 + $0x88] sm:$0xf]
                  %1691 = vst [vmem:[%s1621 + $0x108] sm:$0xf] %v1690
                  %v1692 = vld [vmem:[%s1620 + $0x8c] sm:$0xf]
                  %1693 = vst [vmem:[%s1621 + $0x10c] sm:$0xf] %v1692
                  %v1694 = vld [vmem:[%s1620 + $0x90] sm:$0xf]
                  %1695 = vst [vmem:[%s1621 + $0x110] sm:$0xf] %v1694
                  %v1696 = vld [vmem:[%s1620 + $0x94] sm:$0xf]
                  %1697 = vst [vmem:[%s1621 + $0x114] sm:$0xf] %v1696
                  %v1698 = vld [vmem:[%s1620 + $0x98] sm:$0xf]
                  %1699 = vst [vmem:[%s1621 + $0x118] sm:$0xf] %v1698
                  %v1700 = vld [vmem:[%s1620 + $0x9c] sm:$0xf]
                  %1701 = vst [vmem:[%s1621 + $0x11c] sm:$0xf] %v1700
                  %v1702 = vld [vmem:[%s1620 + $0xa0] sm:$0xf]
                  %1703 = vst [vmem:[%s1621 + $0x120] sm:$0xf] %v1702
                  %v1704 = vld [vmem:[%s1620 + $0xa4] sm:$0xf]
                  %1705 = vst [vmem:[%s1621 + $0x124] sm:$0xf] %v1704
                  %v1706 = vld [vmem:[%s1620 + $0xa8] sm:$0xf]
                  %1707 = vst [vmem:[%s1621 + $0x128] sm:$0xf] %v1706
                  %v1708 = vld [vmem:[%s1620 + $0xac] sm:$0xf]
                  %1709 = vst [vmem:[%s1621 + $0x12c] sm:$0xf] %v1708
                  %v1710 = vld [vmem:[%s1620 + $0xb0] sm:$0xf]
                  %1711 = vst [vmem:[%s1621 + $0x130] sm:$0xf] %v1710
                  %v1712 = vld [vmem:[%s1620 + $0xb4] sm:$0xf]
                  %1713 = vst [vmem:[%s1621 + $0x134] sm:$0xf] %v1712
                  %v1714 = vld [vmem:[%s1620 + $0xb8] sm:$0xf]
                  %1715 = vst [vmem:[%s1621 + $0x138] sm:$0xf] %v1714
                  %v1716 = vld [vmem:[%s1620 + $0xbc] sm:$0xf]
                  %1717 = vst [vmem:[%s1621 + $0x13c] sm:$0xf] %v1716
                  %v1718 = vld [vmem:[%s1620 + $0xc0] sm:$0xf]
                  %1719 = vst [vmem:[%s1621 + $0x180] sm:$0xf] %v1718
                  %v1720 = vld [vmem:[%s1620 + $0xc4] sm:$0xf]
                  %1721 = vst [vmem:[%s1621 + $0x184] sm:$0xf] %v1720
                  %v1722 = vld [vmem:[%s1620 + $0xc8] sm:$0xf]
                  %1723 = vst [vmem:[%s1621 + $0x188] sm:$0xf] %v1722
                  %v1724 = vld [vmem:[%s1620 + $0xcc] sm:$0xf]
                  %1725 = vst [vmem:[%s1621 + $0x18c] sm:$0xf] %v1724
                  %v1726 = vld [vmem:[%s1620 + $0xd0] sm:$0xf]
                  %1727 = vst [vmem:[%s1621 + $0x190] sm:$0xf] %v1726
                  %v1728 = vld [vmem:[%s1620 + $0xd4] sm:$0xf]
                  %1729 = vst [vmem:[%s1621 + $0x194] sm:$0xf] %v1728
                  %v1730 = vld [vmem:[%s1620 + $0xd8] sm:$0xf]
                  %1731 = vst [vmem:[%s1621 + $0x198] sm:$0xf] %v1730
                  %v1732 = vld [vmem:[%s1620 + $0xdc] sm:$0xf]
                  %1733 = vst [vmem:[%s1621 + $0x19c] sm:$0xf] %v1732
                  %v1734 = vld [vmem:[%s1620 + $0xe0] sm:$0xf]
                  %1735 = vst [vmem:[%s1621 + $0x1a0] sm:$0xf] %v1734
                  %v1736 = vld [vmem:[%s1620 + $0xe4] sm:$0xf]
                  %1737 = vst [vmem:[%s1621 + $0x1a4] sm:$0xf] %v1736
                  %v1738 = vld [vmem:[%s1620 + $0xe8] sm:$0xf]
                  %1739 = vst [vmem:[%s1621 + $0x1a8] sm:$0xf] %v1738
                  %v1740 = vld [vmem:[%s1620 + $0xec] sm:$0xf]
                  %1741 = vst [vmem:[%s1621 + $0x1ac] sm:$0xf] %v1740
                  %v1742 = vld [vmem:[%s1620 + $0xf0] sm:$0xf]
                  %1743 = vst [vmem:[%s1621 + $0x1b0] sm:$0xf] %v1742
                  %v1744 = vld [vmem:[%s1620 + $0xf4] sm:$0xf]
                  %1745 = vst [vmem:[%s1621 + $0x1b4] sm:$0xf] %v1744
                  %v1746 = vld [vmem:[%s1620 + $0xf8] sm:$0xf]
                  %1747 = vst [vmem:[%s1621 + $0x1b8] sm:$0xf] %v1746
                  %v1748 = vld [vmem:[%s1620 + $0xfc] sm:$0xf]
                  %1749 = vst [vmem:[%s1621 + $0x1bc] sm:$0xf] %v1748
                $region124: #{tpu_custom_call.1} parent=111 // loop_footer
                  %s1619 = sadd.s32 1, %s1615
                $region125: #{tpu_custom_call.1} parent=111 // loop_footer_branch
                  %1614 = sbr.rel target = $region121
                $region126: #{tpu_custom_call.1} parent=111 // loop_exit
                  _
              $region112: #{tpu_custom_call.1} parent=96 // pred_fallthru
                _
            $region97: #{tpu_custom_call.1} parent=92 // pred_fallthru
              _
            // Predicated region
            $region98: #{tpu_custom_call.1} parent=92 // pred_check
              _
            $region99: #{tpu_custom_call.1} parent=92 // pred_check_branch
              %1465 = sbr.rel (0) target = $region101
            $region100: #{tpu_custom_call.1} parent=92 // pred_region
              loop: start=0, step=1, limit=1
              $region102: #{tpu_custom_call.1} parent=100 // loop_pre_header
                _
              $region103: #{tpu_custom_call.1} parent=100 // loop_header
                %s1468 = sphi 0, %s1472
                %p1469 = scmp.ge.s32.totalorder %s1468, 1
                %s1473 = sphi %s1156, %s1156
                %s1474 = sphi %s1459, %s1459
              $region104: #{tpu_custom_call.1} parent=100 // loop_header_branch
                %1471 = sbr.rel (%p1469) target = $region108
              $region105: #{tpu_custom_call.1} parent=100 // loop_body
                %v1475 = vld [vmem:[%s1473] sm:$0xf]
                %1476 = vst [vmem:[%s1474] sm:$0xf] %v1475
                %v1477 = vld [vmem:[%s1473 + $0x4] sm:$0xf]
                %1478 = vst [vmem:[%s1474 + $0x4] sm:$0xf] %v1477
                %v1479 = vld [vmem:[%s1473 + $0x8] sm:$0xf]
                %1480 = vst [vmem:[%s1474 + $0x8] sm:$0xf] %v1479
                %v1481 = vld [vmem:[%s1473 + $0xc] sm:$0xf]
                %1482 = vst [vmem:[%s1474 + $0xc] sm:$0xf] %v1481
                %v1483 = vld [vmem:[%s1473 + $0x10] sm:$0xf]
                %1484 = vst [vmem:[%s1474 + $0x10] sm:$0xf] %v1483
                %v1485 = vld [vmem:[%s1473 + $0x14] sm:$0xf]
                %1486 = vst [vmem:[%s1474 + $0x14] sm:$0xf] %v1485
                %v1487 = vld [vmem:[%s1473 + $0x18] sm:$0xf]
                %1488 = vst [vmem:[%s1474 + $0x18] sm:$0xf] %v1487
                %v1489 = vld [vmem:[%s1473 + $0x1c] sm:$0xf]
                %1490 = vst [vmem:[%s1474 + $0x1c] sm:$0xf] %v1489
                %v1491 = vld [vmem:[%s1473 + $0x20] sm:$0xf]
                %1492 = vst [vmem:[%s1474 + $0x20] sm:$0xf] %v1491
                %v1493 = vld [vmem:[%s1473 + $0x24] sm:$0xf]
                %1494 = vst [vmem:[%s1474 + $0x24] sm:$0xf] %v1493
                %v1495 = vld [vmem:[%s1473 + $0x28] sm:$0xf]
                %1496 = vst [vmem:[%s1474 + $0x28] sm:$0xf] %v1495
                %v1497 = vld [vmem:[%s1473 + $0x2c] sm:$0xf]
                %1498 = vst [vmem:[%s1474 + $0x2c] sm:$0xf] %v1497
                %v1499 = vld [vmem:[%s1473 + $0x30] sm:$0xf]
                %1500 = vst [vmem:[%s1474 + $0x30] sm:$0xf] %v1499
                %v1501 = vld [vmem:[%s1473 + $0x34] sm:$0xf]
                %1502 = vst [vmem:[%s1474 + $0x34] sm:$0xf] %v1501
                %v1503 = vld [vmem:[%s1473 + $0x38] sm:$0xf]
                %1504 = vst [vmem:[%s1474 + $0x38] sm:$0xf] %v1503
                %v1505 = vld [vmem:[%s1473 + $0x3c] sm:$0xf]
                %1506 = vst [vmem:[%s1474 + $0x3c] sm:$0xf] %v1505
                %v1507 = vld [vmem:[%s1473 + $0x40] sm:$0xf]
                %1508 = vst [vmem:[%s1474 + $0x80] sm:$0xf] %v1507
                %v1509 = vld [vmem:[%s1473 + $0x44] sm:$0xf]
                %1510 = vst [vmem:[%s1474 + $0x84] sm:$0xf] %v1509
                %v1511 = vld [vmem:[%s1473 + $0x48] sm:$0xf]
                %1512 = vst [vmem:[%s1474 + $0x88] sm:$0xf] %v1511
                %v1513 = vld [vmem:[%s1473 + $0x4c] sm:$0xf]
                %1514 = vst [vmem:[%s1474 + $0x8c] sm:$0xf] %v1513
                %v1515 = vld [vmem:[%s1473 + $0x50] sm:$0xf]
                %1516 = vst [vmem:[%s1474 + $0x90] sm:$0xf] %v1515
                %v1517 = vld [vmem:[%s1473 + $0x54] sm:$0xf]
                %1518 = vst [vmem:[%s1474 + $0x94] sm:$0xf] %v1517
                %v1519 = vld [vmem:[%s1473 + $0x58] sm:$0xf]
                %1520 = vst [vmem:[%s1474 + $0x98] sm:$0xf] %v1519
                %v1521 = vld [vmem:[%s1473 + $0x5c] sm:$0xf]
                %1522 = vst [vmem:[%s1474 + $0x9c] sm:$0xf] %v1521
                %v1523 = vld [vmem:[%s1473 + $0x60] sm:$0xf]
                %1524 = vst [vmem:[%s1474 + $0xa0] sm:$0xf] %v1523
                %v1525 = vld [vmem:[%s1473 + $0x64] sm:$0xf]
                %1526 = vst [vmem:[%s1474 + $0xa4] sm:$0xf] %v1525
                %v1527 = vld [vmem:[%s1473 + $0x68] sm:$0xf]
                %1528 = vst [vmem:[%s1474 + $0xa8] sm:$0xf] %v1527
                %v1529 = vld [vmem:[%s1473 + $0x6c] sm:$0xf]
                %1530 = vst [vmem:[%s1474 + $0xac] sm:$0xf] %v1529
                %v1531 = vld [vmem:[%s1473 + $0x70] sm:$0xf]
                %1532 = vst [vmem:[%s1474 + $0xb0] sm:$0xf] %v1531
                %v1533 = vld [vmem:[%s1473 + $0x74] sm:$0xf]
                %1534 = vst [vmem:[%s1474 + $0xb4] sm:$0xf] %v1533
                %v1535 = vld [vmem:[%s1473 + $0x78] sm:$0xf]
                %1536 = vst [vmem:[%s1474 + $0xb8] sm:$0xf] %v1535
                %v1537 = vld [vmem:[%s1473 + $0x7c] sm:$0xf]
                %1538 = vst [vmem:[%s1474 + $0xbc] sm:$0xf] %v1537
                %v1539 = vld [vmem:[%s1473 + $0x80] sm:$0xf]
                %1540 = vst [vmem:[%s1474 + $0x100] sm:$0xf] %v1539
                %v1541 = vld [vmem:[%s1473 + $0x84] sm:$0xf]
                %1542 = vst [vmem:[%s1474 + $0x104] sm:$0xf] %v1541
                %v1543 = vld [vmem:[%s1473 + $0x88] sm:$0xf]
                %1544 = vst [vmem:[%s1474 + $0x108] sm:$0xf] %v1543
                %v1545 = vld [vmem:[%s1473 + $0x8c] sm:$0xf]
                %1546 = vst [vmem:[%s1474 + $0x10c] sm:$0xf] %v1545
                %v1547 = vld [vmem:[%s1473 + $0x90] sm:$0xf]
                %1548 = vst [vmem:[%s1474 + $0x110] sm:$0xf] %v1547
                %v1549 = vld [vmem:[%s1473 + $0x94] sm:$0xf]
                %1550 = vst [vmem:[%s1474 + $0x114] sm:$0xf] %v1549
                %v1551 = vld [vmem:[%s1473 + $0x98] sm:$0xf]
                %1552 = vst [vmem:[%s1474 + $0x118] sm:$0xf] %v1551
                %v1553 = vld [vmem:[%s1473 + $0x9c] sm:$0xf]
                %1554 = vst [vmem:[%s1474 + $0x11c] sm:$0xf] %v1553
                %v1555 = vld [vmem:[%s1473 + $0xa0] sm:$0xf]
                %1556 = vst [vmem:[%s1474 + $0x120] sm:$0xf] %v1555
                %v1557 = vld [vmem:[%s1473 + $0xa4] sm:$0xf]
                %1558 = vst [vmem:[%s1474 + $0x124] sm:$0xf] %v1557
                %v1559 = vld [vmem:[%s1473 + $0xa8] sm:$0xf]
                %1560 = vst [vmem:[%s1474 + $0x128] sm:$0xf] %v1559
                %v1561 = vld [vmem:[%s1473 + $0xac] sm:$0xf]
                %1562 = vst [vmem:[%s1474 + $0x12c] sm:$0xf] %v1561
                %v1563 = vld [vmem:[%s1473 + $0xb0] sm:$0xf]
                %1564 = vst [vmem:[%s1474 + $0x130] sm:$0xf] %v1563
                %v1565 = vld [vmem:[%s1473 + $0xb4] sm:$0xf]
                %1566 = vst [vmem:[%s1474 + $0x134] sm:$0xf] %v1565
                %v1567 = vld [vmem:[%s1473 + $0xb8] sm:$0xf]
                %1568 = vst [vmem:[%s1474 + $0x138] sm:$0xf] %v1567
                %v1569 = vld [vmem:[%s1473 + $0xbc] sm:$0xf]
                %1570 = vst [vmem:[%s1474 + $0x13c] sm:$0xf] %v1569
                %v1571 = vld [vmem:[%s1473 + $0xc0] sm:$0xf]
                %1572 = vst [vmem:[%s1474 + $0x180] sm:$0xf] %v1571
                %v1573 = vld [vmem:[%s1473 + $0xc4] sm:$0xf]
                %1574 = vst [vmem:[%s1474 + $0x184] sm:$0xf] %v1573
                %v1575 = vld [vmem:[%s1473 + $0xc8] sm:$0xf]
                %1576 = vst [vmem:[%s1474 + $0x188] sm:$0xf] %v1575
                %v1577 = vld [vmem:[%s1473 + $0xcc] sm:$0xf]
                %1578 = vst [vmem:[%s1474 + $0x18c] sm:$0xf] %v1577
                %v1579 = vld [vmem:[%s1473 + $0xd0] sm:$0xf]
                %1580 = vst [vmem:[%s1474 + $0x190] sm:$0xf] %v1579
                %v1581 = vld [vmem:[%s1473 + $0xd4] sm:$0xf]
                %1582 = vst [vmem:[%s1474 + $0x194] sm:$0xf] %v1581
                %v1583 = vld [vmem:[%s1473 + $0xd8] sm:$0xf]
                %1584 = vst [vmem:[%s1474 + $0x198] sm:$0xf] %v1583
                %v1585 = vld [vmem:[%s1473 + $0xdc] sm:$0xf]
                %1586 = vst [vmem:[%s1474 + $0x19c] sm:$0xf] %v1585
                %v1587 = vld [vmem:[%s1473 + $0xe0] sm:$0xf]
                %1588 = vst [vmem:[%s1474 + $0x1a0] sm:$0xf] %v1587
                %v1589 = vld [vmem:[%s1473 + $0xe4] sm:$0xf]
                %1590 = vst [vmem:[%s1474 + $0x1a4] sm:$0xf] %v1589
                %v1591 = vld [vmem:[%s1473 + $0xe8] sm:$0xf]
                %1592 = vst [vmem:[%s1474 + $0x1a8] sm:$0xf] %v1591
                %v1593 = vld [vmem:[%s1473 + $0xec] sm:$0xf]
                %1594 = vst [vmem:[%s1474 + $0x1ac] sm:$0xf] %v1593
                %v1595 = vld [vmem:[%s1473 + $0xf0] sm:$0xf]
                %1596 = vst [vmem:[%s1474 + $0x1b0] sm:$0xf] %v1595
                %v1597 = vld [vmem:[%s1473 + $0xf4] sm:$0xf]
                %1598 = vst [vmem:[%s1474 + $0x1b4] sm:$0xf] %v1597
                %v1599 = vld [vmem:[%s1473 + $0xf8] sm:$0xf]
                %1600 = vst [vmem:[%s1474 + $0x1b8] sm:$0xf] %v1599
                %v1601 = vld [vmem:[%s1473 + $0xfc] sm:$0xf]
                %1602 = vst [vmem:[%s1474 + $0x1bc] sm:$0xf] %v1601
              $region106: #{tpu_custom_call.1} parent=100 // loop_footer
                %s1472 = sadd.s32 1, %s1468
              $region107: #{tpu_custom_call.1} parent=100 // loop_footer_branch
                %1467 = sbr.rel target = $region103
              $region108: #{tpu_custom_call.1} parent=100 // loop_exit
                _
            $region101: #{tpu_custom_call.1} parent=92 // pred_fallthru
              _
          $region93: #{tpu_custom_call.1} parent=88 // pred_fallthru
            _
          %1750 = vnop
        $region89: #{tpu_custom_call.1} parent=31 // pred_fallthru
          _
      $region32: #{tpu_custom_call.1} parent=5 // pred_fallthru
        _
      %p1751 = scmp.le.s32.totalorder 2, %s15
      // Predicated region
      $region127: #{tpu_custom_call.1} parent=5 // pred_check
        %p1752 = pneg %p1751
      $region128: #{tpu_custom_call.1} parent=5 // pred_check_branch
        %1754 = sbr.rel (%p1752) target = $region130
      $region129: #{tpu_custom_call.1} parent=5 // pred_region
        %s1755 = ssub.s32 %s15, 2
        // Predicated region
        $region131: #{tpu_custom_call.1} parent=129 // pred_check
          %p1756 = pneg %p112
        $region132: #{tpu_custom_call.1} parent=129 // pred_check_branch
          %1758 = sbr.rel (%p1756) target = $region134
        $region133: #{tpu_custom_call.1} parent=129 // pred_region
          %s1759 = sand.u32 %s97, 1
          %s1760 = sand.u32 %s97, 1
          %s1761 = smul.addr %s1760, 256
          %s1762 = scalar_lea.vmem [#allocation7], %s1761
        $region134: #{tpu_custom_call.1} parent=129 // pred_fallthru
          _
        // Predicated region
        $region135: #{tpu_custom_call.1} parent=129 // pred_check
          %p1763 = pneg %p138
        $region136: #{tpu_custom_call.1} parent=129 // pred_check_branch
          %1765 = sbr.rel (%p1763) target = $region138
        $region137: #{tpu_custom_call.1} parent=129 // pred_region
          %s1766 = sand.u32 %s123, 1
          %s1767 = sand.u32 %s123, 1
          %s1768 = smul.addr %s1767, 256
          %s1769 = scalar_lea.vmem [#allocation8], %s1768
        $region138: #{tpu_custom_call.1} parent=129 // pred_fallthru
          _
      $region130: #{tpu_custom_call.1} parent=5 // pred_fallthru
        _
    $region6: #{tpu_custom_call.1} parent=1 // loop_footer
      %s19 = sadd.s32 1, %s15
    $region7: #{tpu_custom_call.1} parent=1 // loop_footer_branch
      %14 = sbr.rel target = $region3
    $region8: #{tpu_custom_call.1} parent=1 // loop_exit
      _
    %1770 = vsyncpa [#allocation3], 1
    %s1771 = scalar_lea.sflag [#allocation3], 1
    %1772 = vsyncpa %s1771, 1
    %1773 = vsyncpa [#allocation5], 1

</llo_original>
